<compile_context>
chip_gen: v6e
topology: v6e:2x2x1
jax: 0.10.0
libtpu: 0.0.40
codegen_flags: <defaults>
</compile_context>

<pallas_src>
import functools

import jax
import jax.numpy as jnp
import numpy as np
from jax.experimental import pallas as pl
from jax.experimental.pallas import tpu as pltpu


def convlstm_cell_kernel(comb_ref, w_ref, bias_ref, mask_ref, c_ref,
                         h_out_ref, c_out_ref, *,
                         hidden_dim, height, width, kh_size, kw_size):
  """One grid step = `nb` batch elements (channel-major, lane-dense HW).

  comb_ref : (nb, Ctot, HWp)       bf16  concat([x, h]), HW padded to HWp
  w_ref    : (KH*KW, 4*hid, Ctot)  bf16  conv weight, one (4*hid, Ctot) per tap
  bias_ref : (4*hid, 1)            f32   conv bias (kept in f32)
  mask_ref : (KH*KW, HWp)          bf16  per-tap 0/1 validity mask
  c_ref    : (nb, hid, HWp)        f32   current cell state
  h_out_ref: (nb, hid, HWp)              next hidden state
  c_out_ref: (nb, hid, HWp)        f32   next cell state
  """
  hd = hidden_dim
  nb, _, hwp = comb_ref.shape
  ph, pw = kh_size // 2, kw_size // 2

  comb = comb_ref[...]        # (nb, Ctot, HWp) bf16
  w_all = w_ref[...]          # (KH*KW, 4*hid, Ctot) bf16
  bias = bias_ref[...]        # (4*hid, 1) f32
  mask = mask_ref[...]        # (KH*KW, HWp) bf16

  # In-kernel im2col: for each tap (kh, kw), a circular lane shift of the
  # flattened image (the last axis is a single image's HW, so shifts never mix
  # batch elements) followed by a 0/1 mask that zeroes out-of-image / wrapped
  # positions reproduces the 'same'-padded conv input for that tap.  The shift
  # is written as concat of two static lane slices so its semantics are
  # unambiguous: shifted[..., i] = comb[..., (i + s) % HWp].
  shifted_taps = []
  for kh in range(kh_size):
    for kw in range(kw_size):
      t = kh * kw_size + kw
      s = (kh - ph) * width + (kw - pw)
      sm = s % hwp
      if sm == 0:
        sh = comb
      else:
        sh = jnp.concatenate([comb[..., sm:], comb[..., :sm]], axis=-1)
      shifted_taps.append((t, sh * mask[t:t + 1, :]))   # (nb, Ctot, HWp) bf16

  # Per image: (4*hid, HWp) gates = f32 bias + sum of KH*KW bf16 MXU matmuls
  # (f32 accumulation), then the LSTM pointwise math.  Gate slices are SUBLANE
  # slices of a lane-dense tile, so sigmoid/tanh/cell-update run on full
  # 128-lane vregs and the output stores are unmasked vst.
  for n in range(nb):
    gates = bias                      # (4*hid, 1) broadcasts over HWp
    for t, sh in shifted_taps:
      gates = gates + jnp.dot(w_all[t], sh[n],
                              preferred_element_type=jnp.float32)
    i = jax.nn.sigmoid(gates[0 * hd:1 * hd, :])
    f = jax.nn.sigmoid(gates[1 * hd:2 * hd, :])
    o = jax.nn.sigmoid(gates[2 * hd:3 * hd, :])
    g = jnp.tanh(gates[3 * hd:4 * hd, :])

    c_cur = c_ref[n]                  # (hid, HWp) f32, lane-dense load
    c_next = f * c_cur + i * g
    h_next = o * jnp.tanh(c_next)

    c_out_ref[n] = c_next.astype(c_out_ref.dtype)   # lane-dense stores
    h_out_ref[n] = h_next.astype(h_out_ref.dtype)


def _tap_masks(H, W, HWp, KH, KW):
  """(KH*KW, HWp) 0/1 mask: is tap (kh, kw) in-bounds at flat position p."""
  p = np.arange(HWp)
  r, c = p // W, p % W
  valid = p < H * W
  rows = []
  for kh in range(KH):
    for kw in range(KW):
      dh, dw = kh - KH // 2, kw - KW // 2
      ok = valid & (r + dh >= 0) & (r + dh < H) & (c + dw >= 0) & (c + dw < W)
      rows.append(ok)
  return np.stack(rows).astype(np.float32)


def convlstm_cell(x, h_cur, c_cur, weight_oihw, bias=None, *, batch_block=None):
  """ConvLSTM cell forward (NCHW, matching the PyTorch module).

  x           : (B, Cin, H, W)
  h_cur, c_cur: (B, hidden, H, W)
  weight_oihw : (4*hidden, Cin + hidden, KH, KW)   (PyTorch Conv2d layout)
  bias        : (4*hidden,) or None
  returns (h_next, c_next); h_next in x.dtype, c_next pinned to float32.
  """
  B, Cin, H, W = x.shape
  Cout, Ctot, KH, KW = weight_oihw.shape
  hidden = Cout // 4
  assert Ctot == Cin + hidden
  assert KH % 2 == 1 and KW % 2 == 1, "'same' padding assumes odd kernel sizes"
  HW = H * W
  HWp = ((HW + 127) // 128) * 128       # lane-dense last dim (unmasked stores)
  if bias is None:
    bias = jnp.zeros((Cout,), jnp.float32)

  # Batch elements per grid step: amortize per-step overhead, but keep >= 2
  # grid steps when possible so v7x's two TensorCores split the batch
  # ("parallel" axis).  Cap the per-step unroll at 8 images.
  if batch_block is None:
    batch_block = B // 2 if (B % 2 == 0 and B >= 2) else B
    for cand in range(min(batch_block, 8), 0, -1):
      if B % cand == 0:
        batch_block = cand
        break
  assert B % batch_block == 0
  nb, G = batch_block, B // batch_block

  # ---- wrapper-side glue (bandwidth-proportional, no im2col) ---------------
  # Cast to bf16 BEFORE any manipulation so every intermediate is half-width.
  comb = jnp.concatenate(
      [x.astype(jnp.bfloat16), h_cur.astype(jnp.bfloat16)], axis=1)
  comb = comb.reshape(B, Ctot, HW)                        # free reshape (NCHW)
  c_flat = c_cur.astype(jnp.float32).reshape(B, hidden, HW)
  if HWp != HW:
    comb = jnp.pad(comb, ((0, 0), (0, 0), (0, HWp - HW)))
    c_flat = jnp.pad(c_flat, ((0, 0), (0, 0), (0, HWp - HW)))

  # Weight OIHW -> (KH*KW, O, I): each tap is a clean leading-axis slice.
  w_taps = jnp.transpose(weight_oihw, (2, 3, 0, 1)).reshape(
      KH * KW, Cout, Ctot).astype(jnp.bfloat16)
  bias_col = bias.reshape(Cout, 1).astype(jnp.float32)    # exact f32 bias add
  masks = jnp.asarray(_tap_masks(H, W, HWp, KH, KW), dtype=jnp.bfloat16)

  kern = functools.partial(convlstm_cell_kernel, hidden_dim=hidden,
                           height=H, width=W, kh_size=KH, kw_size=KW)
  out_shape = (jax.ShapeDtypeStruct((B, hidden, HWp), x.dtype),      # h_next
               jax.ShapeDtypeStruct((B, hidden, HWp), jnp.float32))  # c_next

  # Explicit VMEM budget: double-buffered streaming blocks + single-buffered
  # weight + in-kernel shifted copies / f32 gate tiles, 2x headroom, clamped to
  # [32 MiB, 64 MiB] (safe on v5e/v6e 128 MiB physical and v7x 64 MiB).
  itm = np.dtype(x.dtype).itemsize
  comb_blk = nb * Ctot * HWp * 2
  state_blk = nb * hidden * HWp * (4 + itm + 4)           # c_in + h_out + c_out
  w_bytes = KH * KW * Cout * max(Ctot, 128) * 2
  const_bytes = KH * KW * HWp * 2 + Cout * 128 * 4
  tmp_bytes = (KH * KW + 2) * comb_blk + 4 * Cout * HWp * 4
  est = 2 * (comb_blk + state_blk + const_bytes) + w_bytes + tmp_bytes
  vmem_limit = int(min(64 * 2**20, max(32 * 2**20, 2 * est)))

  def _call(single_buffer_weight):
    w_kw = dict(pipeline_mode=pl.Buffered(1)) if single_buffer_weight else {}
    return pl.pallas_call(
        kern,
        out_shape=out_shape,
        grid_spec=pltpu.PrefetchScalarGridSpec(
            num_scalar_prefetch=0,
            grid=(G,),
            in_specs=[
                pl.BlockSpec((nb, Ctot, HWp), lambda g: (g, 0, 0)),
                # Constant index map: fetched once (refetch elided across
                # steps); single-buffered -- there is no refetch to overlap,
                # halving its resident VMEM footprint (v7x: 64 MiB VMEM).
                pl.BlockSpec((KH * KW, Cout, Ctot), lambda g: (0, 0, 0), **w_kw),
                pl.BlockSpec((Cout, 1), lambda g: (0, 0)),
                pl.BlockSpec((KH * KW, HWp), lambda g: (0, 0)),
                pl.BlockSpec((nb, hidden, HWp), lambda g: (g, 0, 0)),
            ],
            out_specs=[
                pl.BlockSpec((nb, hidden, HWp), lambda g: (g, 0, 0)),
                pl.BlockSpec((nb, hidden, HWp), lambda g: (g, 0, 0)),
            ],
        ),
        compiler_params=pltpu.CompilerParams(
            dimension_semantics=("parallel",),
            vmem_limit_bytes=vmem_limit),
    )(comb, w_taps, bias_col, masks, c_flat)

  try:
    h_next, c_next = _call(True)
  except Exception:
    # Fallback if pipeline_mode=pl.Buffered(1) is unsupported on this jax
    # version; identical kernel, default (double-buffered) weight.
    h_next, c_next = _call(False)

  if HWp != HW:
    h_next, c_next = h_next[..., :HW], c_next[..., :HW]
  # Free reshapes back to NCHW (buffers are already channel-major per image).
  return (h_next.reshape(B, hidden, H, W),
          c_next.reshape(B, hidden, H, W))


def convlstm_cell_reference(x, h_cur, c_cur, weight_oihw, bias):
  """Pure-JAX reference matching the PyTorch forward (NCHW)."""
  Cout, _, KH, KW = weight_oihw.shape
  conv = jax.lax.conv_general_dilated(
      jnp.concatenate([x, h_cur], axis=1), weight_oihw,
      window_strides=(1, 1),
      padding=((KH // 2, KH // 2), (KW // 2, KW // 2)),
      dimension_numbers=("NCHW", "OIHW", "NCHW"))
  conv = conv + bias[None, :, None, None]
  cc_i, cc_f, cc_o, cc_g = jnp.split(conv, 4, axis=1)
  i = jax.nn.sigmoid(cc_i)
  f = jax.nn.sigmoid(cc_f)
  o = jax.nn.sigmoid(cc_o)
  g = jnp.tanh(cc_g)
  c_next = f * c_cur + i * g
  h_next = o * jnp.tanh(c_next)
  return h_next, c_next


if __name__ == "__main__":
  # Small shapes consistent with the module: batch=2, input_dim=4,
  # hidden_dim=32, spatial 16x16, kernel (3, 3), bias=True.  NCHW like PyTorch.
  B, H, W = 2, 16, 16
  input_dim, hidden_dim = 4, 32
  KH, KW = 3, 3

  key = jax.random.PRNGKey(0)
  kx, kh_, kc, kw_, kb = jax.random.split(key, 5)
  x = jax.random.normal(kx, (B, input_dim, H, W), jnp.float32)
  h0 = jax.random.normal(kh_, (B, hidden_dim, H, W), jnp.float32)
  c0 = jax.random.normal(kc, (B, hidden_dim, H, W), jnp.float32)
  # nn.Conv2d(input_dim + hidden_dim, 4*hidden_dim, (3,3), padding=1, bias=True)
  weight = 0.1 * jax.random.normal(
      kw_, (4 * hidden_dim, input_dim + hidden_dim, KH, KW), jnp.float32)
  bias = 0.1 * jax.random.normal(kb, (4 * hidden_dim,), jnp.float32)

  h_next, c_next = convlstm_cell(x, h0, c0, weight, bias)
  jax.block_until_ready((h_next, c_next))
  assert h_next.shape == (B, hidden_dim, H, W)
  assert c_next.shape == (B, hidden_dim, H, W)

  # Tight check: reference fed the same bf16-quantized conv operands as the
  # kernel (bias and cell state stay f32 in the kernel, so they are not
  # quantized here) -- isolates kernel math/layout bugs from bf16 rounding.
  q = lambda a: a.astype(jnp.bfloat16).astype(jnp.float32)
  h_t, c_t = convlstm_cell_reference(q(x), q(h0), c0, q(weight), bias)
  assert jnp.allclose(h_next, h_t, atol=2e-3, rtol=2e-3)
  assert jnp.allclose(c_next, c_t, atol=2e-3, rtol=2e-3)

  # Loose check against exact f32 module semantics (bf16 matmul noise only).
  h_r, c_r = convlstm_cell_reference(x, h0, c0, weight, bias)
  assert jnp.allclose(h_next, h_r, atol=5e-2, rtol=5e-2)
  assert jnp.allclose(c_next, c_r, atol=5e-2, rtol=5e-2)

  print("KERNEL_OK")
</pallas_src>

<mosaic_0001>
module attributes {stable_mosaic.version = 11 : i64} {
  func.func @convlstm_cell_kernel(%arg0: i32, %arg1: memref<1x36x256xbf16, #tpu.memory_space<vmem>>, %arg2: memref<9x128x36xbf16, #tpu.memory_space<vmem>>, %arg3: memref<128x1xf32, #tpu.memory_space<vmem>>, %arg4: memref<9x256xbf16, #tpu.memory_space<vmem>>, %arg5: memref<1x32x256xf32, #tpu.memory_space<vmem>>, %arg6: memref<1x32x256xf32, #tpu.memory_space<vmem>>, %arg7: memref<1x32x256xf32, #tpu.memory_space<vmem>>) attributes {dimension_semantics = [#tpu.dimension_semantics<parallel>], iteration_bounds = array<i64: 2>, scalar_prefetch = 0 : i64, scratch_operands = 0 : i64, tpu.core_type = #tpu.core_type<tc>, window_params = [{transform_indices = @transform_0, window_bounds = array<i64: 1, 36, 256>}, {pipeline_mode = #tpu.pipeline_mode<synchronous>, transform_indices = @transform_1, window_bounds = array<i64: 9, 128, 36>}, {pipeline_mode = #tpu.pipeline_mode<synchronous>, transform_indices = @transform_2, window_bounds = array<i64: 128, 1>}, {pipeline_mode = #tpu.pipeline_mode<synchronous>, transform_indices = @transform_3, window_bounds = array<i64: 9, 256>}, {transform_indices = @transform_4, window_bounds = array<i64: 1, 32, 256>}, {transform_indices = @transform_5, window_bounds = array<i64: 1, 32, 256>}, {transform_indices = @transform_6, window_bounds = array<i64: 1, 32, 256>}]} {
    %c0 = arith.constant 0 : index
    %c0_0 = arith.constant 0 : index
    %c0_1 = arith.constant 0 : index
    %0 = vector.load %arg1[%c0, %c0_0, %c0_1] : memref<1x36x256xbf16, #tpu.memory_space<vmem>>, vector<1x36x256xbf16>
    %c0_2 = arith.constant 0 : index
    %c0_3 = arith.constant 0 : index
    %c0_4 = arith.constant 0 : index
    %1 = vector.load %arg2[%c0_2, %c0_3, %c0_4] : memref<9x128x36xbf16, #tpu.memory_space<vmem>>, vector<9x128x36xbf16>
    %c0_5 = arith.constant 0 : index
    %c0_6 = arith.constant 0 : index
    %2 = vector.load %arg3[%c0_5, %c0_6] : memref<128x1xf32, #tpu.memory_space<vmem>>, vector<128x1xf32>
    %c0_7 = arith.constant 0 : index
    %c0_8 = arith.constant 0 : index
    %3 = vector.load %arg4[%c0_7, %c0_8] : memref<9x256xbf16, #tpu.memory_space<vmem>>, vector<9x256xbf16>
    %4 = vector.extract_strided_slice %0 {offsets = [0, 0, 239], sizes = [1, 36, 17], strides = [1, 1, 1]} : vector<1x36x256xbf16> to vector<1x36x17xbf16>
    %5 = vector.extract_strided_slice %0 {offsets = [0, 0, 0], sizes = [1, 36, 239], strides = [1, 1, 1]} : vector<1x36x256xbf16> to vector<1x36x239xbf16>
    %6 = tpu.concatenate %4, %5 in 2 : vector<1x36x17xbf16>, vector<1x36x239xbf16> -> vector<1x36x256xbf16>
    %7 = vector.extract_strided_slice %3 {offsets = [0, 0], sizes = [1, 256], strides = [1, 1]} : vector<9x256xbf16> to vector<1x256xbf16>
    %8 = vector.shape_cast %7 : vector<1x256xbf16> to vector<1x1x256xbf16>
    %9 = vector.broadcast %8 : vector<1x1x256xbf16> to vector<1x36x256xbf16>
    %10 = arith.mulf %6, %9 : vector<1x36x256xbf16>
    %11 = vector.extract_strided_slice %0 {offsets = [0, 0, 240], sizes = [1, 36, 16], strides = [1, 1, 1]} : vector<1x36x256xbf16> to vector<1x36x16xbf16>
    %12 = vector.extract_strided_slice %0 {offsets = [0, 0, 0], sizes = [1, 36, 240], strides = [1, 1, 1]} : vector<1x36x256xbf16> to vector<1x36x240xbf16>
    %13 = tpu.concatenate %11, %12 in 2 : vector<1x36x16xbf16>, vector<1x36x240xbf16> -> vector<1x36x256xbf16>
    %14 = vector.extract_strided_slice %3 {offsets = [1, 0], sizes = [1, 256], strides = [1, 1]} : vector<9x256xbf16> to vector<1x256xbf16>
    %15 = vector.shape_cast %14 : vector<1x256xbf16> to vector<1x1x256xbf16>
    %16 = vector.broadcast %15 : vector<1x1x256xbf16> to vector<1x36x256xbf16>
    %17 = arith.mulf %13, %16 : vector<1x36x256xbf16>
    %18 = vector.extract_strided_slice %0 {offsets = [0, 0, 241], sizes = [1, 36, 15], strides = [1, 1, 1]} : vector<1x36x256xbf16> to vector<1x36x15xbf16>
    %19 = vector.extract_strided_slice %0 {offsets = [0, 0, 0], sizes = [1, 36, 241], strides = [1, 1, 1]} : vector<1x36x256xbf16> to vector<1x36x241xbf16>
    %20 = tpu.concatenate %18, %19 in 2 : vector<1x36x15xbf16>, vector<1x36x241xbf16> -> vector<1x36x256xbf16>
    %21 = vector.extract_strided_slice %3 {offsets = [2, 0], sizes = [1, 256], strides = [1, 1]} : vector<9x256xbf16> to vector<1x256xbf16>
    %22 = vector.shape_cast %21 : vector<1x256xbf16> to vector<1x1x256xbf16>
    %23 = vector.broadcast %22 : vector<1x1x256xbf16> to vector<1x36x256xbf16>
    %24 = arith.mulf %20, %23 : vector<1x36x256xbf16>
    %25 = vector.extract_strided_slice %0 {offsets = [0, 0, 255], sizes = [1, 36, 1], strides = [1, 1, 1]} : vector<1x36x256xbf16> to vector<1x36x1xbf16>
    %26 = vector.extract_strided_slice %0 {offsets = [0, 0, 0], sizes = [1, 36, 255], strides = [1, 1, 1]} : vector<1x36x256xbf16> to vector<1x36x255xbf16>
    %27 = tpu.concatenate %25, %26 in 2 : vector<1x36x1xbf16>, vector<1x36x255xbf16> -> vector<1x36x256xbf16>
    %28 = vector.extract_strided_slice %3 {offsets = [3, 0], sizes = [1, 256], strides = [1, 1]} : vector<9x256xbf16> to vector<1x256xbf16>
    %29 = vector.shape_cast %28 : vector<1x256xbf16> to vector<1x1x256xbf16>
    %30 = vector.broadcast %29 : vector<1x1x256xbf16> to vector<1x36x256xbf16>
    %31 = arith.mulf %27, %30 : vector<1x36x256xbf16>
    %32 = vector.extract_strided_slice %3 {offsets = [4, 0], sizes = [1, 256], strides = [1, 1]} : vector<9x256xbf16> to vector<1x256xbf16>
    %33 = vector.shape_cast %32 : vector<1x256xbf16> to vector<1x1x256xbf16>
    %34 = vector.broadcast %33 : vector<1x1x256xbf16> to vector<1x36x256xbf16>
    %35 = arith.mulf %0, %34 : vector<1x36x256xbf16>
    %36 = vector.extract_strided_slice %0 {offsets = [0, 0, 1], sizes = [1, 36, 255], strides = [1, 1, 1]} : vector<1x36x256xbf16> to vector<1x36x255xbf16>
    %37 = vector.extract_strided_slice %0 {offsets = [0, 0, 0], sizes = [1, 36, 1], strides = [1, 1, 1]} : vector<1x36x256xbf16> to vector<1x36x1xbf16>
    %38 = tpu.concatenate %36, %37 in 2 : vector<1x36x255xbf16>, vector<1x36x1xbf16> -> vector<1x36x256xbf16>
    %39 = vector.extract_strided_slice %3 {offsets = [5, 0], sizes = [1, 256], strides = [1, 1]} : vector<9x256xbf16> to vector<1x256xbf16>
    %40 = vector.shape_cast %39 : vector<1x256xbf16> to vector<1x1x256xbf16>
    %41 = vector.broadcast %40 : vector<1x1x256xbf16> to vector<1x36x256xbf16>
    %42 = arith.mulf %38, %41 : vector<1x36x256xbf16>
    %43 = vector.extract_strided_slice %0 {offsets = [0, 0, 15], sizes = [1, 36, 241], strides = [1, 1, 1]} : vector<1x36x256xbf16> to vector<1x36x241xbf16>
    %44 = vector.extract_strided_slice %0 {offsets = [0, 0, 0], sizes = [1, 36, 15], strides = [1, 1, 1]} : vector<1x36x256xbf16> to vector<1x36x15xbf16>
    %45 = tpu.concatenate %43, %44 in 2 : vector<1x36x241xbf16>, vector<1x36x15xbf16> -> vector<1x36x256xbf16>
    %46 = vector.extract_strided_slice %3 {offsets = [6, 0], sizes = [1, 256], strides = [1, 1]} : vector<9x256xbf16> to vector<1x256xbf16>
    %47 = vector.shape_cast %46 : vector<1x256xbf16> to vector<1x1x256xbf16>
    %48 = vector.broadcast %47 : vector<1x1x256xbf16> to vector<1x36x256xbf16>
    %49 = arith.mulf %45, %48 : vector<1x36x256xbf16>
    %50 = vector.extract_strided_slice %0 {offsets = [0, 0, 16], sizes = [1, 36, 240], strides = [1, 1, 1]} : vector<1x36x256xbf16> to vector<1x36x240xbf16>
    %51 = vector.extract_strided_slice %0 {offsets = [0, 0, 0], sizes = [1, 36, 16], strides = [1, 1, 1]} : vector<1x36x256xbf16> to vector<1x36x16xbf16>
    %52 = tpu.concatenate %50, %51 in 2 : vector<1x36x240xbf16>, vector<1x36x16xbf16> -> vector<1x36x256xbf16>
    %53 = vector.extract_strided_slice %3 {offsets = [7, 0], sizes = [1, 256], strides = [1, 1]} : vector<9x256xbf16> to vector<1x256xbf16>
    %54 = vector.shape_cast %53 : vector<1x256xbf16> to vector<1x1x256xbf16>
    %55 = vector.broadcast %54 : vector<1x1x256xbf16> to vector<1x36x256xbf16>
    %56 = arith.mulf %52, %55 : vector<1x36x256xbf16>
    %57 = vector.extract_strided_slice %0 {offsets = [0, 0, 17], sizes = [1, 36, 239], strides = [1, 1, 1]} : vector<1x36x256xbf16> to vector<1x36x239xbf16>
    %58 = vector.extract_strided_slice %0 {offsets = [0, 0, 0], sizes = [1, 36, 17], strides = [1, 1, 1]} : vector<1x36x256xbf16> to vector<1x36x17xbf16>
    %59 = tpu.concatenate %57, %58 in 2 : vector<1x36x239xbf16>, vector<1x36x17xbf16> -> vector<1x36x256xbf16>
    %60 = vector.extract_strided_slice %3 {offsets = [8, 0], sizes = [1, 256], strides = [1, 1]} : vector<9x256xbf16> to vector<1x256xbf16>
    %61 = vector.shape_cast %60 : vector<1x256xbf16> to vector<1x1x256xbf16>
    %62 = vector.broadcast %61 : vector<1x1x256xbf16> to vector<1x36x256xbf16>
    %63 = arith.mulf %59, %62 : vector<1x36x256xbf16>
    %64 = vector.extract_strided_slice %1 {offsets = [0, 0, 0], sizes = [1, 128, 36], strides = [1, 1, 1]} : vector<9x128x36xbf16> to vector<1x128x36xbf16>
    %65 = vector.shape_cast %64 : vector<1x128x36xbf16> to vector<128x36xbf16>
    %66 = vector.shape_cast %10 : vector<1x36x256xbf16> to vector<36x256xbf16>
    %cst = arith.constant dense<0.000000e+00> : vector<128x256xf32>
    %67 = tpu.matmul %65, %66, %cst {dimension_numbers = #tpu.dot_dimension_numbers<[1], [0], [0], [1], [0, 0, 1, 1], [], []>} : vector<128x36xbf16>, vector<36x256xbf16>, vector<128x256xf32> -> vector<128x256xf32>
    %68 = vector.broadcast %2 : vector<128x1xf32> to vector<128x256xf32>
    %69 = arith.addf %68, %67 : vector<128x256xf32>
    %70 = vector.extract_strided_slice %1 {offsets = [1, 0, 0], sizes = [1, 128, 36], strides = [1, 1, 1]} : vector<9x128x36xbf16> to vector<1x128x36xbf16>
    %71 = vector.shape_cast %70 : vector<1x128x36xbf16> to vector<128x36xbf16>
    %72 = vector.shape_cast %17 : vector<1x36x256xbf16> to vector<36x256xbf16>
    %cst_9 = arith.constant dense<0.000000e+00> : vector<128x256xf32>
    %73 = tpu.matmul %71, %72, %cst_9 {dimension_numbers = #tpu.dot_dimension_numbers<[1], [0], [0], [1], [0, 0, 1, 1], [], []>} : vector<128x36xbf16>, vector<36x256xbf16>, vector<128x256xf32> -> vector<128x256xf32>
    %74 = arith.addf %69, %73 : vector<128x256xf32>
    %75 = vector.extract_strided_slice %1 {offsets = [2, 0, 0], sizes = [1, 128, 36], strides = [1, 1, 1]} : vector<9x128x36xbf16> to vector<1x128x36xbf16>
    %76 = vector.shape_cast %75 : vector<1x128x36xbf16> to vector<128x36xbf16>
    %77 = vector.shape_cast %24 : vector<1x36x256xbf16> to vector<36x256xbf16>
    %cst_10 = arith.constant dense<0.000000e+00> : vector<128x256xf32>
    %78 = tpu.matmul %76, %77, %cst_10 {dimension_numbers = #tpu.dot_dimension_numbers<[1], [0], [0], [1], [0, 0, 1, 1], [], []>} : vector<128x36xbf16>, vector<36x256xbf16>, vector<128x256xf32> -> vector<128x256xf32>
    %79 = arith.addf %74, %78 : vector<128x256xf32>
    %80 = vector.extract_strided_slice %1 {offsets = [3, 0, 0], sizes = [1, 128, 36], strides = [1, 1, 1]} : vector<9x128x36xbf16> to vector<1x128x36xbf16>
    %81 = vector.shape_cast %80 : vector<1x128x36xbf16> to vector<128x36xbf16>
    %82 = vector.shape_cast %31 : vector<1x36x256xbf16> to vector<36x256xbf16>
    %cst_11 = arith.constant dense<0.000000e+00> : vector<128x256xf32>
    %83 = tpu.matmul %81, %82, %cst_11 {dimension_numbers = #tpu.dot_dimension_numbers<[1], [0], [0], [1], [0, 0, 1, 1], [], []>} : vector<128x36xbf16>, vector<36x256xbf16>, vector<128x256xf32> -> vector<128x256xf32>
    %84 = arith.addf %79, %83 : vector<128x256xf32>
    %85 = vector.extract_strided_slice %1 {offsets = [4, 0, 0], sizes = [1, 128, 36], strides = [1, 1, 1]} : vector<9x128x36xbf16> to vector<1x128x36xbf16>
    %86 = vector.shape_cast %85 : vector<1x128x36xbf16> to vector<128x36xbf16>
    %87 = vector.shape_cast %35 : vector<1x36x256xbf16> to vector<36x256xbf16>
    %cst_12 = arith.constant dense<0.000000e+00> : vector<128x256xf32>
    %88 = tpu.matmul %86, %87, %cst_12 {dimension_numbers = #tpu.dot_dimension_numbers<[1], [0], [0], [1], [0, 0, 1, 1], [], []>} : vector<128x36xbf16>, vector<36x256xbf16>, vector<128x256xf32> -> vector<128x256xf32>
    %89 = arith.addf %84, %88 : vector<128x256xf32>
    %90 = vector.extract_strided_slice %1 {offsets = [5, 0, 0], sizes = [1, 128, 36], strides = [1, 1, 1]} : vector<9x128x36xbf16> to vector<1x128x36xbf16>
    %91 = vector.shape_cast %90 : vector<1x128x36xbf16> to vector<128x36xbf16>
    %92 = vector.shape_cast %42 : vector<1x36x256xbf16> to vector<36x256xbf16>
    %cst_13 = arith.constant dense<0.000000e+00> : vector<128x256xf32>
    %93 = tpu.matmul %91, %92, %cst_13 {dimension_numbers = #tpu.dot_dimension_numbers<[1], [0], [0], [1], [0, 0, 1, 1], [], []>} : vector<128x36xbf16>, vector<36x256xbf16>, vector<128x256xf32> -> vector<128x256xf32>
    %94 = arith.addf %89, %93 : vector<128x256xf32>
    %95 = vector.extract_strided_slice %1 {offsets = [6, 0, 0], sizes = [1, 128, 36], strides = [1, 1, 1]} : vector<9x128x36xbf16> to vector<1x128x36xbf16>
    %96 = vector.shape_cast %95 : vector<1x128x36xbf16> to vector<128x36xbf16>
    %97 = vector.shape_cast %49 : vector<1x36x256xbf16> to vector<36x256xbf16>
    %cst_14 = arith.constant dense<0.000000e+00> : vector<128x256xf32>
    %98 = tpu.matmul %96, %97, %cst_14 {dimension_numbers = #tpu.dot_dimension_numbers<[1], [0], [0], [1], [0, 0, 1, 1], [], []>} : vector<128x36xbf16>, vector<36x256xbf16>, vector<128x256xf32> -> vector<128x256xf32>
    %99 = arith.addf %94, %98 : vector<128x256xf32>
    %100 = vector.extract_strided_slice %1 {offsets = [7, 0, 0], sizes = [1, 128, 36], strides = [1, 1, 1]} : vector<9x128x36xbf16> to vector<1x128x36xbf16>
    %101 = vector.shape_cast %100 : vector<1x128x36xbf16> to vector<128x36xbf16>
    %102 = vector.shape_cast %56 : vector<1x36x256xbf16> to vector<36x256xbf16>
    %cst_15 = arith.constant dense<0.000000e+00> : vector<128x256xf32>
    %103 = tpu.matmul %101, %102, %cst_15 {dimension_numbers = #tpu.dot_dimension_numbers<[1], [0], [0], [1], [0, 0, 1, 1], [], []>} : vector<128x36xbf16>, vector<36x256xbf16>, vector<128x256xf32> -> vector<128x256xf32>
    %104 = arith.addf %99, %103 : vector<128x256xf32>
    %105 = vector.extract_strided_slice %1 {offsets = [8, 0, 0], sizes = [1, 128, 36], strides = [1, 1, 1]} : vector<9x128x36xbf16> to vector<1x128x36xbf16>
    %106 = vector.shape_cast %105 : vector<1x128x36xbf16> to vector<128x36xbf16>
    %107 = vector.shape_cast %63 : vector<1x36x256xbf16> to vector<36x256xbf16>
    %cst_16 = arith.constant dense<0.000000e+00> : vector<128x256xf32>
    %108 = tpu.matmul %106, %107, %cst_16 {dimension_numbers = #tpu.dot_dimension_numbers<[1], [0], [0], [1], [0, 0, 1, 1], [], []>} : vector<128x36xbf16>, vector<36x256xbf16>, vector<128x256xf32> -> vector<128x256xf32>
    %109 = arith.addf %104, %108 : vector<128x256xf32>
    %110 = vector.extract_strided_slice %109 {offsets = [0, 0], sizes = [32, 256], strides = [1, 1]} : vector<128x256xf32> to vector<32x256xf32>
    %111 = arith.negf %110 : vector<32x256xf32>
    %112 = math.exp %111 : vector<32x256xf32>
    %cst_17 = arith.constant 1.000000e+00 : f32
    %113 = vector.broadcast %cst_17 : f32 to vector<32x256xf32>
    %114 = arith.addf %113, %112 : vector<32x256xf32>
    %115 = arith.divf %113, %114 : vector<32x256xf32>
    %116 = vector.extract_strided_slice %109 {offsets = [32, 0], sizes = [32, 256], strides = [1, 1]} : vector<128x256xf32> to vector<32x256xf32>
    %117 = arith.negf %116 : vector<32x256xf32>
    %118 = math.exp %117 : vector<32x256xf32>
    %cst_18 = arith.constant 1.000000e+00 : f32
    %119 = vector.broadcast %cst_18 : f32 to vector<32x256xf32>
    %120 = arith.addf %119, %118 : vector<32x256xf32>
    %121 = arith.divf %119, %120 : vector<32x256xf32>
    %122 = vector.extract_strided_slice %109 {offsets = [64, 0], sizes = [32, 256], strides = [1, 1]} : vector<128x256xf32> to vector<32x256xf32>
    %123 = arith.negf %122 : vector<32x256xf32>
    %124 = math.exp %123 : vector<32x256xf32>
    %cst_19 = arith.constant 1.000000e+00 : f32
    %125 = vector.broadcast %cst_19 : f32 to vector<32x256xf32>
    %126 = arith.addf %125, %124 : vector<32x256xf32>
    %127 = arith.divf %125, %126 : vector<32x256xf32>
    %128 = vector.extract_strided_slice %109 {offsets = [96, 0], sizes = [32, 256], strides = [1, 1]} : vector<128x256xf32> to vector<32x256xf32>
    %129 = math.tanh %128 : vector<32x256xf32>
    %c0_20 = arith.constant 0 : index
    %c0_21 = arith.constant 0 : index
    %c0_22 = arith.constant 0 : index
    %130 = vector.load %arg5[%c0_20, %c0_21, %c0_22] : memref<1x32x256xf32, #tpu.memory_space<vmem>>, vector<1x32x256xf32>
    %131 = vector.shape_cast %130 : vector<1x32x256xf32> to vector<32x256xf32>
    %132 = arith.mulf %121, %131 : vector<32x256xf32>
    %133 = arith.mulf %115, %129 : vector<32x256xf32>
    %134 = arith.addf %132, %133 : vector<32x256xf32>
    %135 = math.tanh %134 : vector<32x256xf32>
    %136 = arith.mulf %127, %135 : vector<32x256xf32>
    %c0_23 = arith.constant 0 : index
    %c0_24 = arith.constant 0 : index
    %c0_25 = arith.constant 0 : index
    %137 = vector.load %arg7[%c0_23, %c0_24, %c0_25] : memref<1x32x256xf32, #tpu.memory_space<vmem>>, vector<1x32x256xf32>
    %138 = vector.shape_cast %137 : vector<1x32x256xf32> to vector<32x256xf32>
    %139 = vector.shape_cast %134 : vector<32x256xf32> to vector<1x32x256xf32>
    tpu.vector_store %arg7[%c0_23, %c0_24, %c0_25], %139 {strides = array<i32>} : memref<1x32x256xf32, #tpu.memory_space<vmem>>, vector<1x32x256xf32>,
    %c0_26 = arith.constant 0 : index
    %c0_27 = arith.constant 0 : index
    %c0_28 = arith.constant 0 : index
    %140 = vector.load %arg6[%c0_26, %c0_27, %c0_28] : memref<1x32x256xf32, #tpu.memory_space<vmem>>, vector<1x32x256xf32>
    %141 = vector.shape_cast %140 : vector<1x32x256xf32> to vector<32x256xf32>
    %142 = vector.shape_cast %136 : vector<32x256xf32> to vector<1x32x256xf32>
    tpu.vector_store %arg6[%c0_26, %c0_27, %c0_28], %142 {strides = array<i32>} : memref<1x32x256xf32, #tpu.memory_space<vmem>>, vector<1x32x256xf32>,
    return
  }
  func.func @transform_0(%arg0: i32) -> (i32, i32, i32) {
    %c0_i32 = arith.constant 0 : i32
    %c0_i32_0 = arith.constant 0 : i32
    %c0_i32_1 = arith.constant 0 : i32
    return %arg0, %c0_i32, %c0_i32_0 : i32, i32, i32
  }
  func.func @transform_1(%arg0: i32) -> (i32, i32, i32) {
    %c0_i32 = arith.constant 0 : i32
    %c0_i32_0 = arith.constant 0 : i32
    %c0_i32_1 = arith.constant 0 : i32
    %c0_i32_2 = arith.constant 0 : i32
    return %c0_i32, %c0_i32_0, %c0_i32_1 : i32, i32, i32
  }
  func.func @transform_2(%arg0: i32) -> (i32, i32) {
    %c0_i32 = arith.constant 0 : i32
    %c0_i32_0 = arith.constant 0 : i32
    %c0_i32_1 = arith.constant 0 : i32
    return %c0_i32, %c0_i32_0 : i32, i32
  }
  func.func @transform_3(%arg0: i32) -> (i32, i32) {
    %c0_i32 = arith.constant 0 : i32
    %c0_i32_0 = arith.constant 0 : i32
    %c0_i32_1 = arith.constant 0 : i32
    return %c0_i32, %c0_i32_0 : i32, i32
  }
  func.func @transform_4(%arg0: i32) -> (i32, i32, i32) {
    %c0_i32 = arith.constant 0 : i32
    %c0_i32_0 = arith.constant 0 : i32
    %c0_i32_1 = arith.constant 0 : i32
    return %arg0, %c0_i32, %c0_i32_0 : i32, i32, i32
  }
  func.func @transform_5(%arg0: i32) -> (i32, i32, i32) {
    %c0_i32 = arith.constant 0 : i32
    %c0_i32_0 = arith.constant 0 : i32
    %c0_i32_1 = arith.constant 0 : i32
    return %arg0, %c0_i32, %c0_i32_0 : i32, i32, i32
  }
  func.func @transform_6(%arg0: i32) -> (i32, i32, i32) {
    %c0_i32 = arith.constant 0 : i32
    %c0_i32_0 = arith.constant 0 : i32
    %c0_i32_1 = arith.constant 0 : i32
    return %arg0, %c0_i32, %c0_i32_0 : i32, i32, i32
  }
}

module attributes {stable_mosaic.version = 11 : i64} {
  func.func @convlstm_cell_kernel(%arg0: i32, %arg1: memref<1x36x256xbf16, #tpu.memory_space<vmem>>, %arg2: memref<9x128x36xbf16, #tpu.memory_space<vmem>>, %arg3: memref<128x1xf32, #tpu.memory_space<vmem>>, %arg4: memref<9x256xbf16, #tpu.memory_space<vmem>>, %arg5: memref<1x32x256xf32, #tpu.memory_space<vmem>>, %arg6: memref<1x32x256xf32, #tpu.memory_space<vmem>>, %arg7: memref<1x32x256xf32, #tpu.memory_space<vmem>>) attributes {dimension_semantics = [#tpu.dimension_semantics<parallel>], iteration_bounds = array<i64: 2>, scalar_prefetch = 0 : i64, scratch_operands = 0 : i64, tpu.core_type = #tpu.core_type<tc>, window_params = [{transform_indices = @transform_0, window_bounds = array<i64: 1, 36, 256>}, {pipeline_mode = #tpu.pipeline_mode<synchronous>, transform_indices = @transform_1, window_bounds = array<i64: 9, 128, 36>}, {pipeline_mode = #tpu.pipeline_mode<synchronous>, transform_indices = @transform_2, window_bounds = array<i64: 128, 1>}, {pipeline_mode = #tpu.pipeline_mode<synchronous>, transform_indices = @transform_3, window_bounds = array<i64: 9, 256>}, {transform_indices = @transform_4, window_bounds = array<i64: 1, 32, 256>}, {transform_indices = @transform_5, window_bounds = array<i64: 1, 32, 256>}, {transform_indices = @transform_6, window_bounds = array<i64: 1, 32, 256>}]} {
    %c0 = arith.constant 0 : index
    %c0_0 = arith.constant 0 : index
    %c0_1 = arith.constant 0 : index
    %0 = vector.load %arg1[%c0, %c0_0, %c0_1] : memref<1x36x256xbf16, #tpu.memory_space<vmem>>, vector<1x36x256xbf16>
    %c0_2 = arith.constant 0 : index
    %c0_3 = arith.constant 0 : index
    %c0_4 = arith.constant 0 : index
    %1 = vector.load %arg2[%c0_2, %c0_3, %c0_4] : memref<9x128x36xbf16, #tpu.memory_space<vmem>>, vector<9x128x36xbf16>
    %c0_5 = arith.constant 0 : index
    %c0_6 = arith.constant 0 : index
    %2 = vector.load %arg3[%c0_5, %c0_6] : memref<128x1xf32, #tpu.memory_space<vmem>>, vector<128x1xf32>
    %c0_7 = arith.constant 0 : index
    %c0_8 = arith.constant 0 : index
    %3 = vector.load %arg4[%c0_7, %c0_8] : memref<9x256xbf16, #tpu.memory_space<vmem>>, vector<9x256xbf16>
    %4 = vector.extract_strided_slice %0 {offsets = [0, 0, 239], sizes = [1, 36, 17], strides = [1, 1, 1]} : vector<1x36x256xbf16> to vector<1x36x17xbf16>
    %5 = vector.extract_strided_slice %0 {offsets = [0, 0, 0], sizes = [1, 36, 239], strides = [1, 1, 1]} : vector<1x36x256xbf16> to vector<1x36x239xbf16>
    %6 = tpu.concatenate %4, %5 in 2 : vector<1x36x17xbf16>, vector<1x36x239xbf16> -> vector<1x36x256xbf16>
    %7 = vector.extract_strided_slice %3 {offsets = [0, 0], sizes = [1, 256], strides = [1, 1]} : vector<9x256xbf16> to vector<1x256xbf16>
    %8 = vector.shape_cast %7 : vector<1x256xbf16> to vector<1x1x256xbf16>
    %9 = vector.broadcast %8 : vector<1x1x256xbf16> to vector<1x36x256xbf16>
    %10 = arith.mulf %6, %9 : vector<1x36x256xbf16>
    %11 = vector.extract_strided_slice %0 {offsets = [0, 0, 240], sizes = [1, 36, 16], strides = [1, 1, 1]} : vector<1x36x256xbf16> to vector<1x36x16xbf16>
    %12 = vector.extract_strided_slice %0 {offsets = [0, 0, 0], sizes = [1, 36, 240], strides = [1, 1, 1]} : vector<1x36x256xbf16> to vector<1x36x240xbf16>
    %13 = tpu.concatenate %11, %12 in 2 : vector<1x36x16xbf16>, vector<1x36x240xbf16> -> vector<1x36x256xbf16>
    %14 = vector.extract_strided_slice %3 {offsets = [1, 0], sizes = [1, 256], strides = [1, 1]} : vector<9x256xbf16> to vector<1x256xbf16>
    %15 = vector.shape_cast %14 : vector<1x256xbf16> to vector<1x1x256xbf16>
    %16 = vector.broadcast %15 : vector<1x1x256xbf16> to vector<1x36x256xbf16>
    %17 = arith.mulf %13, %16 : vector<1x36x256xbf16>
    %18 = vector.extract_strided_slice %0 {offsets = [0, 0, 241], sizes = [1, 36, 15], strides = [1, 1, 1]} : vector<1x36x256xbf16> to vector<1x36x15xbf16>
    %19 = vector.extract_strided_slice %0 {offsets = [0, 0, 0], sizes = [1, 36, 241], strides = [1, 1, 1]} : vector<1x36x256xbf16> to vector<1x36x241xbf16>
    %20 = tpu.concatenate %18, %19 in 2 : vector<1x36x15xbf16>, vector<1x36x241xbf16> -> vector<1x36x256xbf16>
    %21 = vector.extract_strided_slice %3 {offsets = [2, 0], sizes = [1, 256], strides = [1, 1]} : vector<9x256xbf16> to vector<1x256xbf16>
    %22 = vector.shape_cast %21 : vector<1x256xbf16> to vector<1x1x256xbf16>
    %23 = vector.broadcast %22 : vector<1x1x256xbf16> to vector<1x36x256xbf16>
    %24 = arith.mulf %20, %23 : vector<1x36x256xbf16>
    %25 = vector.extract_strided_slice %0 {offsets = [0, 0, 255], sizes = [1, 36, 1], strides = [1, 1, 1]} : vector<1x36x256xbf16> to vector<1x36x1xbf16>
    %26 = vector.extract_strided_slice %0 {offsets = [0, 0, 0], sizes = [1, 36, 255], strides = [1, 1, 1]} : vector<1x36x256xbf16> to vector<1x36x255xbf16>
    %27 = tpu.concatenate %25, %26 in 2 : vector<1x36x1xbf16>, vector<1x36x255xbf16> -> vector<1x36x256xbf16>
    %28 = vector.extract_strided_slice %3 {offsets = [3, 0], sizes = [1, 256], strides = [1, 1]} : vector<9x256xbf16> to vector<1x256xbf16>
    %29 = vector.shape_cast %28 : vector<1x256xbf16> to vector<1x1x256xbf16>
    %30 = vector.broadcast %29 : vector<1x1x256xbf16> to vector<1x36x256xbf16>
    %31 = arith.mulf %27, %30 : vector<1x36x256xbf16>
    %32 = vector.extract_strided_slice %3 {offsets = [4, 0], sizes = [1, 256], strides = [1, 1]} : vector<9x256xbf16> to vector<1x256xbf16>
    %33 = vector.shape_cast %32 : vector<1x256xbf16> to vector<1x1x256xbf16>
    %34 = vector.broadcast %33 : vector<1x1x256xbf16> to vector<1x36x256xbf16>
    %35 = arith.mulf %0, %34 : vector<1x36x256xbf16>
    %36 = vector.extract_strided_slice %0 {offsets = [0, 0, 1], sizes = [1, 36, 255], strides = [1, 1, 1]} : vector<1x36x256xbf16> to vector<1x36x255xbf16>
    %37 = vector.extract_strided_slice %0 {offsets = [0, 0, 0], sizes = [1, 36, 1], strides = [1, 1, 1]} : vector<1x36x256xbf16> to vector<1x36x1xbf16>
    %38 = tpu.concatenate %36, %37 in 2 : vector<1x36x255xbf16>, vector<1x36x1xbf16> -> vector<1x36x256xbf16>
    %39 = vector.extract_strided_slice %3 {offsets = [5, 0], sizes = [1, 256], strides = [1, 1]} : vector<9x256xbf16> to vector<1x256xbf16>
    %40 = vector.shape_cast %39 : vector<1x256xbf16> to vector<1x1x256xbf16>
    %41 = vector.broadcast %40 : vector<1x1x256xbf16> to vector<1x36x256xbf16>
    %42 = arith.mulf %38, %41 : vector<1x36x256xbf16>
    %43 = vector.extract_strided_slice %0 {offsets = [0, 0, 15], sizes = [1, 36, 241], strides = [1, 1, 1]} : vector<1x36x256xbf16> to vector<1x36x241xbf16>
    %44 = vector.extract_strided_slice %0 {offsets = [0, 0, 0], sizes = [1, 36, 15], strides = [1, 1, 1]} : vector<1x36x256xbf16> to vector<1x36x15xbf16>
    %45 = tpu.concatenate %43, %44 in 2 : vector<1x36x241xbf16>, vector<1x36x15xbf16> -> vector<1x36x256xbf16>
    %46 = vector.extract_strided_slice %3 {offsets = [6, 0], sizes = [1, 256], strides = [1, 1]} : vector<9x256xbf16> to vector<1x256xbf16>
    %47 = vector.shape_cast %46 : vector<1x256xbf16> to vector<1x1x256xbf16>
    %48 = vector.broadcast %47 : vector<1x1x256xbf16> to vector<1x36x256xbf16>
    %49 = arith.mulf %45, %48 : vector<1x36x256xbf16>
    %50 = vector.extract_strided_slice %0 {offsets = [0, 0, 16], sizes = [1, 36, 240], strides = [1, 1, 1]} : vector<1x36x256xbf16> to vector<1x36x240xbf16>
    %51 = vector.extract_strided_slice %0 {offsets = [0, 0, 0], sizes = [1, 36, 16], strides = [1, 1, 1]} : vector<1x36x256xbf16> to vector<1x36x16xbf16>
    %52 = tpu.concatenate %50, %51 in 2 : vector<1x36x240xbf16>, vector<1x36x16xbf16> -> vector<1x36x256xbf16>
    %53 = vector.extract_strided_slice %3 {offsets = [7, 0], sizes = [1, 256], strides = [1, 1]} : vector<9x256xbf16> to vector<1x256xbf16>
    %54 = vector.shape_cast %53 : vector<1x256xbf16> to vector<1x1x256xbf16>
    %55 = vector.broadcast %54 : vector<1x1x256xbf16> to vector<1x36x256xbf16>
    %56 = arith.mulf %52, %55 : vector<1x36x256xbf16>
    %57 = vector.extract_strided_slice %0 {offsets = [0, 0, 17], sizes = [1, 36, 239], strides = [1, 1, 1]} : vector<1x36x256xbf16> to vector<1x36x239xbf16>
    %58 = vector.extract_strided_slice %0 {offsets = [0, 0, 0], sizes = [1, 36, 17], strides = [1, 1, 1]} : vector<1x36x256xbf16> to vector<1x36x17xbf16>
    %59 = tpu.concatenate %57, %58 in 2 : vector<1x36x239xbf16>, vector<1x36x17xbf16> -> vector<1x36x256xbf16>
    %60 = vector.extract_strided_slice %3 {offsets = [8, 0], sizes = [1, 256], strides = [1, 1]} : vector<9x256xbf16> to vector<1x256xbf16>
    %61 = vector.shape_cast %60 : vector<1x256xbf16> to vector<1x1x256xbf16>
    %62 = vector.broadcast %61 : vector<1x1x256xbf16> to vector<1x36x256xbf16>
    %63 = arith.mulf %59, %62 : vector<1x36x256xbf16>
    %64 = vector.extract_strided_slice %1 {offsets = [0, 0, 0], sizes = [1, 128, 36], strides = [1, 1, 1]} : vector<9x128x36xbf16> to vector<1x128x36xbf16>
    %65 = vector.shape_cast %64 : vector<1x128x36xbf16> to vector<128x36xbf16>
    %66 = vector.shape_cast %10 : vector<1x36x256xbf16> to vector<36x256xbf16>
    %cst = arith.constant dense<0.000000e+00> : vector<128x256xf32>
    %67 = tpu.matmul %65, %66, %cst {dimension_numbers = #tpu.dot_dimension_numbers<[1], [0], [0], [1], [0, 0, 1, 1], [], []>} : vector<128x36xbf16>, vector<36x256xbf16>, vector<128x256xf32> -> vector<128x256xf32>
    %68 = vector.broadcast %2 : vector<128x1xf32> to vector<128x256xf32>
    %69 = arith.addf %68, %67 : vector<128x256xf32>
    %70 = vector.extract_strided_slice %1 {offsets = [1, 0, 0], sizes = [1, 128, 36], strides = [1, 1, 1]} : vector<9x128x36xbf16> to vector<1x128x36xbf16>
    %71 = vector.shape_cast %70 : vector<1x128x36xbf16> to vector<128x36xbf16>
    %72 = vector.shape_cast %17 : vector<1x36x256xbf16> to vector<36x256xbf16>
    %cst_9 = arith.constant dense<0.000000e+00> : vector<128x256xf32>
    %73 = tpu.matmul %71, %72, %cst_9 {dimension_numbers = #tpu.dot_dimension_numbers<[1], [0], [0], [1], [0, 0, 1, 1], [], []>} : vector<128x36xbf16>, vector<36x256xbf16>, vector<128x256xf32> -> vector<128x256xf32>
    %74 = arith.addf %69, %73 : vector<128x256xf32>
    %75 = vector.extract_strided_slice %1 {offsets = [2, 0, 0], sizes = [1, 128, 36], strides = [1, 1, 1]} : vector<9x128x36xbf16> to vector<1x128x36xbf16>
    %76 = vector.shape_cast %75 : vector<1x128x36xbf16> to vector<128x36xbf16>
    %77 = vector.shape_cast %24 : vector<1x36x256xbf16> to vector<36x256xbf16>
    %cst_10 = arith.constant dense<0.000000e+00> : vector<128x256xf32>
    %78 = tpu.matmul %76, %77, %cst_10 {dimension_numbers = #tpu.dot_dimension_numbers<[1], [0], [0], [1], [0, 0, 1, 1], [], []>} : vector<128x36xbf16>, vector<36x256xbf16>, vector<128x256xf32> -> vector<128x256xf32>
    %79 = arith.addf %74, %78 : vector<128x256xf32>
    %80 = vector.extract_strided_slice %1 {offsets = [3, 0, 0], sizes = [1, 128, 36], strides = [1, 1, 1]} : vector<9x128x36xbf16> to vector<1x128x36xbf16>
    %81 = vector.shape_cast %80 : vector<1x128x36xbf16> to vector<128x36xbf16>
    %82 = vector.shape_cast %31 : vector<1x36x256xbf16> to vector<36x256xbf16>
    %cst_11 = arith.constant dense<0.000000e+00> : vector<128x256xf32>
    %83 = tpu.matmul %81, %82, %cst_11 {dimension_numbers = #tpu.dot_dimension_numbers<[1], [0], [0], [1], [0, 0, 1, 1], [], []>} : vector<128x36xbf16>, vector<36x256xbf16>, vector<128x256xf32> -> vector<128x256xf32>
    %84 = arith.addf %79, %83 : vector<128x256xf32>
    %85 = vector.extract_strided_slice %1 {offsets = [4, 0, 0], sizes = [1, 128, 36], strides = [1, 1, 1]} : vector<9x128x36xbf16> to vector<1x128x36xbf16>
    %86 = vector.shape_cast %85 : vector<1x128x36xbf16> to vector<128x36xbf16>
    %87 = vector.shape_cast %35 : vector<1x36x256xbf16> to vector<36x256xbf16>
    %cst_12 = arith.constant dense<0.000000e+00> : vector<128x256xf32>
    %88 = tpu.matmul %86, %87, %cst_12 {dimension_numbers = #tpu.dot_dimension_numbers<[1], [0], [0], [1], [0, 0, 1, 1], [], []>} : vector<128x36xbf16>, vector<36x256xbf16>, vector<128x256xf32> -> vector<128x256xf32>
    %89 = arith.addf %84, %88 : vector<128x256xf32>
    %90 = vector.extract_strided_slice %1 {offsets = [5, 0, 0], sizes = [1, 128, 36], strides = [1, 1, 1]} : vector<9x128x36xbf16> to vector<1x128x36xbf16>
    %91 = vector.shape_cast %90 : vector<1x128x36xbf16> to vector<128x36xbf16>
    %92 = vector.shape_cast %42 : vector<1x36x256xbf16> to vector<36x256xbf16>
    %cst_13 = arith.constant dense<0.000000e+00> : vector<128x256xf32>
    %93 = tpu.matmul %91, %92, %cst_13 {dimension_numbers = #tpu.dot_dimension_numbers<[1], [0], [0], [1], [0, 0, 1, 1], [], []>} : vector<128x36xbf16>, vector<36x256xbf16>, vector<128x256xf32> -> vector<128x256xf32>
    %94 = arith.addf %89, %93 : vector<128x256xf32>
    %95 = vector.extract_strided_slice %1 {offsets = [6, 0, 0], sizes = [1, 128, 36], strides = [1, 1, 1]} : vector<9x128x36xbf16> to vector<1x128x36xbf16>
    %96 = vector.shape_cast %95 : vector<1x128x36xbf16> to vector<128x36xbf16>
    %97 = vector.shape_cast %49 : vector<1x36x256xbf16> to vector<36x256xbf16>
    %cst_14 = arith.constant dense<0.000000e+00> : vector<128x256xf32>
    %98 = tpu.matmul %96, %97, %cst_14 {dimension_numbers = #tpu.dot_dimension_numbers<[1], [0], [0], [1], [0, 0, 1, 1], [], []>} : vector<128x36xbf16>, vector<36x256xbf16>, vector<128x256xf32> -> vector<128x256xf32>
    %99 = arith.addf %94, %98 : vector<128x256xf32>
    %100 = vector.extract_strided_slice %1 {offsets = [7, 0, 0], sizes = [1, 128, 36], strides = [1, 1, 1]} : vector<9x128x36xbf16> to vector<1x128x36xbf16>
    %101 = vector.shape_cast %100 : vector<1x128x36xbf16> to vector<128x36xbf16>
    %102 = vector.shape_cast %56 : vector<1x36x256xbf16> to vector<36x256xbf16>
    %cst_15 = arith.constant dense<0.000000e+00> : vector<128x256xf32>
    %103 = tpu.matmul %101, %102, %cst_15 {dimension_numbers = #tpu.dot_dimension_numbers<[1], [0], [0], [1], [0, 0, 1, 1], [], []>} : vector<128x36xbf16>, vector<36x256xbf16>, vector<128x256xf32> -> vector<128x256xf32>
    %104 = arith.addf %99, %103 : vector<128x256xf32>
    %105 = vector.extract_strided_slice %1 {offsets = [8, 0, 0], sizes = [1, 128, 36], strides = [1, 1, 1]} : vector<9x128x36xbf16> to vector<1x128x36xbf16>
    %106 = vector.shape_cast %105 : vector<1x128x36xbf16> to vector<128x36xbf16>
    %107 = vector.shape_cast %63 : vector<1x36x256xbf16> to vector<36x256xbf16>
    %cst_16 = arith.constant dense<0.000000e+00> : vector<128x256xf32>
    %108 = tpu.matmul %106, %107, %cst_16 {dimension_numbers = #tpu.dot_dimension_numbers<[1], [0], [0], [1], [0, 0, 1, 1], [], []>} : vector<128x36xbf16>, vector<36x256xbf16>, vector<128x256xf32> -> vector<128x256xf32>
    %109 = arith.addf %104, %108 : vector<128x256xf32>
    %110 = vector.extract_strided_slice %109 {offsets = [0, 0], sizes = [32, 256], strides = [1, 1]} : vector<128x256xf32> to vector<32x256xf32>
    %111 = arith.negf %110 : vector<32x256xf32>
    %112 = math.exp %111 : vector<32x256xf32>
    %cst_17 = arith.constant 1.000000e+00 : f32
    %113 = vector.broadcast %cst_17 : f32 to vector<32x256xf32>
    %114 = arith.addf %113, %112 : vector<32x256xf32>
    %115 = arith.divf %113, %114 : vector<32x256xf32>
    %116 = vector.extract_strided_slice %109 {offsets = [32, 0], sizes = [32, 256], strides = [1, 1]} : vector<128x256xf32> to vector<32x256xf32>
    %117 = arith.negf %116 : vector<32x256xf32>
    %118 = math.exp %117 : vector<32x256xf32>
    %cst_18 = arith.constant 1.000000e+00 : f32
    %119 = vector.broadcast %cst_18 : f32 to vector<32x256xf32>
    %120 = arith.addf %119, %118 : vector<32x256xf32>
    %121 = arith.divf %119, %120 : vector<32x256xf32>
    %122 = vector.extract_strided_slice %109 {offsets = [64, 0], sizes = [32, 256], strides = [1, 1]} : vector<128x256xf32> to vector<32x256xf32>
    %123 = arith.negf %122 : vector<32x256xf32>
    %124 = math.exp %123 : vector<32x256xf32>
    %cst_19 = arith.constant 1.000000e+00 : f32
    %125 = vector.broadcast %cst_19 : f32 to vector<32x256xf32>
    %126 = arith.addf %125, %124 : vector<32x256xf32>
    %127 = arith.divf %125, %126 : vector<32x256xf32>
    %128 = vector.extract_strided_slice %109 {offsets = [96, 0], sizes = [32, 256], strides = [1, 1]} : vector<128x256xf32> to vector<32x256xf32>
    %129 = math.tanh %128 : vector<32x256xf32>
    %c0_20 = arith.constant 0 : index
    %c0_21 = arith.constant 0 : index
    %c0_22 = arith.constant 0 : index
    %130 = vector.load %arg5[%c0_20, %c0_21, %c0_22] : memref<1x32x256xf32, #tpu.memory_space<vmem>>, vector<1x32x256xf32>
    %131 = vector.shape_cast %130 : vector<1x32x256xf32> to vector<32x256xf32>
    %132 = arith.mulf %121, %131 : vector<32x256xf32>
    %133 = arith.mulf %115, %129 : vector<32x256xf32>
    %134 = arith.addf %132, %133 : vector<32x256xf32>
    %135 = math.tanh %134 : vector<32x256xf32>
    %136 = arith.mulf %127, %135 : vector<32x256xf32>
    %c0_23 = arith.constant 0 : index
    %c0_24 = arith.constant 0 : index
    %c0_25 = arith.constant 0 : index
    %137 = vector.load %arg7[%c0_23, %c0_24, %c0_25] : memref<1x32x256xf32, #tpu.memory_space<vmem>>, vector<1x32x256xf32>
    %138 = vector.shape_cast %137 : vector<1x32x256xf32> to vector<32x256xf32>
    %139 = vector.shape_cast %134 : vector<32x256xf32> to vector<1x32x256xf32>
    tpu.vector_store %arg7[%c0_23, %c0_24, %c0_25], %139 {strides = array<i32>} : memref<1x32x256xf32, #tpu.memory_space<vmem>>, vector<1x32x256xf32>,
    %c0_26 = arith.constant 0 : index
    %c0_27 = arith.constant 0 : index
    %c0_28 = arith.constant 0 : index
    %140 = vector.load %arg6[%c0_26, %c0_27, %c0_28] : memref<1x32x256xf32, #tpu.memory_space<vmem>>, vector<1x32x256xf32>
    %141 = vector.shape_cast %140 : vector<1x32x256xf32> to vector<32x256xf32>
    %142 = vector.shape_cast %136 : vector<32x256xf32> to vector<1x32x256xf32>
    tpu.vector_store %arg6[%c0_26, %c0_27, %c0_28], %142 {strides = array<i32>} : memref<1x32x256xf32, #tpu.memory_space<vmem>>, vector<1x32x256xf32>,
    return
  }
  func.func @transform_0(%arg0: i32) -> (i32, i32, i32) {
    %c0_i32 = arith.constant 0 : i32
    %c0_i32_0 = arith.constant 0 : i32
    %c0_i32_1 = arith.constant 0 : i32
    return %arg0, %c0_i32, %c0_i32_0 : i32, i32, i32
  }
  func.func @transform_1(%arg0: i32) -> (i32, i32, i32) {
    %c0_i32 = arith.constant 0 : i32
    %c0_i32_0 = arith.constant 0 : i32
    %c0_i32_1 = arith.constant 0 : i32
    %c0_i32_2 = arith.constant 0 : i32
    return %c0_i32, %c0_i32_0, %c0_i32_1 : i32, i32, i32
  }
  func.func @transform_2(%arg0: i32) -> (i32, i32) {
    %c0_i32 = arith.constant 0 : i32
    %c0_i32_0 = arith.constant 0 : i32
    %c0_i32_1 = arith.constant 0 : i32
    return %c0_i32, %c0_i32_0 : i32, i32
  }
  func.func @transform_3(%arg0: i32) -> (i32, i32) {
    %c0_i32 = arith.constant 0 : i32
    %c0_i32_0 = arith.constant 0 : i32
    %c0_i32_1 = arith.constant 0 : i32
    return %c0_i32, %c0_i32_0 : i32, i32
  }
  func.func @transform_4(%arg0: i32) -> (i32, i32, i32) {
    %c0_i32 = arith.constant 0 : i32
    %c0_i32_0 = arith.constant 0 : i32
    %c0_i32_1 = arith.constant 0 : i32
    return %arg0, %c0_i32, %c0_i32_0 : i32, i32, i32
  }
  func.func @transform_5(%arg0: i32) -> (i32, i32, i32) {
    %c0_i32 = arith.constant 0 : i32
    %c0_i32_0 = arith.constant 0 : i32
    %c0_i32_1 = arith.constant 0 : i32
    return %arg0, %c0_i32, %c0_i32_0 : i32, i32, i32
  }
  func.func @transform_6(%arg0: i32) -> (i32, i32, i32) {
    %c0_i32 = arith.constant 0 : i32
    %c0_i32_0 = arith.constant 0 : i32
    %c0_i32_1 = arith.constant 0 : i32
    return %arg0, %c0_i32, %c0_i32_0 : i32, i32, i32
  }
}

</mosaic_0001>

<llo_original>
// kernel: tpu_custom_call.1
$region0: #{tpu_custom_call.1}
  #allocation0 [shape = 'u32[]', space=smem, size = 0x4, offset = 0x4, fixed_abs, tag = 'smem constant byte address 0x4 - core index']
  #allocation1 [shape = 'u32[144,128]{1,0:T(1,128)}', space=vmem, size = 0x12000, scoped, tag = 'internal scratch']
  %s0 = inlined_call_operand.vmem [shape: bf16[2,36,256], index: 0, kind: input, shape index: {}]
  %s1 = inlined_call_operand.vmem [shape: bf16[9,128,36], index: 1, kind: input, shape index: {}]
  %s2 = inlined_call_operand.vmem [shape: f32[128,1], index: 2, kind: input, shape index: {}]
  %s3 = inlined_call_operand.vmem [shape: bf16[9,256], index: 3, kind: input, shape index: {}]
  %s4 = inlined_call_operand.vmem [shape: f32[2,32,256], index: 4, kind: input, shape index: {}]
  %s5 = inlined_call_operand.hbm [shape: f32[2,32,256], index: 5, kind: output, shape index: {0}]
  %s6 = inlined_call_operand.hbm [shape: f32[2,32,256], index: 6, kind: output, shape index: {1}]
  %7 = xla_tuple %s5, %s6
  %s8 = sld [smem:[#allocation0]]
  $region61: #{tpu_custom_call.1} parent=0
    _
  %s10 = ssub.s32 1, %s8
  %s11 = scalar_select 0, %s10, %s8
  $region1: #{tpu_custom_call.1} parent=0
    #allocation2 [shape = 'u8[65536]{0}', space=vmem, size = 0x10000, scoped, tag = 'output window, operand 0']
    #allocation3 [shape = 's32[2]{0}', space=sflag, size = 0x8, scoped, tag = 'scoped memory for tpu_custom_call.1']
    #allocation4 [shape = 'u8[65536]{0}', space=vmem, size = 0x10000, scoped, tag = 'output window, operand 1']
    #allocation5 [shape = 's32[2]{0}', space=sflag, size = 0x8, scoped, tag = 'scoped memory for tpu_custom_call.1']
    %12 = vsyncpa [#allocation3], 0
    %s13 = scalar_lea.sflag [#allocation3], 1
    %14 = vsyncpa %s13, 0
    %15 = vsyncpa [#allocation5], 0
    %s16 = scalar_lea.sflag [#allocation5], 1
    %17 = vsyncpa %s16, 0
    loop: start=0, step=1, limit=4
    $region2: #{tpu_custom_call.1} parent=1 // loop_pre_header
      _
    $region3: #{tpu_custom_call.1} parent=1 // loop_header
      %s19 = sphi 0, %s23
      %p20 = scmp.ge.s32.totalorder %s19, 4
      %s29 = sphi 0, %s31
      %s32 = sphi 0, %s29
      %s33 = sphi 0, %s32
      %s49 = sphi 0, %s33
      %s53 = sphi 0, %s53
      %s55 = sphi 0, %s53
      %s56 = sphi 0, %s55
      %s70 = sphi 0, %s56
      %s74 = sphi 0, %s74
      %s76 = sphi 0, %s74
      %s77 = sphi 0, %s76
      %s91 = sphi 0, %s77
      %s95 = sphi 0, %s95
      %s97 = sphi 0, %s95
      %s98 = sphi 0, %s97
      %s112 = sphi 0, %s98
      %s118 = sphi 0, %s120
      %s121 = sphi 0, %s118
      %s122 = sphi 0, %s121
      %s138 = sphi 0, %s122
      %s144 = sphi 0, %s146
      %s147 = sphi 0, %s144
      %s148 = sphi 0, %s147
      %s164 = sphi 0, %s148
      %s170 = sphi 0, %s172
      %s173 = sphi 0, %s170
      %s174 = sphi 0, %s173
      %s190 = sphi 0, %s174
    $region4: #{tpu_custom_call.1} parent=1 // loop_header_branch
      %22 = sbr.rel (%p20) target = $region8
    $region5: #{tpu_custom_call.1} parent=1 // loop_body
      %s24 = ssub.s32 %s19, 1
      %s25 = ssub.s32 %s19, 2
      %s26 = sadd.s32 %s19, 1
      %s27 = ssub.s32 %s19, %s26
      %p28 = scmp.eq.s32.totalorder %s27, 0
      %s30 = sadd.s32 %s29, 1
      %s31 = scalar_select %p28, %s29, %s30
      %p34 = pneg %p28
      %p35 = scmp.eq.s32.totalorder %s19, 1
      %p36 = por %p34, %p35
      %p37 = scmp.ne.s32.totalorder %s29, %s32
      %p38 = scmp.eq.s32.totalorder %s19, 0
      %p39 = por %p37, %p38
      %p40 = scmp.ne.s32.totalorder %s29, %s32
      %p41 = scmp.eq.s32.totalorder %s24, 1
      %p42 = por %p40, %p41
      %p43 = scmp.ne.s32.totalorder %s32, %s33
      %p44 = scmp.eq.s32.totalorder %s24, 0
      %p45 = por %p43, %p44
      %p46 = scmp.ne.s32.totalorder %s32, %s33
      %p47 = scmp.eq.s32.totalorder %s25, 1
      %p48 = por %p46, %p47
      %p50 = scmp.ne.s32.totalorder %s33, %s49
      %p51 = scmp.eq.s32.totalorder %s25, 0
      %p52 = por %p50, %p51
      %s54 = sadd.s32 %s53, 1
      %p57 = scmp.eq.s32.totalorder %s19, 1
      %p58 = scmp.ne.s32.totalorder %s53, %s55
      %p59 = scmp.eq.s32.totalorder %s19, 0
      %p60 = por %p58, %p59
      %p61 = scmp.ne.s32.totalorder %s53, %s55
      %p62 = scmp.eq.s32.totalorder %s24, 1
      %p63 = por %p61, %p62
      %p64 = scmp.ne.s32.totalorder %s55, %s56
      %p65 = scmp.eq.s32.totalorder %s24, 0
      %p66 = por %p64, %p65
      %p67 = scmp.ne.s32.totalorder %s55, %s56
      %p68 = scmp.eq.s32.totalorder %s25, 1
      %p69 = por %p67, %p68
      %p71 = scmp.ne.s32.totalorder %s56, %s70
      %p72 = scmp.eq.s32.totalorder %s25, 0
      %p73 = por %p71, %p72
      %s75 = sadd.s32 %s74, 1
      %p78 = scmp.eq.s32.totalorder %s19, 1
      %p79 = scmp.ne.s32.totalorder %s74, %s76
      %p80 = scmp.eq.s32.totalorder %s19, 0
      %p81 = por %p79, %p80
      %p82 = scmp.ne.s32.totalorder %s74, %s76
      %p83 = scmp.eq.s32.totalorder %s24, 1
      %p84 = por %p82, %p83
      %p85 = scmp.ne.s32.totalorder %s76, %s77
      %p86 = scmp.eq.s32.totalorder %s24, 0
      %p87 = por %p85, %p86
      %p88 = scmp.ne.s32.totalorder %s76, %s77
      %p89 = scmp.eq.s32.totalorder %s25, 1
      %p90 = por %p88, %p89
      %p92 = scmp.ne.s32.totalorder %s77, %s91
      %p93 = scmp.eq.s32.totalorder %s25, 0
      %p94 = por %p92, %p93
      %s96 = sadd.s32 %s95, 1
      %p99 = scmp.eq.s32.totalorder %s19, 1
      %p100 = scmp.ne.s32.totalorder %s95, %s97
      %p101 = scmp.eq.s32.totalorder %s19, 0
      %p102 = por %p100, %p101
      %p103 = scmp.ne.s32.totalorder %s95, %s97
      %p104 = scmp.eq.s32.totalorder %s24, 1
      %p105 = por %p103, %p104
      %p106 = scmp.ne.s32.totalorder %s97, %s98
      %p107 = scmp.eq.s32.totalorder %s24, 0
      %p108 = por %p106, %p107
      %p109 = scmp.ne.s32.totalorder %s97, %s98
      %p110 = scmp.eq.s32.totalorder %s25, 1
      %p111 = por %p109, %p110
      %p113 = scmp.ne.s32.totalorder %s98, %s112
      %p114 = scmp.eq.s32.totalorder %s25, 0
      %p115 = por %p113, %p114
      %s116 = ssub.s32 %s19, %s26
      %p117 = scmp.eq.s32.totalorder %s116, 0
      %s119 = sadd.s32 %s118, 1
      %s120 = scalar_select %p117, %s118, %s119
      %p123 = pneg %p117
      %p124 = scmp.eq.s32.totalorder %s19, 1
      %p125 = por %p123, %p124
      %p126 = scmp.ne.s32.totalorder %s118, %s121
      %p127 = scmp.eq.s32.totalorder %s19, 0
      %p128 = por %p126, %p127
      %p129 = scmp.ne.s32.totalorder %s118, %s121
      %p130 = scmp.eq.s32.totalorder %s24, 1
      %p131 = por %p129, %p130
      %p132 = scmp.ne.s32.totalorder %s121, %s122
      %p133 = scmp.eq.s32.totalorder %s24, 0
      %p134 = por %p132, %p133
      %p135 = scmp.ne.s32.totalorder %s121, %s122
      %p136 = scmp.eq.s32.totalorder %s25, 1
      %p137 = por %p135, %p136
      %p139 = scmp.ne.s32.totalorder %s122, %s138
      %p140 = scmp.eq.s32.totalorder %s25, 0
      %p141 = por %p139, %p140
      %s142 = ssub.s32 %s19, %s26
      %p143 = scmp.eq.s32.totalorder %s142, 0
      %s145 = sadd.s32 %s144, 1
      %s146 = scalar_select %p143, %s144, %s145
      %p149 = pneg %p143
      %p150 = scmp.eq.s32.totalorder %s19, 1
      %p151 = por %p149, %p150
      %p152 = scmp.ne.s32.totalorder %s144, %s147
      %p153 = scmp.eq.s32.totalorder %s19, 0
      %p154 = por %p152, %p153
      %p155 = scmp.ne.s32.totalorder %s144, %s147
      %p156 = scmp.eq.s32.totalorder %s24, 1
      %p157 = por %p155, %p156
      %p158 = scmp.ne.s32.totalorder %s147, %s148
      %p159 = scmp.eq.s32.totalorder %s24, 0
      %p160 = por %p158, %p159
      %p161 = scmp.ne.s32.totalorder %s147, %s148
      %p162 = scmp.eq.s32.totalorder %s25, 1
      %p163 = por %p161, %p162
      %p165 = scmp.ne.s32.totalorder %s148, %s164
      %p166 = scmp.eq.s32.totalorder %s25, 0
      %p167 = por %p165, %p166
      %s168 = ssub.s32 %s19, %s26
      %p169 = scmp.eq.s32.totalorder %s168, 0
      %s171 = sadd.s32 %s170, 1
      %s172 = scalar_select %p169, %s170, %s171
      %p175 = pneg %p169
      %p176 = scmp.eq.s32.totalorder %s19, 1
      %p177 = por %p175, %p176
      %p178 = scmp.ne.s32.totalorder %s170, %s173
      %p179 = scmp.eq.s32.totalorder %s19, 0
      %p180 = por %p178, %p179
      %p181 = scmp.ne.s32.totalorder %s170, %s173
      %p182 = scmp.eq.s32.totalorder %s24, 1
      %p183 = por %p181, %p182
      %p184 = scmp.ne.s32.totalorder %s173, %s174
      %p185 = scmp.eq.s32.totalorder %s24, 0
      %p186 = por %p184, %p185
      %p187 = scmp.ne.s32.totalorder %s173, %s174
      %p188 = scmp.eq.s32.totalorder %s25, 1
      %p189 = por %p187, %p188
      %p191 = scmp.ne.s32.totalorder %s174, %s190
      %p192 = scmp.eq.s32.totalorder %s25, 0
      %p193 = por %p191, %p192
      %p194 = scmp.le.s32.totalorder 1, %s19
      %p195 = scmp.lt.s32.totalorder %s19, 3
      %p196 = pnand %p194, %p195
      %p197 = pneg %p196
      // Predicated region
      $region9: #{tpu_custom_call.1} parent=5 // pred_check
        _
      $region10: #{tpu_custom_call.1} parent=5 // pred_check_branch
        %199 = sbr.rel (%p196) target = $region12
      $region11: #{tpu_custom_call.1} parent=5 // pred_region
        %s200 = ssub.s32 %s19, 1
        // Predicated region
        $region13: #{tpu_custom_call.1} parent=11 // pred_check
          %p201 = pneg %p66
        $region14: #{tpu_custom_call.1} parent=11 // pred_check_branch
          %203 = sbr.rel (%p201) target = $region16
        $region15: #{tpu_custom_call.1} parent=11 // pred_region
          _
        $region16: #{tpu_custom_call.1} parent=11 // pred_fallthru
          _
        // Predicated region
        $region17: #{tpu_custom_call.1} parent=11 // pred_check
          %p204 = pneg %p87
        $region18: #{tpu_custom_call.1} parent=11 // pred_check_branch
          %206 = sbr.rel (%p204) target = $region20
        $region19: #{tpu_custom_call.1} parent=11 // pred_region
          _
        $region20: #{tpu_custom_call.1} parent=11 // pred_fallthru
          _
        // Predicated region
        $region21: #{tpu_custom_call.1} parent=11 // pred_check
          %p207 = pneg %p108
        $region22: #{tpu_custom_call.1} parent=11 // pred_check_branch
          %209 = sbr.rel (%p207) target = $region24
        $region23: #{tpu_custom_call.1} parent=11 // pred_region
          _
        $region24: #{tpu_custom_call.1} parent=11 // pred_fallthru
          _
      $region12: #{tpu_custom_call.1} parent=5 // pred_fallthru
        _
      %p210 = scmp.lt.s32.totalorder %s19, 2
      // Predicated region
      $region25: #{tpu_custom_call.1} parent=5 // pred_check
        %p211 = pneg %p210
      $region26: #{tpu_custom_call.1} parent=5 // pred_check_branch
        %213 = sbr.rel (%p211) target = $region28
      $region27: #{tpu_custom_call.1} parent=5 // pred_region
        // Predicated region
        $region29: #{tpu_custom_call.1} parent=27 // pred_check
          %p214 = pneg %p39
        $region30: #{tpu_custom_call.1} parent=27 // pred_check_branch
          %216 = sbr.rel (%p214) target = $region32
        $region31: #{tpu_custom_call.1} parent=27 // pred_region
          %p217 = scmp.lt.s32.totalorder %s19, 1
          %s218 = scalar_select %p217, %s19, 1
          %s219 = smul.addr %s218, 10
          %s220 = smul.addr %s219, 4
          %s221 = scalar_lea.vmem %s0, %s220
        $region32: #{tpu_custom_call.1} parent=27 // pred_fallthru
          _
        // Predicated region
        $region33: #{tpu_custom_call.1} parent=27 // pred_check
          %p222 = pneg %p128
        $region34: #{tpu_custom_call.1} parent=27 // pred_check_branch
          %224 = sbr.rel (%p222) target = $region36
        $region35: #{tpu_custom_call.1} parent=27 // pred_region
          %p225 = scmp.lt.s32.totalorder %s19, 1
          %s226 = scalar_select %p225, %s19, 1
          %s227 = smul.addr %s226, 8
          %s228 = smul.addr %s227, 8
          %s229 = scalar_lea.vmem %s4, %s228
        $region36: #{tpu_custom_call.1} parent=27 // pred_fallthru
          _
      $region28: #{tpu_custom_call.1} parent=5 // pred_fallthru
        _
      %p230 = scmp.le.s32.totalorder 1, %s19
      %p231 = scmp.lt.s32.totalorder %s19, 3
      %p232 = pnand %p230, %p231
      %p233 = pneg %p232
      // Predicated region
      $region37: #{tpu_custom_call.1} parent=5 // pred_check
        _
      $region38: #{tpu_custom_call.1} parent=5 // pred_check_branch
        %235 = sbr.rel (%p232) target = $region40
      $region39: #{tpu_custom_call.1} parent=5 // pred_region
        %s236 = ssub.s32 %s19, 1
        %p237 = scmp.lt.s32.totalorder %s24, 1
        %s238 = scalar_select %p237, %s24, 1
        %s239 = smul.addr %s238, 10
        %s240 = smul.addr %s239, 4
        %s241 = scalar_lea.vmem %s0, %s240
        %p242 = pneg %p45
        %p243 = pneg %p42
        %p244 = pneg %p66
        %p245 = pneg %p63
        %p246 = pneg %p87
        %p247 = pneg %p84
        %p248 = pneg %p108
        %p249 = pneg %p105
        %p250 = scmp.lt.s32.totalorder %s24, 1
        %s251 = scalar_select %p250, %s24, 1
        %s252 = smul.addr %s251, 8
        %s253 = smul.addr %s252, 8
        %s254 = scalar_lea.vmem %s4, %s253
        %p255 = pneg %p134
        %p256 = pneg %p131
        %p257 = pneg %p160
        %p258 = pneg %p157
        %s259 = sand.u32 %s147, 1
        %s260 = scalar_lea.sflag [#allocation3], %s259
        %s261 = sand.u32 %s147, 1
        %s262 = smul.addr %s261, 64
        %s263 = scalar_lea.vmem [#allocation2], %s262
        %p264 = pneg %p186
        %p265 = pneg %p183
        %s266 = sand.u32 %s173, 1
        %s267 = scalar_lea.sflag [#allocation5], %s266
        %s268 = sand.u32 %s173, 1
        %s269 = smul.addr %s268, 64
        %s270 = scalar_lea.vmem [#allocation4], %s269
        %p271 = scmp.lt.s32.totalorder %s24, 1
        %s272 = scalar_select %p271, %s24, 1
        %s273 = smul.addr %s272, 10
        %s274 = smul.addr %s273, 4
        %s275 = scalar_lea.vmem %s0, %s274
        %p276 = scmp.lt.s32.totalorder %s24, 1
        %s277 = scalar_select %p276, %s24, 1
        %s278 = smul.addr %s277, 8
        %s279 = smul.addr %s278, 8
        %s280 = scalar_lea.vmem %s4, %s279
        %v282 = vld [vmem:[%s275] sm:$0xff]
        %v283 = vld [vmem:[%s275 + $0x8] sm:$0xff]
        %v284 = vld [vmem:[%s275 + $0x10] sm:$0xff]
        %v285 = vld [vmem:[%s275 + $0x18] sm:$0xff]
        %v286 = vld [vmem:[%s275 + $0x20] sm:$0x33]
        %v287 = vld [vmem:[%s1] sm:$0xf]
        %v288 = vld [vmem:[%s1 + $0x4] sm:$0xf]
        %v289 = vld [vmem:[%s1 + $0x8] sm:$0xf]
        %v290 = vld [vmem:[%s1 + $0xc] sm:$0xf]
        %v291 = vld [vmem:[%s1 + $0x10] sm:$0xf]
        %v292 = vld [vmem:[%s1 + $0x14] sm:$0xf]
        %v293 = vld [vmem:[%s1 + $0x18] sm:$0xf]
        %v294 = vld [vmem:[%s1 + $0x1c] sm:$0xf]
        %v295 = vld [vmem:[%s1 + $0x20] sm:$0xf]
        %v296 = vld [vmem:[%s1 + $0x24] sm:$0xf]
        %v297 = vld [vmem:[%s1 + $0x28] sm:$0xf]
        %v298 = vld [vmem:[%s1 + $0x2c] sm:$0xf]
        %v299 = vld [vmem:[%s1 + $0x30] sm:$0xf]
        %v300 = vld [vmem:[%s1 + $0x34] sm:$0xf]
        %v301 = vld [vmem:[%s1 + $0x38] sm:$0xf]
        %v302 = vld [vmem:[%s1 + $0x3c] sm:$0xf]
        %v303 = vld [vmem:[%s1 + $0x40] sm:$0xf]
        %v304 = vld [vmem:[%s1 + $0x44] sm:$0xf]
        %v305 = vld [vmem:[%s1 + $0x48] sm:$0xf]
        %v306 = vld [vmem:[%s1 + $0x4c] sm:$0xf]
        %v307 = vld [vmem:[%s1 + $0x50] sm:$0xf]
        %v308 = vld [vmem:[%s1 + $0x54] sm:$0xf]
        %v309 = vld [vmem:[%s1 + $0x58] sm:$0xf]
        %v310 = vld [vmem:[%s1 + $0x5c] sm:$0xf]
        %v311 = vld [vmem:[%s1 + $0x60] sm:$0xf]
        %v312 = vld [vmem:[%s1 + $0x64] sm:$0xf]
        %v313 = vld [vmem:[%s1 + $0x68] sm:$0xf]
        %v314 = vld [vmem:[%s1 + $0x6c] sm:$0xf]
        %v315 = vld [vmem:[%s1 + $0x70] sm:$0xf]
        %v316 = vld [vmem:[%s1 + $0x74] sm:$0xf]
        %v317 = vld [vmem:[%s1 + $0x78] sm:$0xf]
        %v318 = vld [vmem:[%s1 + $0x7c] sm:$0xf]
        %v319 = vld [vmem:[%s1 + $0x80] sm:$0xf]
        %v320 = vld [vmem:[%s1 + $0x84] sm:$0xf]
        %v321 = vld [vmem:[%s1 + $0x88] sm:$0xf]
        %v322 = vld [vmem:[%s1 + $0x8c] sm:$0xf]
        %v323 = vld [vmem:[%s1 + $0x90] sm:$0xf]
        %v324 = vld [vmem:[%s1 + $0x94] sm:$0xf]
        %v325 = vld [vmem:[%s1 + $0x98] sm:$0xf]
        %v326 = vld [vmem:[%s1 + $0x9c] sm:$0xf]
        %v327 = vld [vmem:[%s1 + $0xa0] sm:$0xf]
        %v328 = vld [vmem:[%s1 + $0xa4] sm:$0xf]
        %v329 = vld [vmem:[%s1 + $0xa8] sm:$0xf]
        %v330 = vld [vmem:[%s1 + $0xac] sm:$0xf]
        %v331 = vld [vmem:[%s1 + $0xb0] sm:$0xf]
        %v332 = vld [vmem:[%s1 + $0xb4] sm:$0xf]
        %v333 = vld [vmem:[%s1 + $0xb8] sm:$0xf]
        %v334 = vld [vmem:[%s1 + $0xbc] sm:$0xf]
        %v335 = vld [vmem:[%s1 + $0xc0] sm:$0xf]
        %v336 = vld [vmem:[%s1 + $0xc4] sm:$0xf]
        %v337 = vld [vmem:[%s1 + $0xc8] sm:$0xf]
        %v338 = vld [vmem:[%s1 + $0xcc] sm:$0xf]
        %v339 = vld [vmem:[%s1 + $0xd0] sm:$0xf]
        %v340 = vld [vmem:[%s1 + $0xd4] sm:$0xf]
        %v341 = vld [vmem:[%s1 + $0xd8] sm:$0xf]
        %v342 = vld [vmem:[%s1 + $0xdc] sm:$0xf]
        %v343 = vld [vmem:[%s1 + $0xe0] sm:$0xf]
        %v344 = vld [vmem:[%s1 + $0xe4] sm:$0xf]
        %v345 = vld [vmem:[%s1 + $0xe8] sm:$0xf]
        %v346 = vld [vmem:[%s1 + $0xec] sm:$0xf]
        %v347 = vld [vmem:[%s1 + $0xf0] sm:$0xf]
        %v348 = vld [vmem:[%s1 + $0xf4] sm:$0xf]
        %v349 = vld [vmem:[%s1 + $0xf8] sm:$0xf]
        %v350 = vld [vmem:[%s1 + $0xfc] sm:$0xf]
        %v351 = vld [vmem:[%s1 + $0x100] sm:$0xf]
        %v352 = vld [vmem:[%s1 + $0x104] sm:$0xf]
        %v353 = vld [vmem:[%s1 + $0x108] sm:$0xf]
        %v354 = vld [vmem:[%s1 + $0x10c] sm:$0xf]
        %v355 = vld [vmem:[%s1 + $0x110] sm:$0xf]
        %v356 = vld [vmem:[%s1 + $0x114] sm:$0xf]
        %v357 = vld [vmem:[%s1 + $0x118] sm:$0xf]
        %v358 = vld [vmem:[%s1 + $0x11c] sm:$0xf]
        %v359 = vld [vmem:[%s1 + $0x120] sm:$0xf]
        %v360 = vld [vmem:[%s1 + $0x124] sm:$0xf]
        %v361 = vld [vmem:[%s1 + $0x128] sm:$0xf]
        %v362 = vld [vmem:[%s1 + $0x12c] sm:$0xf]
        %v363 = vld [vmem:[%s1 + $0x130] sm:$0xf]
        %v364 = vld [vmem:[%s1 + $0x134] sm:$0xf]
        %v365 = vld [vmem:[%s1 + $0x138] sm:$0xf]
        %v366 = vld [vmem:[%s1 + $0x13c] sm:$0xf]
        %v367 = vld [vmem:[%s1 + $0x140] sm:$0xf]
        %v368 = vld [vmem:[%s1 + $0x144] sm:$0xf]
        %v369 = vld [vmem:[%s1 + $0x148] sm:$0xf]
        %v370 = vld [vmem:[%s1 + $0x14c] sm:$0xf]
        %v371 = vld [vmem:[%s1 + $0x150] sm:$0xf]
        %v372 = vld [vmem:[%s1 + $0x154] sm:$0xf]
        %v373 = vld [vmem:[%s1 + $0x158] sm:$0xf]
        %v374 = vld [vmem:[%s1 + $0x15c] sm:$0xf]
        %v375 = vld [vmem:[%s1 + $0x160] sm:$0xf]
        %v376 = vld [vmem:[%s1 + $0x164] sm:$0xf]
        %v377 = vld [vmem:[%s1 + $0x168] sm:$0xf]
        %v378 = vld [vmem:[%s1 + $0x16c] sm:$0xf]
        %v379 = vld [vmem:[%s1 + $0x170] sm:$0xf]
        %v380 = vld [vmem:[%s1 + $0x174] sm:$0xf]
        %v381 = vld [vmem:[%s1 + $0x178] sm:$0xf]
        %v382 = vld [vmem:[%s1 + $0x17c] sm:$0xf]
        %v383 = vld [vmem:[%s1 + $0x180] sm:$0xf]
        %v384 = vld [vmem:[%s1 + $0x184] sm:$0xf]
        %v385 = vld [vmem:[%s1 + $0x188] sm:$0xf]
        %v386 = vld [vmem:[%s1 + $0x18c] sm:$0xf]
        %v387 = vld [vmem:[%s1 + $0x190] sm:$0xf]
        %v388 = vld [vmem:[%s1 + $0x194] sm:$0xf]
        %v389 = vld [vmem:[%s1 + $0x198] sm:$0xf]
        %v390 = vld [vmem:[%s1 + $0x19c] sm:$0xf]
        %v391 = vld [vmem:[%s1 + $0x1a0] sm:$0xf]
        %v392 = vld [vmem:[%s1 + $0x1a4] sm:$0xf]
        %v393 = vld [vmem:[%s1 + $0x1a8] sm:$0xf]
        %v394 = vld [vmem:[%s1 + $0x1ac] sm:$0xf]
        %v395 = vld [vmem:[%s1 + $0x1b0] sm:$0xf]
        %v396 = vld [vmem:[%s1 + $0x1b4] sm:$0xf]
        %v397 = vld [vmem:[%s1 + $0x1b8] sm:$0xf]
        %v398 = vld [vmem:[%s1 + $0x1bc] sm:$0xf]
        %v399 = vld [vmem:[%s1 + $0x1c0] sm:$0xf]
        %v400 = vld [vmem:[%s1 + $0x1c4] sm:$0xf]
        %v401 = vld [vmem:[%s1 + $0x1c8] sm:$0xf]
        %v402 = vld [vmem:[%s1 + $0x1cc] sm:$0xf]
        %v403 = vld [vmem:[%s1 + $0x1d0] sm:$0xf]
        %v404 = vld [vmem:[%s1 + $0x1d4] sm:$0xf]
        %v405 = vld [vmem:[%s1 + $0x1d8] sm:$0xf]
        %v406 = vld [vmem:[%s1 + $0x1dc] sm:$0xf]
        %v407 = vld [vmem:[%s1 + $0x1e0] sm:$0xf]
        %v408 = vld [vmem:[%s1 + $0x1e4] sm:$0xf]
        %v409 = vld [vmem:[%s1 + $0x1e8] sm:$0xf]
        %v410 = vld [vmem:[%s1 + $0x1ec] sm:$0xf]
        %v411 = vld [vmem:[%s1 + $0x1f0] sm:$0xf]
        %v412 = vld [vmem:[%s1 + $0x1f4] sm:$0xf]
        %v413 = vld [vmem:[%s1 + $0x1f8] sm:$0xf]
        %v414 = vld [vmem:[%s1 + $0x1fc] sm:$0xf]
        %v415 = vld [vmem:[%s1 + $0x200] sm:$0xf]
        %v416 = vld [vmem:[%s1 + $0x204] sm:$0xf]
        %v417 = vld [vmem:[%s1 + $0x208] sm:$0xf]
        %v418 = vld [vmem:[%s1 + $0x20c] sm:$0xf]
        %v419 = vld [vmem:[%s1 + $0x210] sm:$0xf]
        %v420 = vld [vmem:[%s1 + $0x214] sm:$0xf]
        %v421 = vld [vmem:[%s1 + $0x218] sm:$0xf]
        %v422 = vld [vmem:[%s1 + $0x21c] sm:$0xf]
        %v423 = vld [vmem:[%s1 + $0x220] sm:$0xf]
        %v424 = vld [vmem:[%s1 + $0x224] sm:$0xf]
        %v425 = vld [vmem:[%s1 + $0x228] sm:$0xf]
        %v426 = vld [vmem:[%s1 + $0x22c] sm:$0xf]
        %v427 = vld [vmem:[%s1 + $0x230] sm:$0xf]
        %v428 = vld [vmem:[%s1 + $0x234] sm:$0xf]
        %v429 = vld [vmem:[%s1 + $0x238] sm:$0xf]
        %v430 = vld [vmem:[%s1 + $0x23c] sm:$0xf]
        %v431 = vld [vmem:[%s2] sm:$0xff]
        %v432 = vld [vmem:[%s2 + $0x8] sm:$0xff]
        %v433 = vld [vmem:[%s2 + $0x10] sm:$0xff]
        %v434 = vld [vmem:[%s2 + $0x18] sm:$0xff]
        %v435 = vld [vmem:[%s2 + $0x20] sm:$0xff]
        %v436 = vld [vmem:[%s2 + $0x28] sm:$0xff]
        %v437 = vld [vmem:[%s2 + $0x30] sm:$0xff]
        %v438 = vld [vmem:[%s2 + $0x38] sm:$0xff]
        %v439 = vld [vmem:[%s2 + $0x40] sm:$0xff]
        %v440 = vld [vmem:[%s2 + $0x48] sm:$0xff]
        %v441 = vld [vmem:[%s2 + $0x50] sm:$0xff]
        %v442 = vld [vmem:[%s2 + $0x58] sm:$0xff]
        %v443 = vld [vmem:[%s2 + $0x60] sm:$0xff]
        %v444 = vld [vmem:[%s2 + $0x68] sm:$0xff]
        %v445 = vld [vmem:[%s2 + $0x70] sm:$0xff]
        %v446 = vld [vmem:[%s2 + $0x78] sm:$0xff]
        %v447 = vld [vmem:[%s3] sm:$0xff]
        %v448 = vld [vmem:[%s3 + $0x8] sm:$0x11]
        %v454 = vunpack.c.h.b16 %v282
        %v455 = vunpack.c.h.b16 %v283
        %v456 = vunpack.c.h.b16 %v284
        %v457 = vunpack.c.h.b16 %v285
        %v458 = vunpack.c.h.b16 %v286
        %v459 = vpack.c.b16 %v455, %v454
        %v460 = vpack.c.b16 %v457, %v456
        %v461 = vpack.c.b16 %v458, %v458
        %462 = vrot.lane.b32.xlu0 %v459, 17
        %v463 = vpop.permute.xlu0 %462
        %464 = vrot.lane.b32.xlu0 %v460, 17
        %v465 = vpop.permute.xlu0 %464
        %466 = vrot.lane.b32.xlu0 %v461, 17
        %v467 = vpop.permute.xlu0 %466
        %v468 = vunpack.c.l.b16 %v282
        %v469 = vunpack.c.l.b16 %v283
        %v470 = vunpack.c.l.b16 %v284
        %v471 = vunpack.c.l.b16 %v285
        %v472 = vunpack.c.l.b16 %v286
        %v473 = vpack.c.b16 %v469, %v468
        %v474 = vpack.c.b16 %v471, %v470
        %v475 = vpack.c.b16 %v472, %v472
        %476 = vrot.lane.b32.xlu0 %v473, 17
        %v477 = vpop.permute.xlu0 %476
        %478 = vrot.lane.b32.xlu0 %v474, 17
        %v479 = vpop.permute.xlu0 %478
        %480 = vrot.lane.b32.xlu0 %v475, 17
        %v481 = vpop.permute.xlu0 %480
        %vm482 = vcmask 138240
        %v483 = vsel %vm482, %v477, %v463
        %v484 = vsel %vm482, %v479, %v465
        %v485 = vsel %vm482, %v481, %v467
        %vm489 = vcmask 138240
        %v492 = vsel %vm489, %v463, %v477
        %v496 = vsel %vm489, %v465, %v479
        %v500 = vsel %vm489, %v467, %v481
        %v503 = vunpack.c.l.b16 %v447
        %v504 = vunpack.c.h.b16 %v447
        %v505 = vpack.c.b16 %v503, %v503
        %v506 = vpack.c.b16 %v504, %v504
        %v508 = vpack.i.b16 %v505, %v505
        %v510 = vlaneseq
        %v511 = vshrl.u32 %v510, 7
        %v512 = vsub.s32 0, %v511
        %v513 = vrot.slane %v508, %v512
        %v515 = vpack.i.b16 %v506, %v506
        %v517 = vlaneseq
        %v518 = vshrl.u32 %v517, 7
        %v519 = vsub.s32 0, %v518
        %v520 = vrot.slane %v515, %v519
        %v521 = vmul.bf16 %v492, %v513
        %v522 = vmul.bf16 %v483, %v520
        %v523 = vmul.bf16 %v496, %v513
        %v524 = vmul.bf16 %v484, %v520
        %v525 = vmul.bf16 %v500, %v513
        %v526 = vmul.bf16 %v485, %v520
        %527 = vrot.lane.b32.xlu0 %v459, 16
        %v528 = vpop.permute.xlu0 %527
        %529 = vrot.lane.b32.xlu0 %v460, 16
        %v530 = vpop.permute.xlu0 %529
        %531 = vrot.lane.b32.xlu0 %v461, 16
        %v532 = vpop.permute.xlu0 %531
        %533 = vrot.lane.b32.xlu0 %v473, 16
        %v534 = vpop.permute.xlu0 %533
        %535 = vrot.lane.b32.xlu0 %v474, 16
        %v536 = vpop.permute.xlu0 %535
        %537 = vrot.lane.b32.xlu0 %v475, 16
        %v538 = vpop.permute.xlu0 %537
        %vm539 = vcmask 130048
        %v540 = vsel %vm539, %v534, %v528
        %v541 = vsel %vm539, %v536, %v530
        %v542 = vsel %vm539, %v538, %v532
        %vm546 = vcmask 130048
        %v549 = vsel %vm546, %v528, %v534
        %v553 = vsel %vm546, %v530, %v536
        %v557 = vsel %vm546, %v532, %v538
        %v559 = vshrl.u32 %v505, 16
        %v560 = vpack.i.b16 %v559, %v559
        %v562 = vlaneseq
        %v563 = vshrl.u32 %v562, 7
        %v564 = vsub.s32 0, %v563
        %v565 = vrot.slane %v560, %v564
        %v566 = vshrl.u32 %v506, 16
        %v567 = vpack.i.b16 %v566, %v566
        %v569 = vlaneseq
        %v570 = vshrl.u32 %v569, 7
        %v571 = vsub.s32 0, %v570
        %v572 = vrot.slane %v567, %v571
        %v573 = vmul.bf16 %v549, %v565
        %v574 = vmul.bf16 %v540, %v572
        %v575 = vmul.bf16 %v553, %v565
        %v576 = vmul.bf16 %v541, %v572
        %v577 = vmul.bf16 %v557, %v565
        %v578 = vmul.bf16 %v542, %v572
        %579 = vrot.lane.b32.xlu0 %v459, 15
        %v580 = vpop.permute.xlu0 %579
        %581 = vrot.lane.b32.xlu0 %v460, 15
        %v582 = vpop.permute.xlu0 %581
        %583 = vrot.lane.b32.xlu0 %v461, 15
        %v584 = vpop.permute.xlu0 %583
        %585 = vrot.lane.b32.xlu0 %v473, 15
        %v586 = vpop.permute.xlu0 %585
        %587 = vrot.lane.b32.xlu0 %v474, 15
        %v588 = vpop.permute.xlu0 %587
        %589 = vrot.lane.b32.xlu0 %v475, 15
        %v590 = vpop.permute.xlu0 %589
        %vm591 = vcmask 121856
        %v592 = vsel %vm591, %v586, %v580
        %v593 = vsel %vm591, %v588, %v582
        %v594 = vsel %vm591, %v590, %v584
        %vm598 = vcmask 121856
        %v601 = vsel %vm598, %v580, %v586
        %v605 = vsel %vm598, %v582, %v588
        %v609 = vsel %vm598, %v584, %v590
        %v611 = vlaneseq
        %v612 = vshrl.u32 %v611, 7
        %v613 = vsub.s32 1, %v612
        %v614 = vrot.slane %v508, %v613
        %v615 = vlaneseq
        %v616 = vshrl.u32 %v615, 7
        %v617 = vsub.s32 1, %v616
        %v618 = vrot.slane %v515, %v617
        %v619 = vmul.bf16 %v601, %v614
        %v620 = vmul.bf16 %v592, %v618
        %v621 = vmul.bf16 %v605, %v614
        %v622 = vmul.bf16 %v593, %v618
        %v623 = vmul.bf16 %v609, %v614
        %v624 = vmul.bf16 %v594, %v618
        %625 = vrot.lane.b32.xlu0 %v459, 1
        %v626 = vpop.permute.xlu0 %625
        %627 = vrot.lane.b32.xlu0 %v460, 1
        %v628 = vpop.permute.xlu0 %627
        %629 = vrot.lane.b32.xlu0 %v461, 1
        %v630 = vpop.permute.xlu0 %629
        %631 = vrot.lane.b32.xlu0 %v473, 1
        %v632 = vpop.permute.xlu0 %631
        %633 = vrot.lane.b32.xlu0 %v474, 1
        %v634 = vpop.permute.xlu0 %633
        %635 = vrot.lane.b32.xlu0 %v475, 1
        %v636 = vpop.permute.xlu0 %635
        %vm637 = vcmask 7168
        %v638 = vsel %vm637, %v632, %v626
        %v639 = vsel %vm637, %v634, %v628
        %v640 = vsel %vm637, %v636, %v630
        %vm644 = vcmask 7168
        %v647 = vsel %vm644, %v626, %v632
        %v651 = vsel %vm644, %v628, %v634
        %v655 = vsel %vm644, %v630, %v636
        %v657 = vlaneseq
        %v658 = vshrl.u32 %v657, 7
        %v659 = vsub.s32 1, %v658
        %v660 = vrot.slane %v560, %v659
        %v661 = vlaneseq
        %v662 = vshrl.u32 %v661, 7
        %v663 = vsub.s32 1, %v662
        %v664 = vrot.slane %v567, %v663
        %v665 = vmul.bf16 %v647, %v660
        %v666 = vmul.bf16 %v638, %v664
        %v667 = vmul.bf16 %v651, %v660
        %v668 = vmul.bf16 %v639, %v664
        %v669 = vmul.bf16 %v655, %v660
        %v670 = vmul.bf16 %v640, %v664
        %v671 = vlaneseq
        %v672 = vshrl.u32 %v671, 7
        %v673 = vsub.s32 2, %v672
        %v674 = vrot.slane %v508, %v673
        %v675 = vlaneseq
        %v676 = vshrl.u32 %v675, 7
        %v677 = vsub.s32 2, %v676
        %v678 = vrot.slane %v515, %v677
        %v681 = vunpack.c.l.b16 %v674
        %v682 = vunpack.c.l.b16 %v678
        %v683 = vpack.c.b16 %v682, %v681
        %v685 = vmul.bf16 %v282, %v683
        %v686 = vmul.bf16 %v283, %v683
        %v687 = vmul.bf16 %v284, %v683
        %v688 = vmul.bf16 %v285, %v683
        %v689 = vmul.bf16 %v286, %v683
        %690 = vrot.lane.b32.xlu0 %v473, 127
        %v691 = vpop.permute.xlu0 %690
        %692 = vrot.lane.b32.xlu0 %v459, 127
        %v693 = vpop.permute.xlu0 %692
        %694 = vrot.lane.b32.xlu0 %v474, 127
        %v695 = vpop.permute.xlu0 %694
        %696 = vrot.lane.b32.xlu0 %v460, 127
        %v697 = vpop.permute.xlu0 %696
        %698 = vrot.lane.b32.xlu0 %v475, 127
        %v699 = vpop.permute.xlu0 %698
        %700 = vrot.lane.b32.xlu0 %v461, 127
        %v701 = vpop.permute.xlu0 %700
        %vm702 = vcmask 1039360
        %v703 = vsel %vm702, %v691, %v693
        %v704 = vsel %vm702, %v695, %v697
        %v705 = vsel %vm702, %v699, %v701
        %vm709 = vcmask 1039360
        %v712 = vsel %vm709, %v693, %v691
        %v716 = vsel %vm709, %v697, %v695
        %v720 = vsel %vm709, %v701, %v699
        %v722 = vlaneseq
        %v723 = vshrl.u32 %v722, 7
        %v724 = vsub.s32 2, %v723
        %v725 = vrot.slane %v560, %v724
        %v726 = vlaneseq
        %v727 = vshrl.u32 %v726, 7
        %v728 = vsub.s32 2, %v727
        %v729 = vrot.slane %v567, %v728
        %v730 = vmul.bf16 %v703, %v725
        %v731 = vmul.bf16 %v712, %v729
        %v732 = vmul.bf16 %v704, %v725
        %v733 = vmul.bf16 %v716, %v729
        %v734 = vmul.bf16 %v705, %v725
        %v735 = vmul.bf16 %v720, %v729
        %736 = vrot.lane.b32.xlu0 %v473, 113
        %v737 = vpop.permute.xlu0 %736
        %738 = vrot.lane.b32.xlu0 %v459, 113
        %v739 = vpop.permute.xlu0 %738
        %740 = vrot.lane.b32.xlu0 %v474, 113
        %v741 = vpop.permute.xlu0 %740
        %742 = vrot.lane.b32.xlu0 %v460, 113
        %v743 = vpop.permute.xlu0 %742
        %744 = vrot.lane.b32.xlu0 %v475, 113
        %v745 = vpop.permute.xlu0 %744
        %746 = vrot.lane.b32.xlu0 %v461, 113
        %v747 = vpop.permute.xlu0 %746
        %vm748 = vcmask 924672
        %v749 = vsel %vm748, %v737, %v739
        %v750 = vsel %vm748, %v741, %v743
        %v751 = vsel %vm748, %v745, %v747
        %vm755 = vcmask 924672
        %v758 = vsel %vm755, %v739, %v737
        %v762 = vsel %vm755, %v743, %v741
        %v766 = vsel %vm755, %v747, %v745
        %v768 = vlaneseq
        %v769 = vshrl.u32 %v768, 7
        %v770 = vsub.s32 3, %v769
        %v771 = vrot.slane %v508, %v770
        %v772 = vlaneseq
        %v773 = vshrl.u32 %v772, 7
        %v774 = vsub.s32 3, %v773
        %v775 = vrot.slane %v515, %v774
        %v776 = vmul.bf16 %v749, %v771
        %v777 = vmul.bf16 %v758, %v775
        %v778 = vmul.bf16 %v750, %v771
        %v779 = vmul.bf16 %v762, %v775
        %v780 = vmul.bf16 %v751, %v771
        %v781 = vmul.bf16 %v766, %v775
        %782 = vrot.lane.b32.xlu0 %v473, 112
        %v783 = vpop.permute.xlu0 %782
        %784 = vrot.lane.b32.xlu0 %v459, 112
        %v785 = vpop.permute.xlu0 %784
        %786 = vrot.lane.b32.xlu0 %v474, 112
        %v787 = vpop.permute.xlu0 %786
        %788 = vrot.lane.b32.xlu0 %v460, 112
        %v789 = vpop.permute.xlu0 %788
        %790 = vrot.lane.b32.xlu0 %v475, 112
        %v791 = vpop.permute.xlu0 %790
        %792 = vrot.lane.b32.xlu0 %v461, 112
        %v793 = vpop.permute.xlu0 %792
        %vm794 = vcmask 916480
        %v795 = vsel %vm794, %v783, %v785
        %v796 = vsel %vm794, %v787, %v789
        %v797 = vsel %vm794, %v791, %v793
        %vm801 = vcmask 916480
        %v804 = vsel %vm801, %v785, %v783
        %v808 = vsel %vm801, %v789, %v787
        %v812 = vsel %vm801, %v793, %v791
        %v814 = vlaneseq
        %v815 = vshrl.u32 %v814, 7
        %v816 = vsub.s32 3, %v815
        %v817 = vrot.slane %v560, %v816
        %v818 = vlaneseq
        %v819 = vshrl.u32 %v818, 7
        %v820 = vsub.s32 3, %v819
        %v821 = vrot.slane %v567, %v820
        %v822 = vmul.bf16 %v795, %v817
        %v823 = vmul.bf16 %v804, %v821
        %v824 = vmul.bf16 %v796, %v817
        %v825 = vmul.bf16 %v808, %v821
        %v826 = vmul.bf16 %v797, %v817
        %v827 = vmul.bf16 %v812, %v821
        %828 = vrot.lane.b32.xlu0 %v473, 111
        %v829 = vpop.permute.xlu0 %828
        %830 = vrot.lane.b32.xlu0 %v459, 111
        %v831 = vpop.permute.xlu0 %830
        %832 = vrot.lane.b32.xlu0 %v474, 111
        %v833 = vpop.permute.xlu0 %832
        %834 = vrot.lane.b32.xlu0 %v460, 111
        %v835 = vpop.permute.xlu0 %834
        %836 = vrot.lane.b32.xlu0 %v475, 111
        %v837 = vpop.permute.xlu0 %836
        %838 = vrot.lane.b32.xlu0 %v461, 111
        %v839 = vpop.permute.xlu0 %838
        %vm840 = vcmask 908288
        %v841 = vsel %vm840, %v829, %v831
        %v842 = vsel %vm840, %v833, %v835
        %v843 = vsel %vm840, %v837, %v839
        %vm847 = vcmask 908288
        %v850 = vsel %vm847, %v831, %v829
        %v854 = vsel %vm847, %v835, %v833
        %v858 = vsel %vm847, %v839, %v837
        %v861 = vunpack.c.l.b16 %v448
        %v862 = vunpack.c.h.b16 %v448
        %v863 = vpack.c.b16 %v861, %v861
        %v864 = vpack.c.b16 %v862, %v862
        %v866 = vpack.i.b16 %v863, %v863
        %v868 = vlaneseq
        %v869 = vshrl.u32 %v868, 7
        %v870 = vsub.s32 0, %v869
        %v871 = vrot.slane %v866, %v870
        %v873 = vpack.i.b16 %v864, %v864
        %v875 = vlaneseq
        %v876 = vshrl.u32 %v875, 7
        %v877 = vsub.s32 0, %v876
        %v878 = vrot.slane %v873, %v877
        %v879 = vmul.bf16 %v841, %v871
        %v880 = vmul.bf16 %v850, %v878
        %v881 = vmul.bf16 %v842, %v871
        %v882 = vmul.bf16 %v854, %v878
        %v883 = vmul.bf16 %v843, %v871
        %v884 = vmul.bf16 %v858, %v878
        %v901 = vunpack.c.l.b16 %v287
        %v902 = vunpack.c.l.b16 %v288
        %v903 = vunpack.c.l.b16 %v289
        %v904 = vunpack.c.l.b16 %v290
        %v905 = vunpack.c.l.b16 %v291
        %v906 = vunpack.c.l.b16 %v292
        %v907 = vunpack.c.l.b16 %v293
        %v908 = vunpack.c.l.b16 %v294
        %v909 = vunpack.c.l.b16 %v295
        %v910 = vunpack.c.l.b16 %v296
        %v911 = vunpack.c.l.b16 %v297
        %v912 = vunpack.c.l.b16 %v298
        %v913 = vunpack.c.l.b16 %v299
        %v914 = vunpack.c.l.b16 %v300
        %v915 = vunpack.c.l.b16 %v301
        %v916 = vunpack.c.l.b16 %v302
        %v917 = vpack.c.b16 %v902, %v901
        %v918 = vpack.c.b16 %v904, %v903
        %v919 = vpack.c.b16 %v906, %v905
        %v920 = vpack.c.b16 %v908, %v907
        %v921 = vpack.c.b16 %v910, %v909
        %v922 = vpack.c.b16 %v912, %v911
        %v923 = vpack.c.b16 %v914, %v913
        %v924 = vpack.c.b16 %v916, %v915
        %vm925 = vcmask 293888
        %v927 = vsel %vm925, %v917, 0
        %v930 = vsel %vm925, %v918, 0
        %v933 = vsel %vm925, %v919, 0
        %v936 = vsel %vm925, %v920, 0
        %v939 = vsel %vm925, %v921, 0
        %v942 = vsel %vm925, %v922, 0
        %v945 = vsel %vm925, %v923, 0
        %v948 = vsel %vm925, %v924, 0
        %vm950 = vcmask 1041408
        %v952 = vsel %vm950, %v525, 0
        %v955 = vsel %vm950, %v526, 0
        %957 = vmatprep.subr.bf16.mxu0 0
        %958 = vmatpush1.bf16.msra.mxu0 0
        %959 = vmatprep.subr.bf16.mxu0 0
        %960 = vmatpush1.bf16.msra.mxu0 0
        %961 = vmatprep.subr.bf16.mxu0 0
        %962 = vmatpush1.bf16.msra.mxu0 0
        %963 = vmatprep.subr.bf16.mxu0 0
        %964 = vmatpush1.bf16.msra.mxu0 0
        %965 = vmatprep.subr.bf16.mxu0 0
        %966 = vmatpush1.bf16.msra.mxu0 0
        %967 = vmatprep.subr.bf16.mxu0 %v955
        %968 = vmatpush1.bf16.msra.mxu0 %v952
        %969 = vmatprep.subr.bf16.mxu0 %v524
        %970 = vmatpush1.bf16.msra.mxu0 %v523
        %971 = vmatprep.subr.bf16.mxu0 %v522
        %972 = vmatpush1.bf16.msra.mxu0 %v521
        %973 = vmatprep.subr.bf16.mxu0 0
        %974 = vmatpush2.bf16.msra.mxu0 0
        %975 = vmatprep.subr.bf16.mxu0 0
        %976 = vmatpush2.bf16.msra.mxu0 0
        %977 = vmatprep.subr.bf16.mxu0 0
        %978 = vmatpush2.bf16.msra.mxu0 0
        %979 = vmatprep.subr.bf16.mxu0 0
        %980 = vmatpush2.bf16.msra.mxu0 0
        %981 = vmatprep.subr.bf16.mxu0 0
        %982 = vmatpush2.bf16.msra.mxu0 0
        %983 = vmatprep.subr.bf16.mxu0 0
        %984 = vmatpush2.bf16.msra.mxu0 0
        %985 = vmatprep.subr.bf16.mxu0 0
        %986 = vmatpush2.bf16.msra.mxu0 0
        %987 = vmatprep.subr.bf16.mxu0 0
        %988 = vmatpush2.bf16.msra.mxu0 0
        %989 = vmatprep.mubr.bf16.mxu0 0
        %990 = vmatmul.mubr.bf16.gmra.mxu0 %v927
        %v991 = vpop.f32.mrf.mxu0
        %v992 = vadd.f32 0.0, %v991
        %v993 = vpop.f32.mrf.mxu0
        %v994 = vadd.f32 0.0, %v993
        %v995 = vpop.f32.mrf.mxu0
        %v996 = vadd.f32 0.0, %v995
        %v997 = vpop.f32.mrf.mxu0
        %v998 = vadd.f32 0.0, %v997
        %999 = vmatprep.mubr.bf16.mxu0 0
        %1000 = vmatmul.mubr.bf16.gmra.mxu0 %v930
        %v1001 = vpop.f32.mrf.mxu0
        %v1002 = vadd.f32 0.0, %v1001
        %v1003 = vpop.f32.mrf.mxu0
        %v1004 = vadd.f32 0.0, %v1003
        %v1005 = vpop.f32.mrf.mxu0
        %v1006 = vadd.f32 0.0, %v1005
        %v1007 = vpop.f32.mrf.mxu0
        %v1008 = vadd.f32 0.0, %v1007
        %1009 = vmatprep.mubr.bf16.mxu0 0
        %1010 = vmatmul.mubr.bf16.gmra.mxu0 %v933
        %v1011 = vpop.f32.mrf.mxu0
        %v1012 = vadd.f32 0.0, %v1011
        %v1013 = vpop.f32.mrf.mxu0
        %v1014 = vadd.f32 0.0, %v1013
        %v1015 = vpop.f32.mrf.mxu0
        %v1016 = vadd.f32 0.0, %v1015
        %v1017 = vpop.f32.mrf.mxu0
        %v1018 = vadd.f32 0.0, %v1017
        %1019 = vmatprep.mubr.bf16.mxu0 0
        %1020 = vmatmul.mubr.bf16.gmra.mxu0 %v936
        %v1021 = vpop.f32.mrf.mxu0
        %v1022 = vadd.f32 0.0, %v1021
        %v1023 = vpop.f32.mrf.mxu0
        %v1024 = vadd.f32 0.0, %v1023
        %v1025 = vpop.f32.mrf.mxu0
        %v1026 = vadd.f32 0.0, %v1025
        %v1027 = vpop.f32.mrf.mxu0
        %v1028 = vadd.f32 0.0, %v1027
        %1029 = vmatprep.mubr.bf16.mxu0 0
        %1030 = vmatmul.mubr.bf16.gmra.mxu0 %v939
        %v1031 = vpop.f32.mrf.mxu0
        %v1032 = vadd.f32 0.0, %v1031
        %v1033 = vpop.f32.mrf.mxu0
        %v1034 = vadd.f32 0.0, %v1033
        %v1035 = vpop.f32.mrf.mxu0
        %v1036 = vadd.f32 0.0, %v1035
        %v1037 = vpop.f32.mrf.mxu0
        %v1038 = vadd.f32 0.0, %v1037
        %1039 = vmatprep.mubr.bf16.mxu0 0
        %1040 = vmatmul.mubr.bf16.gmra.mxu0 %v942
        %v1041 = vpop.f32.mrf.mxu0
        %v1042 = vadd.f32 0.0, %v1041
        %v1043 = vpop.f32.mrf.mxu0
        %v1044 = vadd.f32 0.0, %v1043
        %v1045 = vpop.f32.mrf.mxu0
        %v1046 = vadd.f32 0.0, %v1045
        %v1047 = vpop.f32.mrf.mxu0
        %v1048 = vadd.f32 0.0, %v1047
        %1049 = vmatprep.mubr.bf16.mxu0 0
        %1050 = vmatmul.mubr.bf16.gmra.mxu0 %v945
        %v1051 = vpop.f32.mrf.mxu0
        %v1052 = vadd.f32 0.0, %v1051
        %v1053 = vpop.f32.mrf.mxu0
        %v1054 = vadd.f32 0.0, %v1053
        %v1055 = vpop.f32.mrf.mxu0
        %v1056 = vadd.f32 0.0, %v1055
        %v1057 = vpop.f32.mrf.mxu0
        %v1058 = vadd.f32 0.0, %v1057
        %1059 = vmatprep.mubr.bf16.mxu0 0
        %1060 = vmatmul.mubr.bf16.gmra.mxu0 %v948
        %v1061 = vpop.f32.mrf.mxu0
        %v1062 = vadd.f32 0.0, %v1061
        %v1063 = vpop.f32.mrf.mxu0
        %v1064 = vadd.f32 0.0, %v1063
        %v1065 = vpop.f32.mrf.mxu0
        %v1066 = vadd.f32 0.0, %v1065
        %v1067 = vpop.f32.mrf.mxu0
        %v1068 = vadd.f32 0.0, %v1067
        %1069 = vdwg.mxu0
        %1071 = vset.pattern.permute.xlu0 0
        %1072 = vperm.xlu0 %1071, %v431
        %v1073 = vpop.permute.xlu0 %1072
        %1076 = vset.pattern.permute.xlu0 0
        %1077 = vperm.xlu0 %1076, %v432
        %v1078 = vpop.permute.xlu0 %1077
        %1081 = vset.pattern.permute.xlu0 0
        %1082 = vperm.xlu0 %1081, %v433
        %v1083 = vpop.permute.xlu0 %1082
        %1086 = vset.pattern.permute.xlu0 0
        %1087 = vperm.xlu0 %1086, %v434
        %v1088 = vpop.permute.xlu0 %1087
        %1091 = vset.pattern.permute.xlu0 0
        %1092 = vperm.xlu0 %1091, %v435
        %v1093 = vpop.permute.xlu0 %1092
        %1096 = vset.pattern.permute.xlu0 0
        %1097 = vperm.xlu0 %1096, %v436
        %v1098 = vpop.permute.xlu0 %1097
        %1101 = vset.pattern.permute.xlu0 0
        %1102 = vperm.xlu0 %1101, %v437
        %v1103 = vpop.permute.xlu0 %1102
        %1106 = vset.pattern.permute.xlu0 0
        %1107 = vperm.xlu0 %1106, %v438
        %v1108 = vpop.permute.xlu0 %1107
        %1111 = vset.pattern.permute.xlu0 0
        %1112 = vperm.xlu0 %1111, %v439
        %v1113 = vpop.permute.xlu0 %1112
        %1116 = vset.pattern.permute.xlu0 0
        %1117 = vperm.xlu0 %1116, %v440
        %v1118 = vpop.permute.xlu0 %1117
        %1121 = vset.pattern.permute.xlu0 0
        %1122 = vperm.xlu0 %1121, %v441
        %v1123 = vpop.permute.xlu0 %1122
        %1126 = vset.pattern.permute.xlu0 0
        %1127 = vperm.xlu0 %1126, %v442
        %v1128 = vpop.permute.xlu0 %1127
        %1131 = vset.pattern.permute.xlu0 0
        %1132 = vperm.xlu0 %1131, %v443
        %v1133 = vpop.permute.xlu0 %1132
        %1136 = vset.pattern.permute.xlu0 0
        %1137 = vperm.xlu0 %1136, %v444
        %v1138 = vpop.permute.xlu0 %1137
        %1141 = vset.pattern.permute.xlu0 0
        %1142 = vperm.xlu0 %1141, %v445
        %v1143 = vpop.permute.xlu0 %1142
        %1146 = vset.pattern.permute.xlu0 0
        %1147 = vperm.xlu0 %1146, %v446
        %v1148 = vpop.permute.xlu0 %1147
        %v1150 = vadd.f32 %v1073, %v992
        %v1151 = vadd.f32 %v1073, %v994
        %v1152 = vadd.f32 %v1078, %v996
        %v1153 = vadd.f32 %v1078, %v998
        %v1154 = vadd.f32 %v1083, %v1002
        %v1155 = vadd.f32 %v1083, %v1004
        %v1156 = vadd.f32 %v1088, %v1006
        %v1157 = vadd.f32 %v1088, %v1008
        %v1158 = vadd.f32 %v1093, %v1012
        %v1159 = vadd.f32 %v1093, %v1014
        %v1160 = vadd.f32 %v1098, %v1016
        %v1161 = vadd.f32 %v1098, %v1018
        %v1162 = vadd.f32 %v1103, %v1022
        %v1163 = vadd.f32 %v1103, %v1024
        %v1164 = vadd.f32 %v1108, %v1026
        %v1165 = vadd.f32 %v1108, %v1028
        %v1166 = vadd.f32 %v1113, %v1032
        %v1167 = vadd.f32 %v1113, %v1034
        %v1168 = vadd.f32 %v1118, %v1036
        %v1169 = vadd.f32 %v1118, %v1038
        %v1170 = vadd.f32 %v1123, %v1042
        %v1171 = vadd.f32 %v1123, %v1044
        %v1172 = vadd.f32 %v1128, %v1046
        %v1173 = vadd.f32 %v1128, %v1048
        %v1174 = vadd.f32 %v1133, %v1052
        %v1175 = vadd.f32 %v1133, %v1054
        %v1176 = vadd.f32 %v1138, %v1056
        %v1177 = vadd.f32 %v1138, %v1058
        %v1178 = vadd.f32 %v1143, %v1062
        %v1179 = vadd.f32 %v1143, %v1064
        %v1180 = vadd.f32 %v1148, %v1066
        %v1181 = vadd.f32 %v1148, %v1068
        %v1198 = vunpack.c.l.b16 %v303
        %v1199 = vunpack.c.l.b16 %v304
        %v1200 = vunpack.c.l.b16 %v305
        %v1201 = vunpack.c.l.b16 %v306
        %v1202 = vunpack.c.l.b16 %v307
        %v1203 = vunpack.c.l.b16 %v308
        %v1204 = vunpack.c.l.b16 %v309
        %v1205 = vunpack.c.l.b16 %v310
        %v1206 = vunpack.c.l.b16 %v311
        %v1207 = vunpack.c.l.b16 %v312
        %v1208 = vunpack.c.l.b16 %v313
        %v1209 = vunpack.c.l.b16 %v314
        %v1210 = vunpack.c.l.b16 %v315
        %v1211 = vunpack.c.l.b16 %v316
        %v1212 = vunpack.c.l.b16 %v317
        %v1213 = vunpack.c.l.b16 %v318
        %v1214 = vpack.c.b16 %v1199, %v1198
        %v1215 = vpack.c.b16 %v1201, %v1200
        %v1216 = vpack.c.b16 %v1203, %v1202
        %v1217 = vpack.c.b16 %v1205, %v1204
        %v1218 = vpack.c.b16 %v1207, %v1206
        %v1219 = vpack.c.b16 %v1209, %v1208
        %v1220 = vpack.c.b16 %v1211, %v1210
        %v1221 = vpack.c.b16 %v1213, %v1212
        %v1223 = vsel %vm925, %v1214, 0
        %v1226 = vsel %vm925, %v1215, 0
        %v1229 = vsel %vm925, %v1216, 0
        %v1232 = vsel %vm925, %v1217, 0
        %v1235 = vsel %vm925, %v1218, 0
        %v1238 = vsel %vm925, %v1219, 0
        %v1241 = vsel %vm925, %v1220, 0
        %v1244 = vsel %vm925, %v1221, 0
        %v1247 = vsel %vm950, %v577, 0
        %v1250 = vsel %vm950, %v578, 0
        %1252 = vmatprep.subr.bf16.mxu0 0
        %1253 = vmatpush1.bf16.msra.mxu0 0
        %1254 = vmatprep.subr.bf16.mxu0 0
        %1255 = vmatpush1.bf16.msra.mxu0 0
        %1256 = vmatprep.subr.bf16.mxu0 0
        %1257 = vmatpush1.bf16.msra.mxu0 0
        %1258 = vmatprep.subr.bf16.mxu0 0
        %1259 = vmatpush1.bf16.msra.mxu0 0
        %1260 = vmatprep.subr.bf16.mxu0 0
        %1261 = vmatpush1.bf16.msra.mxu0 0
        %1262 = vmatprep.subr.bf16.mxu0 %v1250
        %1263 = vmatpush1.bf16.msra.mxu0 %v1247
        %1264 = vmatprep.subr.bf16.mxu0 %v576
        %1265 = vmatpush1.bf16.msra.mxu0 %v575
        %1266 = vmatprep.subr.bf16.mxu0 %v574
        %1267 = vmatpush1.bf16.msra.mxu0 %v573
        %1268 = vmatprep.subr.bf16.mxu0 0
        %1269 = vmatpush2.bf16.msra.mxu0 0
        %1270 = vmatprep.subr.bf16.mxu0 0
        %1271 = vmatpush2.bf16.msra.mxu0 0
        %1272 = vmatprep.subr.bf16.mxu0 0
        %1273 = vmatpush2.bf16.msra.mxu0 0
        %1274 = vmatprep.subr.bf16.mxu0 0
        %1275 = vmatpush2.bf16.msra.mxu0 0
        %1276 = vmatprep.subr.bf16.mxu0 0
        %1277 = vmatpush2.bf16.msra.mxu0 0
        %1278 = vmatprep.subr.bf16.mxu0 0
        %1279 = vmatpush2.bf16.msra.mxu0 0
        %1280 = vmatprep.subr.bf16.mxu0 0
        %1281 = vmatpush2.bf16.msra.mxu0 0
        %1282 = vmatprep.subr.bf16.mxu0 0
        %1283 = vmatpush2.bf16.msra.mxu0 0
        %1284 = vmatprep.mubr.bf16.mxu0 0
        %1285 = vmatmul.mubr.bf16.gmra.mxu0 %v1223
        %v1286 = vpop.f32.mrf.mxu0
        %v1287 = vadd.f32 0.0, %v1286
        %v1288 = vpop.f32.mrf.mxu0
        %v1289 = vadd.f32 0.0, %v1288
        %v1290 = vpop.f32.mrf.mxu0
        %v1291 = vadd.f32 0.0, %v1290
        %v1292 = vpop.f32.mrf.mxu0
        %v1293 = vadd.f32 0.0, %v1292
        %1294 = vmatprep.mubr.bf16.mxu0 0
        %1295 = vmatmul.mubr.bf16.gmra.mxu0 %v1226
        %v1296 = vpop.f32.mrf.mxu0
        %v1297 = vadd.f32 0.0, %v1296
        %v1298 = vpop.f32.mrf.mxu0
        %v1299 = vadd.f32 0.0, %v1298
        %v1300 = vpop.f32.mrf.mxu0
        %v1301 = vadd.f32 0.0, %v1300
        %v1302 = vpop.f32.mrf.mxu0
        %v1303 = vadd.f32 0.0, %v1302
        %1304 = vmatprep.mubr.bf16.mxu0 0
        %1305 = vmatmul.mubr.bf16.gmra.mxu0 %v1229
        %v1306 = vpop.f32.mrf.mxu0
        %v1307 = vadd.f32 0.0, %v1306
        %v1308 = vpop.f32.mrf.mxu0
        %v1309 = vadd.f32 0.0, %v1308
        %v1310 = vpop.f32.mrf.mxu0
        %v1311 = vadd.f32 0.0, %v1310
        %v1312 = vpop.f32.mrf.mxu0
        %v1313 = vadd.f32 0.0, %v1312
        %1314 = vmatprep.mubr.bf16.mxu0 0
        %1315 = vmatmul.mubr.bf16.gmra.mxu0 %v1232
        %v1316 = vpop.f32.mrf.mxu0
        %v1317 = vadd.f32 0.0, %v1316
        %v1318 = vpop.f32.mrf.mxu0
        %v1319 = vadd.f32 0.0, %v1318
        %v1320 = vpop.f32.mrf.mxu0
        %v1321 = vadd.f32 0.0, %v1320
        %v1322 = vpop.f32.mrf.mxu0
        %v1323 = vadd.f32 0.0, %v1322
        %1324 = vmatprep.mubr.bf16.mxu0 0
        %1325 = vmatmul.mubr.bf16.gmra.mxu0 %v1235
        %v1326 = vpop.f32.mrf.mxu0
        %v1327 = vadd.f32 0.0, %v1326
        %v1328 = vpop.f32.mrf.mxu0
        %v1329 = vadd.f32 0.0, %v1328
        %v1330 = vpop.f32.mrf.mxu0
        %v1331 = vadd.f32 0.0, %v1330
        %v1332 = vpop.f32.mrf.mxu0
        %v1333 = vadd.f32 0.0, %v1332
        %1334 = vmatprep.mubr.bf16.mxu0 0
        %1335 = vmatmul.mubr.bf16.gmra.mxu0 %v1238
        %v1336 = vpop.f32.mrf.mxu0
        %v1337 = vadd.f32 0.0, %v1336
        %v1338 = vpop.f32.mrf.mxu0
        %v1339 = vadd.f32 0.0, %v1338
        %v1340 = vpop.f32.mrf.mxu0
        %v1341 = vadd.f32 0.0, %v1340
        %v1342 = vpop.f32.mrf.mxu0
        %v1343 = vadd.f32 0.0, %v1342
        %1344 = vmatprep.mubr.bf16.mxu0 0
        %1345 = vmatmul.mubr.bf16.gmra.mxu0 %v1241
        %v1346 = vpop.f32.mrf.mxu0
        %v1347 = vadd.f32 0.0, %v1346
        %v1348 = vpop.f32.mrf.mxu0
        %v1349 = vadd.f32 0.0, %v1348
        %v1350 = vpop.f32.mrf.mxu0
        %v1351 = vadd.f32 0.0, %v1350
        %v1352 = vpop.f32.mrf.mxu0
        %v1353 = vadd.f32 0.0, %v1352
        %1354 = vmatprep.mubr.bf16.mxu0 0
        %1355 = vmatmul.mubr.bf16.gmra.mxu0 %v1244
        %v1356 = vpop.f32.mrf.mxu0
        %v1357 = vadd.f32 0.0, %v1356
        %v1358 = vpop.f32.mrf.mxu0
        %v1359 = vadd.f32 0.0, %v1358
        %v1360 = vpop.f32.mrf.mxu0
        %v1361 = vadd.f32 0.0, %v1360
        %v1362 = vpop.f32.mrf.mxu0
        %v1363 = vadd.f32 0.0, %v1362
        %1364 = vdwg.mxu0
        %v1365 = vadd.f32 %v1150, %v1287
        %v1366 = vadd.f32 %v1151, %v1289
        %v1367 = vadd.f32 %v1152, %v1291
        %v1368 = vadd.f32 %v1153, %v1293
        %v1369 = vadd.f32 %v1154, %v1297
        %v1370 = vadd.f32 %v1155, %v1299
        %v1371 = vadd.f32 %v1156, %v1301
        %v1372 = vadd.f32 %v1157, %v1303
        %v1373 = vadd.f32 %v1158, %v1307
        %v1374 = vadd.f32 %v1159, %v1309
        %v1375 = vadd.f32 %v1160, %v1311
        %v1376 = vadd.f32 %v1161, %v1313
        %v1377 = vadd.f32 %v1162, %v1317
        %v1378 = vadd.f32 %v1163, %v1319
        %v1379 = vadd.f32 %v1164, %v1321
        %v1380 = vadd.f32 %v1165, %v1323
        %v1381 = vadd.f32 %v1166, %v1327
        %v1382 = vadd.f32 %v1167, %v1329
        %v1383 = vadd.f32 %v1168, %v1331
        %v1384 = vadd.f32 %v1169, %v1333
        %v1385 = vadd.f32 %v1170, %v1337
        %v1386 = vadd.f32 %v1171, %v1339
        %v1387 = vadd.f32 %v1172, %v1341
        %v1388 = vadd.f32 %v1173, %v1343
        %v1389 = vadd.f32 %v1174, %v1347
        %v1390 = vadd.f32 %v1175, %v1349
        %v1391 = vadd.f32 %v1176, %v1351
        %v1392 = vadd.f32 %v1177, %v1353
        %v1393 = vadd.f32 %v1178, %v1357
        %v1394 = vadd.f32 %v1179, %v1359
        %v1395 = vadd.f32 %v1180, %v1361
        %v1396 = vadd.f32 %v1181, %v1363
        %v1413 = vunpack.c.l.b16 %v319
        %v1414 = vunpack.c.l.b16 %v320
        %v1415 = vunpack.c.l.b16 %v321
        %v1416 = vunpack.c.l.b16 %v322
        %v1417 = vunpack.c.l.b16 %v323
        %v1418 = vunpack.c.l.b16 %v324
        %v1419 = vunpack.c.l.b16 %v325
        %v1420 = vunpack.c.l.b16 %v326
        %v1421 = vunpack.c.l.b16 %v327
        %v1422 = vunpack.c.l.b16 %v328
        %v1423 = vunpack.c.l.b16 %v329
        %v1424 = vunpack.c.l.b16 %v330
        %v1425 = vunpack.c.l.b16 %v331
        %v1426 = vunpack.c.l.b16 %v332
        %v1427 = vunpack.c.l.b16 %v333
        %v1428 = vunpack.c.l.b16 %v334
        %v1429 = vpack.c.b16 %v1414, %v1413
        %v1430 = vpack.c.b16 %v1416, %v1415
        %v1431 = vpack.c.b16 %v1418, %v1417
        %v1432 = vpack.c.b16 %v1420, %v1419
        %v1433 = vpack.c.b16 %v1422, %v1421
        %v1434 = vpack.c.b16 %v1424, %v1423
        %v1435 = vpack.c.b16 %v1426, %v1425
        %v1436 = vpack.c.b16 %v1428, %v1427
        %v1438 = vsel %vm925, %v1429, 0
        %v1441 = vsel %vm925, %v1430, 0
        %v1444 = vsel %vm925, %v1431, 0
        %v1447 = vsel %vm925, %v1432, 0
        %v1450 = vsel %vm925, %v1433, 0
        %v1453 = vsel %vm925, %v1434, 0
        %v1456 = vsel %vm925, %v1435, 0
        %v1459 = vsel %vm925, %v1436, 0
        %v1462 = vsel %vm950, %v623, 0
        %v1465 = vsel %vm950, %v624, 0
        %1467 = vmatprep.subr.bf16.mxu0 0
        %1468 = vmatpush1.bf16.msra.mxu0 0
        %1469 = vmatprep.subr.bf16.mxu0 0
        %1470 = vmatpush1.bf16.msra.mxu0 0
        %1471 = vmatprep.subr.bf16.mxu0 0
        %1472 = vmatpush1.bf16.msra.mxu0 0
        %1473 = vmatprep.subr.bf16.mxu0 0
        %1474 = vmatpush1.bf16.msra.mxu0 0
        %1475 = vmatprep.subr.bf16.mxu0 0
        %1476 = vmatpush1.bf16.msra.mxu0 0
        %1477 = vmatprep.subr.bf16.mxu0 %v1465
        %1478 = vmatpush1.bf16.msra.mxu0 %v1462
        %1479 = vmatprep.subr.bf16.mxu0 %v622
        %1480 = vmatpush1.bf16.msra.mxu0 %v621
        %1481 = vmatprep.subr.bf16.mxu0 %v620
        %1482 = vmatpush1.bf16.msra.mxu0 %v619
        %1483 = vmatprep.subr.bf16.mxu0 0
        %1484 = vmatpush2.bf16.msra.mxu0 0
        %1485 = vmatprep.subr.bf16.mxu0 0
        %1486 = vmatpush2.bf16.msra.mxu0 0
        %1487 = vmatprep.subr.bf16.mxu0 0
        %1488 = vmatpush2.bf16.msra.mxu0 0
        %1489 = vmatprep.subr.bf16.mxu0 0
        %1490 = vmatpush2.bf16.msra.mxu0 0
        %1491 = vmatprep.subr.bf16.mxu0 0
        %1492 = vmatpush2.bf16.msra.mxu0 0
        %1493 = vmatprep.subr.bf16.mxu0 0
        %1494 = vmatpush2.bf16.msra.mxu0 0
        %1495 = vmatprep.subr.bf16.mxu0 0
        %1496 = vmatpush2.bf16.msra.mxu0 0
        %1497 = vmatprep.subr.bf16.mxu0 0
        %1498 = vmatpush2.bf16.msra.mxu0 0
        %1499 = vmatprep.mubr.bf16.mxu0 0
        %1500 = vmatmul.mubr.bf16.gmra.mxu0 %v1438
        %v1501 = vpop.f32.mrf.mxu0
        %v1502 = vadd.f32 0.0, %v1501
        %v1503 = vpop.f32.mrf.mxu0
        %v1504 = vadd.f32 0.0, %v1503
        %v1505 = vpop.f32.mrf.mxu0
        %v1506 = vadd.f32 0.0, %v1505
        %v1507 = vpop.f32.mrf.mxu0
        %v1508 = vadd.f32 0.0, %v1507
        %1509 = vmatprep.mubr.bf16.mxu0 0
        %1510 = vmatmul.mubr.bf16.gmra.mxu0 %v1441
        %v1511 = vpop.f32.mrf.mxu0
        %v1512 = vadd.f32 0.0, %v1511
        %v1513 = vpop.f32.mrf.mxu0
        %v1514 = vadd.f32 0.0, %v1513
        %v1515 = vpop.f32.mrf.mxu0
        %v1516 = vadd.f32 0.0, %v1515
        %v1517 = vpop.f32.mrf.mxu0
        %v1518 = vadd.f32 0.0, %v1517
        %1519 = vmatprep.mubr.bf16.mxu0 0
        %1520 = vmatmul.mubr.bf16.gmra.mxu0 %v1444
        %v1521 = vpop.f32.mrf.mxu0
        %v1522 = vadd.f32 0.0, %v1521
        %v1523 = vpop.f32.mrf.mxu0
        %v1524 = vadd.f32 0.0, %v1523
        %v1525 = vpop.f32.mrf.mxu0
        %v1526 = vadd.f32 0.0, %v1525
        %v1527 = vpop.f32.mrf.mxu0
        %v1528 = vadd.f32 0.0, %v1527
        %1529 = vmatprep.mubr.bf16.mxu0 0
        %1530 = vmatmul.mubr.bf16.gmra.mxu0 %v1447
        %v1531 = vpop.f32.mrf.mxu0
        %v1532 = vadd.f32 0.0, %v1531
        %v1533 = vpop.f32.mrf.mxu0
        %v1534 = vadd.f32 0.0, %v1533
        %v1535 = vpop.f32.mrf.mxu0
        %v1536 = vadd.f32 0.0, %v1535
        %v1537 = vpop.f32.mrf.mxu0
        %v1538 = vadd.f32 0.0, %v1537
        %1539 = vmatprep.mubr.bf16.mxu0 0
        %1540 = vmatmul.mubr.bf16.gmra.mxu0 %v1450
        %v1541 = vpop.f32.mrf.mxu0
        %v1542 = vadd.f32 0.0, %v1541
        %v1543 = vpop.f32.mrf.mxu0
        %v1544 = vadd.f32 0.0, %v1543
        %v1545 = vpop.f32.mrf.mxu0
        %v1546 = vadd.f32 0.0, %v1545
        %v1547 = vpop.f32.mrf.mxu0
        %v1548 = vadd.f32 0.0, %v1547
        %1549 = vmatprep.mubr.bf16.mxu0 0
        %1550 = vmatmul.mubr.bf16.gmra.mxu0 %v1453
        %v1551 = vpop.f32.mrf.mxu0
        %v1552 = vadd.f32 0.0, %v1551
        %v1553 = vpop.f32.mrf.mxu0
        %v1554 = vadd.f32 0.0, %v1553
        %v1555 = vpop.f32.mrf.mxu0
        %v1556 = vadd.f32 0.0, %v1555
        %v1557 = vpop.f32.mrf.mxu0
        %v1558 = vadd.f32 0.0, %v1557
        %1559 = vmatprep.mubr.bf16.mxu0 0
        %1560 = vmatmul.mubr.bf16.gmra.mxu0 %v1456
        %v1561 = vpop.f32.mrf.mxu0
        %v1562 = vadd.f32 0.0, %v1561
        %v1563 = vpop.f32.mrf.mxu0
        %v1564 = vadd.f32 0.0, %v1563
        %v1565 = vpop.f32.mrf.mxu0
        %v1566 = vadd.f32 0.0, %v1565
        %v1567 = vpop.f32.mrf.mxu0
        %v1568 = vadd.f32 0.0, %v1567
        %1569 = vmatprep.mubr.bf16.mxu0 0
        %1570 = vmatmul.mubr.bf16.gmra.mxu0 %v1459
        %v1571 = vpop.f32.mrf.mxu0
        %v1572 = vadd.f32 0.0, %v1571
        %v1573 = vpop.f32.mrf.mxu0
        %v1574 = vadd.f32 0.0, %v1573
        %v1575 = vpop.f32.mrf.mxu0
        %v1576 = vadd.f32 0.0, %v1575
        %v1577 = vpop.f32.mrf.mxu0
        %v1578 = vadd.f32 0.0, %v1577
        %1579 = vdwg.mxu0
        %v1580 = vadd.f32 %v1365, %v1502
        %v1581 = vadd.f32 %v1366, %v1504
        %v1582 = vadd.f32 %v1367, %v1506
        %v1583 = vadd.f32 %v1368, %v1508
        %v1584 = vadd.f32 %v1369, %v1512
        %v1585 = vadd.f32 %v1370, %v1514
        %v1586 = vadd.f32 %v1371, %v1516
        %v1587 = vadd.f32 %v1372, %v1518
        %v1588 = vadd.f32 %v1373, %v1522
        %v1589 = vadd.f32 %v1374, %v1524
        %v1590 = vadd.f32 %v1375, %v1526
        %v1591 = vadd.f32 %v1376, %v1528
        %v1592 = vadd.f32 %v1377, %v1532
        %v1593 = vadd.f32 %v1378, %v1534
        %v1594 = vadd.f32 %v1379, %v1536
        %v1595 = vadd.f32 %v1380, %v1538
        %v1596 = vadd.f32 %v1381, %v1542
        %v1597 = vadd.f32 %v1382, %v1544
        %v1598 = vadd.f32 %v1383, %v1546
        %v1599 = vadd.f32 %v1384, %v1548
        %v1600 = vadd.f32 %v1385, %v1552
        %v1601 = vadd.f32 %v1386, %v1554
        %v1602 = vadd.f32 %v1387, %v1556
        %v1603 = vadd.f32 %v1388, %v1558
        %v1604 = vadd.f32 %v1389, %v1562
        %v1605 = vadd.f32 %v1390, %v1564
        %v1606 = vadd.f32 %v1391, %v1566
        %v1607 = vadd.f32 %v1392, %v1568
        %v1608 = vadd.f32 %v1393, %v1572
        %v1609 = vadd.f32 %v1394, %v1574
        %v1610 = vadd.f32 %v1395, %v1576
        %v1611 = vadd.f32 %v1396, %v1578
        %v1628 = vunpack.c.l.b16 %v335
        %v1629 = vunpack.c.l.b16 %v336
        %v1630 = vunpack.c.l.b16 %v337
        %v1631 = vunpack.c.l.b16 %v338
        %v1632 = vunpack.c.l.b16 %v339
        %v1633 = vunpack.c.l.b16 %v340
        %v1634 = vunpack.c.l.b16 %v341
        %v1635 = vunpack.c.l.b16 %v342
        %v1636 = vunpack.c.l.b16 %v343
        %v1637 = vunpack.c.l.b16 %v344
        %v1638 = vunpack.c.l.b16 %v345
        %v1639 = vunpack.c.l.b16 %v346
        %v1640 = vunpack.c.l.b16 %v347
        %v1641 = vunpack.c.l.b16 %v348
        %v1642 = vunpack.c.l.b16 %v349
        %v1643 = vunpack.c.l.b16 %v350
        %v1644 = vpack.c.b16 %v1629, %v1628
        %v1645 = vpack.c.b16 %v1631, %v1630
        %v1646 = vpack.c.b16 %v1633, %v1632
        %v1647 = vpack.c.b16 %v1635, %v1634
        %v1648 = vpack.c.b16 %v1637, %v1636
        %v1649 = vpack.c.b16 %v1639, %v1638
        %v1650 = vpack.c.b16 %v1641, %v1640
        %v1651 = vpack.c.b16 %v1643, %v1642
        %v1653 = vsel %vm925, %v1644, 0
        %v1656 = vsel %vm925, %v1645, 0
        %v1659 = vsel %vm925, %v1646, 0
        %v1662 = vsel %vm925, %v1647, 0
        %v1665 = vsel %vm925, %v1648, 0
        %v1668 = vsel %vm925, %v1649, 0
        %v1671 = vsel %vm925, %v1650, 0
        %v1674 = vsel %vm925, %v1651, 0
        %v1677 = vsel %vm950, %v669, 0
        %v1680 = vsel %vm950, %v670, 0
        %1682 = vmatprep.subr.bf16.mxu0 0
        %1683 = vmatpush1.bf16.msra.mxu0 0
        %1684 = vmatprep.subr.bf16.mxu0 0
        %1685 = vmatpush1.bf16.msra.mxu0 0
        %1686 = vmatprep.subr.bf16.mxu0 0
        %1687 = vmatpush1.bf16.msra.mxu0 0
        %1688 = vmatprep.subr.bf16.mxu0 0
        %1689 = vmatpush1.bf16.msra.mxu0 0
        %1690 = vmatprep.subr.bf16.mxu0 0
        %1691 = vmatpush1.bf16.msra.mxu0 0
        %1692 = vmatprep.subr.bf16.mxu0 %v1680
        %1693 = vmatpush1.bf16.msra.mxu0 %v1677
        %1694 = vmatprep.subr.bf16.mxu0 %v668
        %1695 = vmatpush1.bf16.msra.mxu0 %v667
        %1696 = vmatprep.subr.bf16.mxu0 %v666
        %1697 = vmatpush1.bf16.msra.mxu0 %v665
        %1698 = vmatprep.subr.bf16.mxu0 0
        %1699 = vmatpush2.bf16.msra.mxu0 0
        %1700 = vmatprep.subr.bf16.mxu0 0
        %1701 = vmatpush2.bf16.msra.mxu0 0
        %1702 = vmatprep.subr.bf16.mxu0 0
        %1703 = vmatpush2.bf16.msra.mxu0 0
        %1704 = vmatprep.subr.bf16.mxu0 0
        %1705 = vmatpush2.bf16.msra.mxu0 0
        %1706 = vmatprep.subr.bf16.mxu0 0
        %1707 = vmatpush2.bf16.msra.mxu0 0
        %1708 = vmatprep.subr.bf16.mxu0 0
        %1709 = vmatpush2.bf16.msra.mxu0 0
        %1710 = vmatprep.subr.bf16.mxu0 0
        %1711 = vmatpush2.bf16.msra.mxu0 0
        %1712 = vmatprep.subr.bf16.mxu0 0
        %1713 = vmatpush2.bf16.msra.mxu0 0
        %1714 = vmatprep.mubr.bf16.mxu0 0
        %1715 = vmatmul.mubr.bf16.gmra.mxu0 %v1653
        %v1716 = vpop.f32.mrf.mxu0
        %v1717 = vadd.f32 0.0, %v1716
        %v1718 = vpop.f32.mrf.mxu0
        %v1719 = vadd.f32 0.0, %v1718
        %v1720 = vpop.f32.mrf.mxu0
        %v1721 = vadd.f32 0.0, %v1720
        %v1722 = vpop.f32.mrf.mxu0
        %v1723 = vadd.f32 0.0, %v1722
        %1724 = vmatprep.mubr.bf16.mxu0 0
        %1725 = vmatmul.mubr.bf16.gmra.mxu0 %v1656
        %v1726 = vpop.f32.mrf.mxu0
        %v1727 = vadd.f32 0.0, %v1726
        %v1728 = vpop.f32.mrf.mxu0
        %v1729 = vadd.f32 0.0, %v1728
        %v1730 = vpop.f32.mrf.mxu0
        %v1731 = vadd.f32 0.0, %v1730
        %v1732 = vpop.f32.mrf.mxu0
        %v1733 = vadd.f32 0.0, %v1732
        %1734 = vmatprep.mubr.bf16.mxu0 0
        %1735 = vmatmul.mubr.bf16.gmra.mxu0 %v1659
        %v1736 = vpop.f32.mrf.mxu0
        %v1737 = vadd.f32 0.0, %v1736
        %v1738 = vpop.f32.mrf.mxu0
        %v1739 = vadd.f32 0.0, %v1738
        %v1740 = vpop.f32.mrf.mxu0
        %v1741 = vadd.f32 0.0, %v1740
        %v1742 = vpop.f32.mrf.mxu0
        %v1743 = vadd.f32 0.0, %v1742
        %1744 = vmatprep.mubr.bf16.mxu0 0
        %1745 = vmatmul.mubr.bf16.gmra.mxu0 %v1662
        %v1746 = vpop.f32.mrf.mxu0
        %v1747 = vadd.f32 0.0, %v1746
        %v1748 = vpop.f32.mrf.mxu0
        %v1749 = vadd.f32 0.0, %v1748
        %v1750 = vpop.f32.mrf.mxu0
        %v1751 = vadd.f32 0.0, %v1750
        %v1752 = vpop.f32.mrf.mxu0
        %v1753 = vadd.f32 0.0, %v1752
        %1754 = vmatprep.mubr.bf16.mxu0 0
        %1755 = vmatmul.mubr.bf16.gmra.mxu0 %v1665
        %v1756 = vpop.f32.mrf.mxu0
        %v1757 = vadd.f32 0.0, %v1756
        %v1758 = vpop.f32.mrf.mxu0
        %v1759 = vadd.f32 0.0, %v1758
        %v1760 = vpop.f32.mrf.mxu0
        %v1761 = vadd.f32 0.0, %v1760
        %v1762 = vpop.f32.mrf.mxu0
        %v1763 = vadd.f32 0.0, %v1762
        %1764 = vmatprep.mubr.bf16.mxu0 0
        %1765 = vmatmul.mubr.bf16.gmra.mxu0 %v1668
        %v1766 = vpop.f32.mrf.mxu0
        %v1767 = vadd.f32 0.0, %v1766
        %v1768 = vpop.f32.mrf.mxu0
        %v1769 = vadd.f32 0.0, %v1768
        %v1770 = vpop.f32.mrf.mxu0
        %v1771 = vadd.f32 0.0, %v1770
        %v1772 = vpop.f32.mrf.mxu0
        %v1773 = vadd.f32 0.0, %v1772
        %1774 = vmatprep.mubr.bf16.mxu0 0
        %1775 = vmatmul.mubr.bf16.gmra.mxu0 %v1671
        %v1776 = vpop.f32.mrf.mxu0
        %v1777 = vadd.f32 0.0, %v1776
        %v1778 = vpop.f32.mrf.mxu0
        %v1779 = vadd.f32 0.0, %v1778
        %v1780 = vpop.f32.mrf.mxu0
        %v1781 = vadd.f32 0.0, %v1780
        %v1782 = vpop.f32.mrf.mxu0
        %v1783 = vadd.f32 0.0, %v1782
        %1784 = vmatprep.mubr.bf16.mxu0 0
        %1785 = vmatmul.mubr.bf16.gmra.mxu0 %v1674
        %v1786 = vpop.f32.mrf.mxu0
        %v1787 = vadd.f32 0.0, %v1786
        %v1788 = vpop.f32.mrf.mxu0
        %v1789 = vadd.f32 0.0, %v1788
        %v1790 = vpop.f32.mrf.mxu0
        %v1791 = vadd.f32 0.0, %v1790
        %v1792 = vpop.f32.mrf.mxu0
        %v1793 = vadd.f32 0.0, %v1792
        %1794 = vdwg.mxu0
        %v1795 = vadd.f32 %v1580, %v1717
        %v1796 = vadd.f32 %v1581, %v1719
        %v1797 = vadd.f32 %v1582, %v1721
        %v1798 = vadd.f32 %v1583, %v1723
        %v1799 = vadd.f32 %v1584, %v1727
        %v1800 = vadd.f32 %v1585, %v1729
        %v1801 = vadd.f32 %v1586, %v1731
        %v1802 = vadd.f32 %v1587, %v1733
        %v1803 = vadd.f32 %v1588, %v1737
        %v1804 = vadd.f32 %v1589, %v1739
        %v1805 = vadd.f32 %v1590, %v1741
        %v1806 = vadd.f32 %v1591, %v1743
        %v1807 = vadd.f32 %v1592, %v1747
        %v1808 = vadd.f32 %v1593, %v1749
        %v1809 = vadd.f32 %v1594, %v1751
        %v1810 = vadd.f32 %v1595, %v1753
        %v1811 = vadd.f32 %v1596, %v1757
        %v1812 = vadd.f32 %v1597, %v1759
        %v1813 = vadd.f32 %v1598, %v1761
        %v1814 = vadd.f32 %v1599, %v1763
        %v1815 = vadd.f32 %v1600, %v1767
        %v1816 = vadd.f32 %v1601, %v1769
        %v1817 = vadd.f32 %v1602, %v1771
        %v1818 = vadd.f32 %v1603, %v1773
        %v1819 = vadd.f32 %v1604, %v1777
        %v1820 = vadd.f32 %v1605, %v1779
        %v1821 = vadd.f32 %v1606, %v1781
        %v1822 = vadd.f32 %v1607, %v1783
        %v1823 = vadd.f32 %v1608, %v1787
        %v1824 = vadd.f32 %v1609, %v1789
        %v1825 = vadd.f32 %v1610, %v1791
        %v1826 = vadd.f32 %v1611, %v1793
        %v1843 = vunpack.c.l.b16 %v351
        %v1844 = vunpack.c.l.b16 %v352
        %v1845 = vunpack.c.l.b16 %v353
        %v1846 = vunpack.c.l.b16 %v354
        %v1847 = vunpack.c.l.b16 %v355
        %v1848 = vunpack.c.l.b16 %v356
        %v1849 = vunpack.c.l.b16 %v357
        %v1850 = vunpack.c.l.b16 %v358
        %v1851 = vunpack.c.l.b16 %v359
        %v1852 = vunpack.c.l.b16 %v360
        %v1853 = vunpack.c.l.b16 %v361
        %v1854 = vunpack.c.l.b16 %v362
        %v1855 = vunpack.c.l.b16 %v363
        %v1856 = vunpack.c.l.b16 %v364
        %v1857 = vunpack.c.l.b16 %v365
        %v1858 = vunpack.c.l.b16 %v366
        %v1859 = vpack.c.b16 %v1844, %v1843
        %v1860 = vpack.c.b16 %v1846, %v1845
        %v1861 = vpack.c.b16 %v1848, %v1847
        %v1862 = vpack.c.b16 %v1850, %v1849
        %v1863 = vpack.c.b16 %v1852, %v1851
        %v1864 = vpack.c.b16 %v1854, %v1853
        %v1865 = vpack.c.b16 %v1856, %v1855
        %v1866 = vpack.c.b16 %v1858, %v1857
        %v1872 = vunpack.c.l.b16 %v685
        %v1873 = vunpack.c.h.b16 %v685
        %v1874 = vunpack.c.l.b16 %v686
        %v1875 = vunpack.c.h.b16 %v686
        %v1876 = vunpack.c.l.b16 %v687
        %v1877 = vunpack.c.h.b16 %v687
        %v1878 = vunpack.c.l.b16 %v688
        %v1879 = vunpack.c.h.b16 %v688
        %v1880 = vunpack.c.l.b16 %v689
        %v1881 = vunpack.c.h.b16 %v689
        %v1882 = vpack.c.b16 %v1874, %v1872
        %v1883 = vpack.c.b16 %v1875, %v1873
        %v1884 = vpack.c.b16 %v1878, %v1876
        %v1885 = vpack.c.b16 %v1879, %v1877
        %v1886 = vpack.c.b16 %v1880, %v1880
        %v1887 = vpack.c.b16 %v1881, %v1881
        %v1893 = vsel %vm925, %v1859, 0
        %v1896 = vsel %vm925, %v1860, 0
        %v1899 = vsel %vm925, %v1861, 0
        %v1902 = vsel %vm925, %v1862, 0
        %v1905 = vsel %vm925, %v1863, 0
        %v1908 = vsel %vm925, %v1864, 0
        %v1911 = vsel %vm925, %v1865, 0
        %v1914 = vsel %vm925, %v1866, 0
        %v1917 = vsel %vm950, %v1886, 0
        %v1920 = vsel %vm950, %v1887, 0
        %1922 = vmatprep.subr.bf16.mxu0 0
        %1923 = vmatpush1.bf16.msra.mxu0 0
        %1924 = vmatprep.subr.bf16.mxu0 0
        %1925 = vmatpush1.bf16.msra.mxu0 0
        %1926 = vmatprep.subr.bf16.mxu0 0
        %1927 = vmatpush1.bf16.msra.mxu0 0
        %1928 = vmatprep.subr.bf16.mxu0 0
        %1929 = vmatpush1.bf16.msra.mxu0 0
        %1930 = vmatprep.subr.bf16.mxu0 0
        %1931 = vmatpush1.bf16.msra.mxu0 0
        %1932 = vmatprep.subr.bf16.mxu0 %v1920
        %1933 = vmatpush1.bf16.msra.mxu0 %v1917
        %1934 = vmatprep.subr.bf16.mxu0 %v1885
        %1935 = vmatpush1.bf16.msra.mxu0 %v1884
        %1936 = vmatprep.subr.bf16.mxu0 %v1883
        %1937 = vmatpush1.bf16.msra.mxu0 %v1882
        %1938 = vmatprep.subr.bf16.mxu0 0
        %1939 = vmatpush2.bf16.msra.mxu0 0
        %1940 = vmatprep.subr.bf16.mxu0 0
        %1941 = vmatpush2.bf16.msra.mxu0 0
        %1942 = vmatprep.subr.bf16.mxu0 0
        %1943 = vmatpush2.bf16.msra.mxu0 0
        %1944 = vmatprep.subr.bf16.mxu0 0
        %1945 = vmatpush2.bf16.msra.mxu0 0
        %1946 = vmatprep.subr.bf16.mxu0 0
        %1947 = vmatpush2.bf16.msra.mxu0 0
        %1948 = vmatprep.subr.bf16.mxu0 0
        %1949 = vmatpush2.bf16.msra.mxu0 0
        %1950 = vmatprep.subr.bf16.mxu0 0
        %1951 = vmatpush2.bf16.msra.mxu0 0
        %1952 = vmatprep.subr.bf16.mxu0 0
        %1953 = vmatpush2.bf16.msra.mxu0 0
        %1954 = vmatprep.mubr.bf16.mxu0 0
        %1955 = vmatmul.mubr.bf16.gmra.mxu0 %v1893
        %v1956 = vpop.f32.mrf.mxu0
        %v1957 = vadd.f32 0.0, %v1956
        %v1958 = vpop.f32.mrf.mxu0
        %v1959 = vadd.f32 0.0, %v1958
        %v1960 = vpop.f32.mrf.mxu0
        %v1961 = vadd.f32 0.0, %v1960
        %v1962 = vpop.f32.mrf.mxu0
        %v1963 = vadd.f32 0.0, %v1962
        %1964 = vmatprep.mubr.bf16.mxu0 0
        %1965 = vmatmul.mubr.bf16.gmra.mxu0 %v1896
        %v1966 = vpop.f32.mrf.mxu0
        %v1967 = vadd.f32 0.0, %v1966
        %v1968 = vpop.f32.mrf.mxu0
        %v1969 = vadd.f32 0.0, %v1968
        %v1970 = vpop.f32.mrf.mxu0
        %v1971 = vadd.f32 0.0, %v1970
        %v1972 = vpop.f32.mrf.mxu0
        %v1973 = vadd.f32 0.0, %v1972
        %1974 = vmatprep.mubr.bf16.mxu0 0
        %1975 = vmatmul.mubr.bf16.gmra.mxu0 %v1899
        %v1976 = vpop.f32.mrf.mxu0
        %v1977 = vadd.f32 0.0, %v1976
        %v1978 = vpop.f32.mrf.mxu0
        %v1979 = vadd.f32 0.0, %v1978
        %v1980 = vpop.f32.mrf.mxu0
        %v1981 = vadd.f32 0.0, %v1980
        %v1982 = vpop.f32.mrf.mxu0
        %v1983 = vadd.f32 0.0, %v1982
        %1984 = vmatprep.mubr.bf16.mxu0 0
        %1985 = vmatmul.mubr.bf16.gmra.mxu0 %v1902
        %v1986 = vpop.f32.mrf.mxu0
        %v1987 = vadd.f32 0.0, %v1986
        %v1988 = vpop.f32.mrf.mxu0
        %v1989 = vadd.f32 0.0, %v1988
        %v1990 = vpop.f32.mrf.mxu0
        %v1991 = vadd.f32 0.0, %v1990
        %v1992 = vpop.f32.mrf.mxu0
        %v1993 = vadd.f32 0.0, %v1992
        %1994 = vmatprep.mubr.bf16.mxu0 0
        %1995 = vmatmul.mubr.bf16.gmra.mxu0 %v1905
        %v1996 = vpop.f32.mrf.mxu0
        %v1997 = vadd.f32 0.0, %v1996
        %v1998 = vpop.f32.mrf.mxu0
        %v1999 = vadd.f32 0.0, %v1998
        %v2000 = vpop.f32.mrf.mxu0
        %v2001 = vadd.f32 0.0, %v2000
        %v2002 = vpop.f32.mrf.mxu0
        %v2003 = vadd.f32 0.0, %v2002
        %2004 = vmatprep.mubr.bf16.mxu0 0
        %2005 = vmatmul.mubr.bf16.gmra.mxu0 %v1908
        %v2006 = vpop.f32.mrf.mxu0
        %v2007 = vadd.f32 0.0, %v2006
        %v2008 = vpop.f32.mrf.mxu0
        %v2009 = vadd.f32 0.0, %v2008
        %v2010 = vpop.f32.mrf.mxu0
        %v2011 = vadd.f32 0.0, %v2010
        %v2012 = vpop.f32.mrf.mxu0
        %v2013 = vadd.f32 0.0, %v2012
        %2014 = vmatprep.mubr.bf16.mxu0 0
        %2015 = vmatmul.mubr.bf16.gmra.mxu0 %v1911
        %v2016 = vpop.f32.mrf.mxu0
        %v2017 = vadd.f32 0.0, %v2016
        %v2018 = vpop.f32.mrf.mxu0
        %v2019 = vadd.f32 0.0, %v2018
        %v2020 = vpop.f32.mrf.mxu0
        %v2021 = vadd.f32 0.0, %v2020
        %v2022 = vpop.f32.mrf.mxu0
        %v2023 = vadd.f32 0.0, %v2022
        %2024 = vmatprep.mubr.bf16.mxu0 0
        %2025 = vmatmul.mubr.bf16.gmra.mxu0 %v1914
        %v2026 = vpop.f32.mrf.mxu0
        %v2027 = vadd.f32 0.0, %v2026
        %v2028 = vpop.f32.mrf.mxu0
        %v2029 = vadd.f32 0.0, %v2028
        %v2030 = vpop.f32.mrf.mxu0
        %v2031 = vadd.f32 0.0, %v2030
        %v2032 = vpop.f32.mrf.mxu0
        %v2033 = vadd.f32 0.0, %v2032
        %2034 = vdwg.mxu0
        %v2035 = vadd.f32 %v1795, %v1957
        %v2036 = vadd.f32 %v1796, %v1959
        %v2037 = vadd.f32 %v1797, %v1961
        %v2038 = vadd.f32 %v1798, %v1963
        %v2039 = vadd.f32 %v1799, %v1967
        %v2040 = vadd.f32 %v1800, %v1969
        %v2041 = vadd.f32 %v1801, %v1971
        %v2042 = vadd.f32 %v1802, %v1973
        %v2043 = vadd.f32 %v1803, %v1977
        %v2044 = vadd.f32 %v1804, %v1979
        %v2045 = vadd.f32 %v1805, %v1981
        %v2046 = vadd.f32 %v1806, %v1983
        %v2047 = vadd.f32 %v1807, %v1987
        %v2048 = vadd.f32 %v1808, %v1989
        %v2049 = vadd.f32 %v1809, %v1991
        %v2050 = vadd.f32 %v1810, %v1993
        %v2051 = vadd.f32 %v1811, %v1997
        %v2052 = vadd.f32 %v1812, %v1999
        %v2053 = vadd.f32 %v1813, %v2001
        %v2054 = vadd.f32 %v1814, %v2003
        %v2055 = vadd.f32 %v1815, %v2007
        %v2056 = vadd.f32 %v1816, %v2009
        %v2057 = vadd.f32 %v1817, %v2011
        %v2058 = vadd.f32 %v1818, %v2013
        %v2059 = vadd.f32 %v1819, %v2017
        %v2060 = vadd.f32 %v1820, %v2019
        %v2061 = vadd.f32 %v1821, %v2021
        %v2062 = vadd.f32 %v1822, %v2023
        %v2063 = vadd.f32 %v1823, %v2027
        %v2064 = vadd.f32 %v1824, %v2029
        %v2065 = vadd.f32 %v1825, %v2031
        %v2066 = vadd.f32 %v1826, %v2033
        %v2083 = vunpack.c.l.b16 %v367
        %v2084 = vunpack.c.l.b16 %v368
        %v2085 = vunpack.c.l.b16 %v369
        %v2086 = vunpack.c.l.b16 %v370
        %v2087 = vunpack.c.l.b16 %v371
        %v2088 = vunpack.c.l.b16 %v372
        %v2089 = vunpack.c.l.b16 %v373
        %v2090 = vunpack.c.l.b16 %v374
        %v2091 = vunpack.c.l.b16 %v375
        %v2092 = vunpack.c.l.b16 %v376
        %v2093 = vunpack.c.l.b16 %v377
        %v2094 = vunpack.c.l.b16 %v378
        %v2095 = vunpack.c.l.b16 %v379
        %v2096 = vunpack.c.l.b16 %v380
        %v2097 = vunpack.c.l.b16 %v381
        %v2098 = vunpack.c.l.b16 %v382
        %v2099 = vpack.c.b16 %v2084, %v2083
        %v2100 = vpack.c.b16 %v2086, %v2085
        %v2101 = vpack.c.b16 %v2088, %v2087
        %v2102 = vpack.c.b16 %v2090, %v2089
        %v2103 = vpack.c.b16 %v2092, %v2091
        %v2104 = vpack.c.b16 %v2094, %v2093
        %v2105 = vpack.c.b16 %v2096, %v2095
        %v2106 = vpack.c.b16 %v2098, %v2097
        %v2108 = vsel %vm925, %v2099, 0
        %v2111 = vsel %vm925, %v2100, 0
        %v2114 = vsel %vm925, %v2101, 0
        %v2117 = vsel %vm925, %v2102, 0
        %v2120 = vsel %vm925, %v2103, 0
        %v2123 = vsel %vm925, %v2104, 0
        %v2126 = vsel %vm925, %v2105, 0
        %v2129 = vsel %vm925, %v2106, 0
        %v2132 = vsel %vm950, %v734, 0
        %v2135 = vsel %vm950, %v735, 0
        %2137 = vmatprep.subr.bf16.mxu0 0
        %2138 = vmatpush1.bf16.msra.mxu0 0
        %2139 = vmatprep.subr.bf16.mxu0 0
        %2140 = vmatpush1.bf16.msra.mxu0 0
        %2141 = vmatprep.subr.bf16.mxu0 0
        %2142 = vmatpush1.bf16.msra.mxu0 0
        %2143 = vmatprep.subr.bf16.mxu0 0
        %2144 = vmatpush1.bf16.msra.mxu0 0
        %2145 = vmatprep.subr.bf16.mxu0 0
        %2146 = vmatpush1.bf16.msra.mxu0 0
        %2147 = vmatprep.subr.bf16.mxu0 %v2135
        %2148 = vmatpush1.bf16.msra.mxu0 %v2132
        %2149 = vmatprep.subr.bf16.mxu0 %v733
        %2150 = vmatpush1.bf16.msra.mxu0 %v732
        %2151 = vmatprep.subr.bf16.mxu0 %v731
        %2152 = vmatpush1.bf16.msra.mxu0 %v730
        %2153 = vmatprep.subr.bf16.mxu0 0
        %2154 = vmatpush2.bf16.msra.mxu0 0
        %2155 = vmatprep.subr.bf16.mxu0 0
        %2156 = vmatpush2.bf16.msra.mxu0 0
        %2157 = vmatprep.subr.bf16.mxu0 0
        %2158 = vmatpush2.bf16.msra.mxu0 0
        %2159 = vmatprep.subr.bf16.mxu0 0
        %2160 = vmatpush2.bf16.msra.mxu0 0
        %2161 = vmatprep.subr.bf16.mxu0 0
        %2162 = vmatpush2.bf16.msra.mxu0 0
        %2163 = vmatprep.subr.bf16.mxu0 0
        %2164 = vmatpush2.bf16.msra.mxu0 0
        %2165 = vmatprep.subr.bf16.mxu0 0
        %2166 = vmatpush2.bf16.msra.mxu0 0
        %2167 = vmatprep.subr.bf16.mxu0 0
        %2168 = vmatpush2.bf16.msra.mxu0 0
        %2169 = vmatprep.mubr.bf16.mxu0 0
        %2170 = vmatmul.mubr.bf16.gmra.mxu0 %v2108
        %v2171 = vpop.f32.mrf.mxu0
        %v2172 = vadd.f32 0.0, %v2171
        %v2173 = vpop.f32.mrf.mxu0
        %v2174 = vadd.f32 0.0, %v2173
        %v2175 = vpop.f32.mrf.mxu0
        %v2176 = vadd.f32 0.0, %v2175
        %v2177 = vpop.f32.mrf.mxu0
        %v2178 = vadd.f32 0.0, %v2177
        %2179 = vmatprep.mubr.bf16.mxu0 0
        %2180 = vmatmul.mubr.bf16.gmra.mxu0 %v2111
        %v2181 = vpop.f32.mrf.mxu0
        %v2182 = vadd.f32 0.0, %v2181
        %v2183 = vpop.f32.mrf.mxu0
        %v2184 = vadd.f32 0.0, %v2183
        %v2185 = vpop.f32.mrf.mxu0
        %v2186 = vadd.f32 0.0, %v2185
        %v2187 = vpop.f32.mrf.mxu0
        %v2188 = vadd.f32 0.0, %v2187
        %2189 = vmatprep.mubr.bf16.mxu0 0
        %2190 = vmatmul.mubr.bf16.gmra.mxu0 %v2114
        %v2191 = vpop.f32.mrf.mxu0
        %v2192 = vadd.f32 0.0, %v2191
        %v2193 = vpop.f32.mrf.mxu0
        %v2194 = vadd.f32 0.0, %v2193
        %v2195 = vpop.f32.mrf.mxu0
        %v2196 = vadd.f32 0.0, %v2195
        %v2197 = vpop.f32.mrf.mxu0
        %v2198 = vadd.f32 0.0, %v2197
        %2199 = vmatprep.mubr.bf16.mxu0 0
        %2200 = vmatmul.mubr.bf16.gmra.mxu0 %v2117
        %v2201 = vpop.f32.mrf.mxu0
        %v2202 = vadd.f32 0.0, %v2201
        %v2203 = vpop.f32.mrf.mxu0
        %v2204 = vadd.f32 0.0, %v2203
        %v2205 = vpop.f32.mrf.mxu0
        %v2206 = vadd.f32 0.0, %v2205
        %v2207 = vpop.f32.mrf.mxu0
        %v2208 = vadd.f32 0.0, %v2207
        %2209 = vmatprep.mubr.bf16.mxu0 0
        %2210 = vmatmul.mubr.bf16.gmra.mxu0 %v2120
        %v2211 = vpop.f32.mrf.mxu0
        %v2212 = vadd.f32 0.0, %v2211
        %v2213 = vpop.f32.mrf.mxu0
        %v2214 = vadd.f32 0.0, %v2213
        %v2215 = vpop.f32.mrf.mxu0
        %v2216 = vadd.f32 0.0, %v2215
        %v2217 = vpop.f32.mrf.mxu0
        %v2218 = vadd.f32 0.0, %v2217
        %2219 = vmatprep.mubr.bf16.mxu0 0
        %2220 = vmatmul.mubr.bf16.gmra.mxu0 %v2123
        %v2221 = vpop.f32.mrf.mxu0
        %v2222 = vadd.f32 0.0, %v2221
        %v2223 = vpop.f32.mrf.mxu0
        %v2224 = vadd.f32 0.0, %v2223
        %v2225 = vpop.f32.mrf.mxu0
        %v2226 = vadd.f32 0.0, %v2225
        %v2227 = vpop.f32.mrf.mxu0
        %v2228 = vadd.f32 0.0, %v2227
        %2229 = vmatprep.mubr.bf16.mxu0 0
        %2230 = vmatmul.mubr.bf16.gmra.mxu0 %v2126
        %v2231 = vpop.f32.mrf.mxu0
        %v2232 = vadd.f32 0.0, %v2231
        %v2233 = vpop.f32.mrf.mxu0
        %v2234 = vadd.f32 0.0, %v2233
        %v2235 = vpop.f32.mrf.mxu0
        %v2236 = vadd.f32 0.0, %v2235
        %v2237 = vpop.f32.mrf.mxu0
        %v2238 = vadd.f32 0.0, %v2237
        %2239 = vmatprep.mubr.bf16.mxu0 0
        %2240 = vmatmul.mubr.bf16.gmra.mxu0 %v2129
        %v2241 = vpop.f32.mrf.mxu0
        %v2242 = vadd.f32 0.0, %v2241
        %v2243 = vpop.f32.mrf.mxu0
        %v2244 = vadd.f32 0.0, %v2243
        %v2245 = vpop.f32.mrf.mxu0
        %v2246 = vadd.f32 0.0, %v2245
        %v2247 = vpop.f32.mrf.mxu0
        %v2248 = vadd.f32 0.0, %v2247
        %2249 = vdwg.mxu0
        %v2250 = vadd.f32 %v2035, %v2172
        %v2251 = vadd.f32 %v2036, %v2174
        %v2252 = vadd.f32 %v2037, %v2176
        %v2253 = vadd.f32 %v2038, %v2178
        %v2254 = vadd.f32 %v2039, %v2182
        %v2255 = vadd.f32 %v2040, %v2184
        %v2256 = vadd.f32 %v2041, %v2186
        %v2257 = vadd.f32 %v2042, %v2188
        %v2258 = vadd.f32 %v2043, %v2192
        %v2259 = vadd.f32 %v2044, %v2194
        %v2260 = vadd.f32 %v2045, %v2196
        %v2261 = vadd.f32 %v2046, %v2198
        %v2262 = vadd.f32 %v2047, %v2202
        %v2263 = vadd.f32 %v2048, %v2204
        %v2264 = vadd.f32 %v2049, %v2206
        %v2265 = vadd.f32 %v2050, %v2208
        %v2266 = vadd.f32 %v2051, %v2212
        %v2267 = vadd.f32 %v2052, %v2214
        %v2268 = vadd.f32 %v2053, %v2216
        %v2269 = vadd.f32 %v2054, %v2218
        %v2270 = vadd.f32 %v2055, %v2222
        %v2271 = vadd.f32 %v2056, %v2224
        %v2272 = vadd.f32 %v2057, %v2226
        %v2273 = vadd.f32 %v2058, %v2228
        %v2274 = vadd.f32 %v2059, %v2232
        %v2275 = vadd.f32 %v2060, %v2234
        %v2276 = vadd.f32 %v2061, %v2236
        %v2277 = vadd.f32 %v2062, %v2238
        %v2278 = vadd.f32 %v2063, %v2242
        %v2279 = vadd.f32 %v2064, %v2244
        %v2280 = vadd.f32 %v2065, %v2246
        %v2281 = vadd.f32 %v2066, %v2248
        %v2298 = vunpack.c.l.b16 %v383
        %v2299 = vunpack.c.l.b16 %v384
        %v2300 = vunpack.c.l.b16 %v385
        %v2301 = vunpack.c.l.b16 %v386
        %v2302 = vunpack.c.l.b16 %v387
        %v2303 = vunpack.c.l.b16 %v388
        %v2304 = vunpack.c.l.b16 %v389
        %v2305 = vunpack.c.l.b16 %v390
        %v2306 = vunpack.c.l.b16 %v391
        %v2307 = vunpack.c.l.b16 %v392
        %v2308 = vunpack.c.l.b16 %v393
        %v2309 = vunpack.c.l.b16 %v394
        %v2310 = vunpack.c.l.b16 %v395
        %v2311 = vunpack.c.l.b16 %v396
        %v2312 = vunpack.c.l.b16 %v397
        %v2313 = vunpack.c.l.b16 %v398
        %v2314 = vpack.c.b16 %v2299, %v2298
        %v2315 = vpack.c.b16 %v2301, %v2300
        %v2316 = vpack.c.b16 %v2303, %v2302
        %v2317 = vpack.c.b16 %v2305, %v2304
        %v2318 = vpack.c.b16 %v2307, %v2306
        %v2319 = vpack.c.b16 %v2309, %v2308
        %v2320 = vpack.c.b16 %v2311, %v2310
        %v2321 = vpack.c.b16 %v2313, %v2312
        %v2323 = vsel %vm925, %v2314, 0
        %v2326 = vsel %vm925, %v2315, 0
        %v2329 = vsel %vm925, %v2316, 0
        %v2332 = vsel %vm925, %v2317, 0
        %v2335 = vsel %vm925, %v2318, 0
        %v2338 = vsel %vm925, %v2319, 0
        %v2341 = vsel %vm925, %v2320, 0
        %v2344 = vsel %vm925, %v2321, 0
        %v2347 = vsel %vm950, %v780, 0
        %v2350 = vsel %vm950, %v781, 0
        %2352 = vmatprep.subr.bf16.mxu0 0
        %2353 = vmatpush1.bf16.msra.mxu0 0
        %2354 = vmatprep.subr.bf16.mxu0 0
        %2355 = vmatpush1.bf16.msra.mxu0 0
        %2356 = vmatprep.subr.bf16.mxu0 0
        %2357 = vmatpush1.bf16.msra.mxu0 0
        %2358 = vmatprep.subr.bf16.mxu0 0
        %2359 = vmatpush1.bf16.msra.mxu0 0
        %2360 = vmatprep.subr.bf16.mxu0 0
        %2361 = vmatpush1.bf16.msra.mxu0 0
        %2362 = vmatprep.subr.bf16.mxu0 %v2350
        %2363 = vmatpush1.bf16.msra.mxu0 %v2347
        %2364 = vmatprep.subr.bf16.mxu0 %v779
        %2365 = vmatpush1.bf16.msra.mxu0 %v778
        %2366 = vmatprep.subr.bf16.mxu0 %v777
        %2367 = vmatpush1.bf16.msra.mxu0 %v776
        %2368 = vmatprep.subr.bf16.mxu0 0
        %2369 = vmatpush2.bf16.msra.mxu0 0
        %2370 = vmatprep.subr.bf16.mxu0 0
        %2371 = vmatpush2.bf16.msra.mxu0 0
        %2372 = vmatprep.subr.bf16.mxu0 0
        %2373 = vmatpush2.bf16.msra.mxu0 0
        %2374 = vmatprep.subr.bf16.mxu0 0
        %2375 = vmatpush2.bf16.msra.mxu0 0
        %2376 = vmatprep.subr.bf16.mxu0 0
        %2377 = vmatpush2.bf16.msra.mxu0 0
        %2378 = vmatprep.subr.bf16.mxu0 0
        %2379 = vmatpush2.bf16.msra.mxu0 0
        %2380 = vmatprep.subr.bf16.mxu0 0
        %2381 = vmatpush2.bf16.msra.mxu0 0
        %2382 = vmatprep.subr.bf16.mxu0 0
        %2383 = vmatpush2.bf16.msra.mxu0 0
        %2384 = vmatprep.mubr.bf16.mxu0 0
        %2385 = vmatmul.mubr.bf16.gmra.mxu0 %v2323
        %v2386 = vpop.f32.mrf.mxu0
        %v2387 = vadd.f32 0.0, %v2386
        %v2388 = vpop.f32.mrf.mxu0
        %v2389 = vadd.f32 0.0, %v2388
        %v2390 = vpop.f32.mrf.mxu0
        %v2391 = vadd.f32 0.0, %v2390
        %v2392 = vpop.f32.mrf.mxu0
        %v2393 = vadd.f32 0.0, %v2392
        %2394 = vmatprep.mubr.bf16.mxu0 0
        %2395 = vmatmul.mubr.bf16.gmra.mxu0 %v2326
        %v2396 = vpop.f32.mrf.mxu0
        %v2397 = vadd.f32 0.0, %v2396
        %v2398 = vpop.f32.mrf.mxu0
        %v2399 = vadd.f32 0.0, %v2398
        %v2400 = vpop.f32.mrf.mxu0
        %v2401 = vadd.f32 0.0, %v2400
        %v2402 = vpop.f32.mrf.mxu0
        %v2403 = vadd.f32 0.0, %v2402
        %2404 = vmatprep.mubr.bf16.mxu0 0
        %2405 = vmatmul.mubr.bf16.gmra.mxu0 %v2329
        %v2406 = vpop.f32.mrf.mxu0
        %v2407 = vadd.f32 0.0, %v2406
        %v2408 = vpop.f32.mrf.mxu0
        %v2409 = vadd.f32 0.0, %v2408
        %v2410 = vpop.f32.mrf.mxu0
        %v2411 = vadd.f32 0.0, %v2410
        %v2412 = vpop.f32.mrf.mxu0
        %v2413 = vadd.f32 0.0, %v2412
        %2414 = vmatprep.mubr.bf16.mxu0 0
        %2415 = vmatmul.mubr.bf16.gmra.mxu0 %v2332
        %v2416 = vpop.f32.mrf.mxu0
        %v2417 = vadd.f32 0.0, %v2416
        %v2418 = vpop.f32.mrf.mxu0
        %v2419 = vadd.f32 0.0, %v2418
        %v2420 = vpop.f32.mrf.mxu0
        %v2421 = vadd.f32 0.0, %v2420
        %v2422 = vpop.f32.mrf.mxu0
        %v2423 = vadd.f32 0.0, %v2422
        %2424 = vmatprep.mubr.bf16.mxu0 0
        %2425 = vmatmul.mubr.bf16.gmra.mxu0 %v2335
        %v2426 = vpop.f32.mrf.mxu0
        %v2427 = vadd.f32 0.0, %v2426
        %v2428 = vpop.f32.mrf.mxu0
        %v2429 = vadd.f32 0.0, %v2428
        %v2430 = vpop.f32.mrf.mxu0
        %v2431 = vadd.f32 0.0, %v2430
        %v2432 = vpop.f32.mrf.mxu0
        %v2433 = vadd.f32 0.0, %v2432
        %2434 = vmatprep.mubr.bf16.mxu0 0
        %2435 = vmatmul.mubr.bf16.gmra.mxu0 %v2338
        %v2436 = vpop.f32.mrf.mxu0
        %v2437 = vadd.f32 0.0, %v2436
        %v2438 = vpop.f32.mrf.mxu0
        %v2439 = vadd.f32 0.0, %v2438
        %v2440 = vpop.f32.mrf.mxu0
        %v2441 = vadd.f32 0.0, %v2440
        %v2442 = vpop.f32.mrf.mxu0
        %v2443 = vadd.f32 0.0, %v2442
        %2444 = vmatprep.mubr.bf16.mxu0 0
        %2445 = vmatmul.mubr.bf16.gmra.mxu0 %v2341
        %v2446 = vpop.f32.mrf.mxu0
        %v2447 = vadd.f32 0.0, %v2446
        %v2448 = vpop.f32.mrf.mxu0
        %v2449 = vadd.f32 0.0, %v2448
        %v2450 = vpop.f32.mrf.mxu0
        %v2451 = vadd.f32 0.0, %v2450
        %v2452 = vpop.f32.mrf.mxu0
        %v2453 = vadd.f32 0.0, %v2452
        %2454 = vmatprep.mubr.bf16.mxu0 0
        %2455 = vmatmul.mubr.bf16.gmra.mxu0 %v2344
        %v2456 = vpop.f32.mrf.mxu0
        %v2457 = vadd.f32 0.0, %v2456
        %v2458 = vpop.f32.mrf.mxu0
        %v2459 = vadd.f32 0.0, %v2458
        %v2460 = vpop.f32.mrf.mxu0
        %v2461 = vadd.f32 0.0, %v2460
        %v2462 = vpop.f32.mrf.mxu0
        %v2463 = vadd.f32 0.0, %v2462
        %2464 = vdwg.mxu0
        %v2465 = vadd.f32 %v2250, %v2387
        %v2466 = vadd.f32 %v2251, %v2389
        %v2467 = vadd.f32 %v2252, %v2391
        %v2468 = vadd.f32 %v2253, %v2393
        %v2469 = vadd.f32 %v2254, %v2397
        %v2470 = vadd.f32 %v2255, %v2399
        %v2471 = vadd.f32 %v2256, %v2401
        %v2472 = vadd.f32 %v2257, %v2403
        %v2473 = vadd.f32 %v2258, %v2407
        %v2474 = vadd.f32 %v2259, %v2409
        %v2475 = vadd.f32 %v2260, %v2411
        %v2476 = vadd.f32 %v2261, %v2413
        %v2477 = vadd.f32 %v2262, %v2417
        %v2478 = vadd.f32 %v2263, %v2419
        %v2479 = vadd.f32 %v2264, %v2421
        %v2480 = vadd.f32 %v2265, %v2423
        %v2481 = vadd.f32 %v2266, %v2427
        %v2482 = vadd.f32 %v2267, %v2429
        %v2483 = vadd.f32 %v2268, %v2431
        %v2484 = vadd.f32 %v2269, %v2433
        %v2485 = vadd.f32 %v2270, %v2437
        %v2486 = vadd.f32 %v2271, %v2439
        %v2487 = vadd.f32 %v2272, %v2441
        %v2488 = vadd.f32 %v2273, %v2443
        %v2489 = vadd.f32 %v2274, %v2447
        %v2490 = vadd.f32 %v2275, %v2449
        %v2491 = vadd.f32 %v2276, %v2451
        %v2492 = vadd.f32 %v2277, %v2453
        %v2493 = vadd.f32 %v2278, %v2457
        %v2494 = vadd.f32 %v2279, %v2459
        %v2495 = vadd.f32 %v2280, %v2461
        %v2496 = vadd.f32 %v2281, %v2463
        %v2513 = vunpack.c.l.b16 %v399
        %v2514 = vunpack.c.l.b16 %v400
        %v2515 = vunpack.c.l.b16 %v401
        %v2516 = vunpack.c.l.b16 %v402
        %v2517 = vunpack.c.l.b16 %v403
        %v2518 = vunpack.c.l.b16 %v404
        %v2519 = vunpack.c.l.b16 %v405
        %v2520 = vunpack.c.l.b16 %v406
        %v2521 = vunpack.c.l.b16 %v407
        %v2522 = vunpack.c.l.b16 %v408
        %v2523 = vunpack.c.l.b16 %v409
        %v2524 = vunpack.c.l.b16 %v410
        %v2525 = vunpack.c.l.b16 %v411
        %v2526 = vunpack.c.l.b16 %v412
        %v2527 = vunpack.c.l.b16 %v413
        %v2528 = vunpack.c.l.b16 %v414
        %v2529 = vpack.c.b16 %v2514, %v2513
        %v2530 = vpack.c.b16 %v2516, %v2515
        %v2531 = vpack.c.b16 %v2518, %v2517
        %v2532 = vpack.c.b16 %v2520, %v2519
        %v2533 = vpack.c.b16 %v2522, %v2521
        %v2534 = vpack.c.b16 %v2524, %v2523
        %v2535 = vpack.c.b16 %v2526, %v2525
        %v2536 = vpack.c.b16 %v2528, %v2527
        %v2538 = vsel %vm925, %v2529, 0
        %v2541 = vsel %vm925, %v2530, 0
        %v2544 = vsel %vm925, %v2531, 0
        %v2547 = vsel %vm925, %v2532, 0
        %v2550 = vsel %vm925, %v2533, 0
        %v2553 = vsel %vm925, %v2534, 0
        %v2556 = vsel %vm925, %v2535, 0
        %v2559 = vsel %vm925, %v2536, 0
        %v2562 = vsel %vm950, %v826, 0
        %v2565 = vsel %vm950, %v827, 0
        %2567 = vmatprep.subr.bf16.mxu0 0
        %2568 = vmatpush1.bf16.msra.mxu0 0
        %2569 = vmatprep.subr.bf16.mxu0 0
        %2570 = vmatpush1.bf16.msra.mxu0 0
        %2571 = vmatprep.subr.bf16.mxu0 0
        %2572 = vmatpush1.bf16.msra.mxu0 0
        %2573 = vmatprep.subr.bf16.mxu0 0
        %2574 = vmatpush1.bf16.msra.mxu0 0
        %2575 = vmatprep.subr.bf16.mxu0 0
        %2576 = vmatpush1.bf16.msra.mxu0 0
        %2577 = vmatprep.subr.bf16.mxu0 %v2565
        %2578 = vmatpush1.bf16.msra.mxu0 %v2562
        %2579 = vmatprep.subr.bf16.mxu0 %v825
        %2580 = vmatpush1.bf16.msra.mxu0 %v824
        %2581 = vmatprep.subr.bf16.mxu0 %v823
        %2582 = vmatpush1.bf16.msra.mxu0 %v822
        %2583 = vmatprep.subr.bf16.mxu0 0
        %2584 = vmatpush2.bf16.msra.mxu0 0
        %2585 = vmatprep.subr.bf16.mxu0 0
        %2586 = vmatpush2.bf16.msra.mxu0 0
        %2587 = vmatprep.subr.bf16.mxu0 0
        %2588 = vmatpush2.bf16.msra.mxu0 0
        %2589 = vmatprep.subr.bf16.mxu0 0
        %2590 = vmatpush2.bf16.msra.mxu0 0
        %2591 = vmatprep.subr.bf16.mxu0 0
        %2592 = vmatpush2.bf16.msra.mxu0 0
        %2593 = vmatprep.subr.bf16.mxu0 0
        %2594 = vmatpush2.bf16.msra.mxu0 0
        %2595 = vmatprep.subr.bf16.mxu0 0
        %2596 = vmatpush2.bf16.msra.mxu0 0
        %2597 = vmatprep.subr.bf16.mxu0 0
        %2598 = vmatpush2.bf16.msra.mxu0 0
        %2599 = vmatprep.mubr.bf16.mxu0 0
        %2600 = vmatmul.mubr.bf16.gmra.mxu0 %v2538
        %v2601 = vpop.f32.mrf.mxu0
        %v2602 = vadd.f32 0.0, %v2601
        %v2603 = vpop.f32.mrf.mxu0
        %v2604 = vadd.f32 0.0, %v2603
        %v2605 = vpop.f32.mrf.mxu0
        %v2606 = vadd.f32 0.0, %v2605
        %v2607 = vpop.f32.mrf.mxu0
        %v2608 = vadd.f32 0.0, %v2607
        %2609 = vmatprep.mubr.bf16.mxu0 0
        %2610 = vmatmul.mubr.bf16.gmra.mxu0 %v2541
        %v2611 = vpop.f32.mrf.mxu0
        %v2612 = vadd.f32 0.0, %v2611
        %v2613 = vpop.f32.mrf.mxu0
        %v2614 = vadd.f32 0.0, %v2613
        %v2615 = vpop.f32.mrf.mxu0
        %v2616 = vadd.f32 0.0, %v2615
        %v2617 = vpop.f32.mrf.mxu0
        %v2618 = vadd.f32 0.0, %v2617
        %2619 = vmatprep.mubr.bf16.mxu0 0
        %2620 = vmatmul.mubr.bf16.gmra.mxu0 %v2544
        %v2621 = vpop.f32.mrf.mxu0
        %v2622 = vadd.f32 0.0, %v2621
        %v2623 = vpop.f32.mrf.mxu0
        %v2624 = vadd.f32 0.0, %v2623
        %v2625 = vpop.f32.mrf.mxu0
        %v2626 = vadd.f32 0.0, %v2625
        %v2627 = vpop.f32.mrf.mxu0
        %v2628 = vadd.f32 0.0, %v2627
        %2629 = vmatprep.mubr.bf16.mxu0 0
        %2630 = vmatmul.mubr.bf16.gmra.mxu0 %v2547
        %v2631 = vpop.f32.mrf.mxu0
        %v2632 = vadd.f32 0.0, %v2631
        %v2633 = vpop.f32.mrf.mxu0
        %v2634 = vadd.f32 0.0, %v2633
        %v2635 = vpop.f32.mrf.mxu0
        %v2636 = vadd.f32 0.0, %v2635
        %v2637 = vpop.f32.mrf.mxu0
        %v2638 = vadd.f32 0.0, %v2637
        %2639 = vmatprep.mubr.bf16.mxu0 0
        %2640 = vmatmul.mubr.bf16.gmra.mxu0 %v2550
        %v2641 = vpop.f32.mrf.mxu0
        %v2642 = vadd.f32 0.0, %v2641
        %v2643 = vpop.f32.mrf.mxu0
        %v2644 = vadd.f32 0.0, %v2643
        %v2645 = vpop.f32.mrf.mxu0
        %v2646 = vadd.f32 0.0, %v2645
        %v2647 = vpop.f32.mrf.mxu0
        %v2648 = vadd.f32 0.0, %v2647
        %2649 = vmatprep.mubr.bf16.mxu0 0
        %2650 = vmatmul.mubr.bf16.gmra.mxu0 %v2553
        %v2651 = vpop.f32.mrf.mxu0
        %v2652 = vadd.f32 0.0, %v2651
        %v2653 = vpop.f32.mrf.mxu0
        %v2654 = vadd.f32 0.0, %v2653
        %v2655 = vpop.f32.mrf.mxu0
        %v2656 = vadd.f32 0.0, %v2655
        %v2657 = vpop.f32.mrf.mxu0
        %v2658 = vadd.f32 0.0, %v2657
        %2659 = vmatprep.mubr.bf16.mxu0 0
        %2660 = vmatmul.mubr.bf16.gmra.mxu0 %v2556
        %v2661 = vpop.f32.mrf.mxu0
        %v2662 = vadd.f32 0.0, %v2661
        %v2663 = vpop.f32.mrf.mxu0
        %v2664 = vadd.f32 0.0, %v2663
        %v2665 = vpop.f32.mrf.mxu0
        %v2666 = vadd.f32 0.0, %v2665
        %v2667 = vpop.f32.mrf.mxu0
        %v2668 = vadd.f32 0.0, %v2667
        %2669 = vmatprep.mubr.bf16.mxu0 0
        %2670 = vmatmul.mubr.bf16.gmra.mxu0 %v2559
        %v2671 = vpop.f32.mrf.mxu0
        %v2672 = vadd.f32 0.0, %v2671
        %v2673 = vpop.f32.mrf.mxu0
        %v2674 = vadd.f32 0.0, %v2673
        %v2675 = vpop.f32.mrf.mxu0
        %v2676 = vadd.f32 0.0, %v2675
        %v2677 = vpop.f32.mrf.mxu0
        %v2678 = vadd.f32 0.0, %v2677
        %2679 = vdwg.mxu0
        %v2680 = vadd.f32 %v2465, %v2602
        %v2681 = vadd.f32 %v2466, %v2604
        %v2682 = vadd.f32 %v2467, %v2606
        %v2683 = vadd.f32 %v2468, %v2608
        %v2684 = vadd.f32 %v2469, %v2612
        %v2685 = vadd.f32 %v2470, %v2614
        %v2686 = vadd.f32 %v2471, %v2616
        %v2687 = vadd.f32 %v2472, %v2618
        %v2688 = vadd.f32 %v2473, %v2622
        %v2689 = vadd.f32 %v2474, %v2624
        %v2690 = vadd.f32 %v2475, %v2626
        %v2691 = vadd.f32 %v2476, %v2628
        %v2692 = vadd.f32 %v2477, %v2632
        %v2693 = vadd.f32 %v2478, %v2634
        %v2694 = vadd.f32 %v2479, %v2636
        %v2695 = vadd.f32 %v2480, %v2638
        %v2696 = vadd.f32 %v2481, %v2642
        %v2697 = vadd.f32 %v2482, %v2644
        %v2698 = vadd.f32 %v2483, %v2646
        %v2699 = vadd.f32 %v2484, %v2648
        %v2700 = vadd.f32 %v2485, %v2652
        %v2701 = vadd.f32 %v2486, %v2654
        %v2702 = vadd.f32 %v2487, %v2656
        %v2703 = vadd.f32 %v2488, %v2658
        %v2704 = vadd.f32 %v2489, %v2662
        %v2705 = vadd.f32 %v2490, %v2664
        %v2706 = vadd.f32 %v2491, %v2666
        %v2707 = vadd.f32 %v2492, %v2668
        %v2708 = vadd.f32 %v2493, %v2672
        %v2709 = vadd.f32 %v2494, %v2674
        %v2710 = vadd.f32 %v2495, %v2676
        %v2711 = vadd.f32 %v2496, %v2678
        %v2728 = vunpack.c.l.b16 %v415
        %v2729 = vunpack.c.l.b16 %v416
        %v2730 = vunpack.c.l.b16 %v417
        %v2731 = vunpack.c.l.b16 %v418
        %v2732 = vunpack.c.l.b16 %v419
        %v2733 = vunpack.c.l.b16 %v420
        %v2734 = vunpack.c.l.b16 %v421
        %v2735 = vunpack.c.l.b16 %v422
        %v2736 = vunpack.c.l.b16 %v423
        %v2737 = vunpack.c.l.b16 %v424
        %v2738 = vunpack.c.l.b16 %v425
        %v2739 = vunpack.c.l.b16 %v426
        %v2740 = vunpack.c.l.b16 %v427
        %v2741 = vunpack.c.l.b16 %v428
        %v2742 = vunpack.c.l.b16 %v429
        %v2743 = vunpack.c.l.b16 %v430
        %v2744 = vpack.c.b16 %v2729, %v2728
        %v2745 = vpack.c.b16 %v2731, %v2730
        %v2746 = vpack.c.b16 %v2733, %v2732
        %v2747 = vpack.c.b16 %v2735, %v2734
        %v2748 = vpack.c.b16 %v2737, %v2736
        %v2749 = vpack.c.b16 %v2739, %v2738
        %v2750 = vpack.c.b16 %v2741, %v2740
        %v2751 = vpack.c.b16 %v2743, %v2742
        %v2753 = vsel %vm925, %v2744, 0
        %v2756 = vsel %vm925, %v2745, 0
        %v2759 = vsel %vm925, %v2746, 0
        %v2762 = vsel %vm925, %v2747, 0
        %v2765 = vsel %vm925, %v2748, 0
        %v2768 = vsel %vm925, %v2749, 0
        %v2771 = vsel %vm925, %v2750, 0
        %v2774 = vsel %vm925, %v2751, 0
        %v2777 = vsel %vm950, %v883, 0
        %v2780 = vsel %vm950, %v884, 0
        %2782 = vmatprep.subr.bf16.mxu0 0
        %2783 = vmatpush1.bf16.msra.mxu0 0
        %2784 = vmatprep.subr.bf16.mxu0 0
        %2785 = vmatpush1.bf16.msra.mxu0 0
        %2786 = vmatprep.subr.bf16.mxu0 0
        %2787 = vmatpush1.bf16.msra.mxu0 0
        %2788 = vmatprep.subr.bf16.mxu0 0
        %2789 = vmatpush1.bf16.msra.mxu0 0
        %2790 = vmatprep.subr.bf16.mxu0 0
        %2791 = vmatpush1.bf16.msra.mxu0 0
        %2792 = vmatprep.subr.bf16.mxu0 %v2780
        %2793 = vmatpush1.bf16.msra.mxu0 %v2777
        %2794 = vmatprep.subr.bf16.mxu0 %v882
        %2795 = vmatpush1.bf16.msra.mxu0 %v881
        %2796 = vmatprep.subr.bf16.mxu0 %v880
        %2797 = vmatpush1.bf16.msra.mxu0 %v879
        %2798 = vmatprep.subr.bf16.mxu0 0
        %2799 = vmatpush2.bf16.msra.mxu0 0
        %2800 = vmatprep.subr.bf16.mxu0 0
        %2801 = vmatpush2.bf16.msra.mxu0 0
        %2802 = vmatprep.subr.bf16.mxu0 0
        %2803 = vmatpush2.bf16.msra.mxu0 0
        %2804 = vmatprep.subr.bf16.mxu0 0
        %2805 = vmatpush2.bf16.msra.mxu0 0
        %2806 = vmatprep.subr.bf16.mxu0 0
        %2807 = vmatpush2.bf16.msra.mxu0 0
        %2808 = vmatprep.subr.bf16.mxu0 0
        %2809 = vmatpush2.bf16.msra.mxu0 0
        %2810 = vmatprep.subr.bf16.mxu0 0
        %2811 = vmatpush2.bf16.msra.mxu0 0
        %2812 = vmatprep.subr.bf16.mxu0 0
        %2813 = vmatpush2.bf16.msra.mxu0 0
        %2814 = vmatprep.mubr.bf16.mxu0 0
        %2815 = vmatmul.mubr.bf16.gmra.mxu0 %v2753
        %v2816 = vpop.f32.mrf.mxu0
        %v2817 = vadd.f32 0.0, %v2816
        %v2818 = vpop.f32.mrf.mxu0
        %v2819 = vadd.f32 0.0, %v2818
        %v2820 = vpop.f32.mrf.mxu0
        %v2821 = vadd.f32 0.0, %v2820
        %v2822 = vpop.f32.mrf.mxu0
        %v2823 = vadd.f32 0.0, %v2822
        %2824 = vmatprep.mubr.bf16.mxu0 0
        %2825 = vmatmul.mubr.bf16.gmra.mxu0 %v2756
        %v2826 = vpop.f32.mrf.mxu0
        %v2827 = vadd.f32 0.0, %v2826
        %v2828 = vpop.f32.mrf.mxu0
        %v2829 = vadd.f32 0.0, %v2828
        %v2830 = vpop.f32.mrf.mxu0
        %v2831 = vadd.f32 0.0, %v2830
        %v2832 = vpop.f32.mrf.mxu0
        %v2833 = vadd.f32 0.0, %v2832
        %2834 = vmatprep.mubr.bf16.mxu0 0
        %2835 = vmatmul.mubr.bf16.gmra.mxu0 %v2759
        %v2836 = vpop.f32.mrf.mxu0
        %v2837 = vadd.f32 0.0, %v2836
        %v2838 = vpop.f32.mrf.mxu0
        %v2839 = vadd.f32 0.0, %v2838
        %v2840 = vpop.f32.mrf.mxu0
        %v2841 = vadd.f32 0.0, %v2840
        %v2842 = vpop.f32.mrf.mxu0
        %v2843 = vadd.f32 0.0, %v2842
        %2844 = vmatprep.mubr.bf16.mxu0 0
        %2845 = vmatmul.mubr.bf16.gmra.mxu0 %v2762
        %v2846 = vpop.f32.mrf.mxu0
        %v2847 = vadd.f32 0.0, %v2846
        %v2848 = vpop.f32.mrf.mxu0
        %v2849 = vadd.f32 0.0, %v2848
        %v2850 = vpop.f32.mrf.mxu0
        %v2851 = vadd.f32 0.0, %v2850
        %v2852 = vpop.f32.mrf.mxu0
        %v2853 = vadd.f32 0.0, %v2852
        %2854 = vmatprep.mubr.bf16.mxu0 0
        %2855 = vmatmul.mubr.bf16.gmra.mxu0 %v2765
        %v2856 = vpop.f32.mrf.mxu0
        %v2857 = vadd.f32 0.0, %v2856
        %v2858 = vpop.f32.mrf.mxu0
        %v2859 = vadd.f32 0.0, %v2858
        %v2860 = vpop.f32.mrf.mxu0
        %v2861 = vadd.f32 0.0, %v2860
        %v2862 = vpop.f32.mrf.mxu0
        %v2863 = vadd.f32 0.0, %v2862
        %2864 = vmatprep.mubr.bf16.mxu0 0
        %2865 = vmatmul.mubr.bf16.gmra.mxu0 %v2768
        %v2866 = vpop.f32.mrf.mxu0
        %v2867 = vadd.f32 0.0, %v2866
        %v2868 = vpop.f32.mrf.mxu0
        %v2869 = vadd.f32 0.0, %v2868
        %v2870 = vpop.f32.mrf.mxu0
        %v2871 = vadd.f32 0.0, %v2870
        %v2872 = vpop.f32.mrf.mxu0
        %v2873 = vadd.f32 0.0, %v2872
        %2874 = vmatprep.mubr.bf16.mxu0 0
        %2875 = vmatmul.mubr.bf16.gmra.mxu0 %v2771
        %v2876 = vpop.f32.mrf.mxu0
        %v2877 = vadd.f32 0.0, %v2876
        %v2878 = vpop.f32.mrf.mxu0
        %v2879 = vadd.f32 0.0, %v2878
        %v2880 = vpop.f32.mrf.mxu0
        %v2881 = vadd.f32 0.0, %v2880
        %v2882 = vpop.f32.mrf.mxu0
        %v2883 = vadd.f32 0.0, %v2882
        %2884 = vmatprep.mubr.bf16.mxu0 0
        %2885 = vmatmul.mubr.bf16.gmra.mxu0 %v2774
        %v2886 = vpop.f32.mrf.mxu0
        %v2887 = vadd.f32 0.0, %v2886
        %v2888 = vpop.f32.mrf.mxu0
        %v2889 = vadd.f32 0.0, %v2888
        %v2890 = vpop.f32.mrf.mxu0
        %v2891 = vadd.f32 0.0, %v2890
        %v2892 = vpop.f32.mrf.mxu0
        %v2893 = vadd.f32 0.0, %v2892
        %2894 = vdwg.mxu0
        %v2895 = vadd.f32 %v2680, %v2817
        %v2896 = vadd.f32 %v2681, %v2819
        %v2897 = vadd.f32 %v2682, %v2821
        %v2898 = vadd.f32 %v2683, %v2823
        %v2899 = vadd.f32 %v2684, %v2827
        %v2900 = vadd.f32 %v2685, %v2829
        %v2901 = vadd.f32 %v2686, %v2831
        %v2902 = vadd.f32 %v2687, %v2833
        %v2903 = vadd.f32 %v2688, %v2837
        %v2904 = vadd.f32 %v2689, %v2839
        %v2905 = vadd.f32 %v2690, %v2841
        %v2906 = vadd.f32 %v2691, %v2843
        %v2907 = vadd.f32 %v2692, %v2847
        %v2908 = vadd.f32 %v2693, %v2849
        %v2909 = vadd.f32 %v2694, %v2851
        %v2910 = vadd.f32 %v2695, %v2853
        %v2911 = vadd.f32 %v2696, %v2857
        %v2912 = vadd.f32 %v2697, %v2859
        %v2913 = vadd.f32 %v2698, %v2861
        %v2914 = vadd.f32 %v2699, %v2863
        %v2915 = vadd.f32 %v2700, %v2867
        %v2916 = vadd.f32 %v2701, %v2869
        %v2917 = vadd.f32 %v2702, %v2871
        %v2918 = vadd.f32 %v2703, %v2873
        %v2919 = vadd.f32 %v2704, %v2877
        %v2920 = vadd.f32 %v2705, %v2879
        %v2921 = vadd.f32 %v2706, %v2881
        %v2922 = vadd.f32 %v2707, %v2883
        %v2923 = vadd.f32 %v2708, %v2887
        %v2924 = vadd.f32 %v2709, %v2889
        %v2925 = vadd.f32 %v2710, %v2891
        %v2926 = vadd.f32 %v2711, %v2893
        %v2927 = vxor.u32 %v2895, 2147483648
        %v2928 = vxor.u32 %v2896, 2147483648
        %v2929 = vxor.u32 %v2897, 2147483648
        %v2930 = vxor.u32 %v2898, 2147483648
        %v2931 = vxor.u32 %v2899, 2147483648
        %v2932 = vxor.u32 %v2900, 2147483648
        %v2933 = vxor.u32 %v2901, 2147483648
        %v2934 = vxor.u32 %v2902, 2147483648
        %v2935 = vmul.f32 %v2927, 1.442695
        %v2936 = vpow.pop %v2935
        %v2937 = vmul.f32 %v2928, 1.442695
        %v2938 = vpow.pop %v2937
        %v2939 = vmul.f32 %v2929, 1.442695
        %v2940 = vpow.pop %v2939
        %v2941 = vmul.f32 %v2930, 1.442695
        %v2942 = vpow.pop %v2941
        %v2943 = vmul.f32 %v2931, 1.442695
        %v2944 = vpow.pop %v2943
        %v2945 = vmul.f32 %v2932, 1.442695
        %v2946 = vpow.pop %v2945
        %v2947 = vmul.f32 %v2933, 1.442695
        %v2948 = vpow.pop %v2947
        %v2949 = vmul.f32 %v2934, 1.442695
        %v2950 = vpow.pop %v2949
        %v2951 = vadd.f32 %v2936, 1.0
        %v2952 = vadd.f32 %v2938, 1.0
        %v2953 = vadd.f32 %v2940, 1.0
        %v2954 = vadd.f32 %v2942, 1.0
        %v2955 = vadd.f32 %v2944, 1.0
        %v2956 = vadd.f32 %v2946, 1.0
        %v2957 = vadd.f32 %v2948, 1.0
        %v2958 = vadd.f32 %v2950, 1.0
        %v2959 = vrcp.pop %v2951
        %v2960 = vmul.f32 1.0, %v2959
        %v2961 = vrcp.pop %v2952
        %v2962 = vmul.f32 1.0, %v2961
        %v2963 = vrcp.pop %v2953
        %v2964 = vmul.f32 1.0, %v2963
        %v2965 = vrcp.pop %v2954
        %v2966 = vmul.f32 1.0, %v2965
        %v2967 = vrcp.pop %v2955
        %v2968 = vmul.f32 1.0, %v2967
        %v2969 = vrcp.pop %v2956
        %v2970 = vmul.f32 1.0, %v2969
        %v2971 = vrcp.pop %v2957
        %v2972 = vmul.f32 1.0, %v2971
        %v2973 = vrcp.pop %v2958
        %v2974 = vmul.f32 1.0, %v2973
        %v2975 = vxor.u32 %v2903, 2147483648
        %v2976 = vxor.u32 %v2904, 2147483648
        %v2977 = vxor.u32 %v2905, 2147483648
        %v2978 = vxor.u32 %v2906, 2147483648
        %v2979 = vxor.u32 %v2907, 2147483648
        %v2980 = vxor.u32 %v2908, 2147483648
        %v2981 = vxor.u32 %v2909, 2147483648
        %v2982 = vxor.u32 %v2910, 2147483648
        %v2983 = vmul.f32 %v2975, 1.442695
        %v2984 = vpow.pop %v2983
        %v2985 = vmul.f32 %v2976, 1.442695
        %v2986 = vpow.pop %v2985
        %v2987 = vmul.f32 %v2977, 1.442695
        %v2988 = vpow.pop %v2987
        %v2989 = vmul.f32 %v2978, 1.442695
        %v2990 = vpow.pop %v2989
        %v2991 = vmul.f32 %v2979, 1.442695
        %v2992 = vpow.pop %v2991
        %v2993 = vmul.f32 %v2980, 1.442695
        %v2994 = vpow.pop %v2993
        %v2995 = vmul.f32 %v2981, 1.442695
        %v2996 = vpow.pop %v2995
        %v2997 = vmul.f32 %v2982, 1.442695
        %v2998 = vpow.pop %v2997
        %v2999 = vadd.f32 %v2984, 1.0
        %v3000 = vadd.f32 %v2986, 1.0
        %v3001 = vadd.f32 %v2988, 1.0
        %v3002 = vadd.f32 %v2990, 1.0
        %v3003 = vadd.f32 %v2992, 1.0
        %v3004 = vadd.f32 %v2994, 1.0
        %v3005 = vadd.f32 %v2996, 1.0
        %v3006 = vadd.f32 %v2998, 1.0
        %v3007 = vrcp.pop %v2999
        %v3008 = vmul.f32 1.0, %v3007
        %v3009 = vrcp.pop %v3000
        %v3010 = vmul.f32 1.0, %v3009
        %v3011 = vrcp.pop %v3001
        %v3012 = vmul.f32 1.0, %v3011
        %v3013 = vrcp.pop %v3002
        %v3014 = vmul.f32 1.0, %v3013
        %v3015 = vrcp.pop %v3003
        %v3016 = vmul.f32 1.0, %v3015
        %v3017 = vrcp.pop %v3004
        %v3018 = vmul.f32 1.0, %v3017
        %v3019 = vrcp.pop %v3005
        %v3020 = vmul.f32 1.0, %v3019
        %v3021 = vrcp.pop %v3006
        %v3022 = vmul.f32 1.0, %v3021
        %v3023 = vxor.u32 %v2911, 2147483648
        %v3024 = vxor.u32 %v2912, 2147483648
        %v3025 = vxor.u32 %v2913, 2147483648
        %v3026 = vxor.u32 %v2914, 2147483648
        %v3027 = vxor.u32 %v2915, 2147483648
        %v3028 = vxor.u32 %v2916, 2147483648
        %v3029 = vxor.u32 %v2917, 2147483648
        %v3030 = vxor.u32 %v2918, 2147483648
        %v3031 = vmul.f32 %v3023, 1.442695
        %v3032 = vpow.pop %v3031
        %v3033 = vmul.f32 %v3024, 1.442695
        %v3034 = vpow.pop %v3033
        %v3035 = vmul.f32 %v3025, 1.442695
        %v3036 = vpow.pop %v3035
        %v3037 = vmul.f32 %v3026, 1.442695
        %v3038 = vpow.pop %v3037
        %v3039 = vmul.f32 %v3027, 1.442695
        %v3040 = vpow.pop %v3039
        %v3041 = vmul.f32 %v3028, 1.442695
        %v3042 = vpow.pop %v3041
        %v3043 = vmul.f32 %v3029, 1.442695
        %v3044 = vpow.pop %v3043
        %v3045 = vmul.f32 %v3030, 1.442695
        %v3046 = vpow.pop %v3045
        %v3047 = vadd.f32 %v3032, 1.0
        %v3048 = vadd.f32 %v3034, 1.0
        %v3049 = vadd.f32 %v3036, 1.0
        %v3050 = vadd.f32 %v3038, 1.0
        %v3051 = vadd.f32 %v3040, 1.0
        %v3052 = vadd.f32 %v3042, 1.0
        %v3053 = vadd.f32 %v3044, 1.0
        %v3054 = vadd.f32 %v3046, 1.0
        %v3055 = vrcp.pop %v3047
        %v3056 = vmul.f32 1.0, %v3055
        %v3057 = vrcp.pop %v3048
        %v3058 = vmul.f32 1.0, %v3057
        %v3059 = vrcp.pop %v3049
        %v3060 = vmul.f32 1.0, %v3059
        %v3061 = vrcp.pop %v3050
        %v3062 = vmul.f32 1.0, %v3061
        %v3063 = vrcp.pop %v3051
        %v3064 = vmul.f32 1.0, %v3063
        %v3065 = vrcp.pop %v3052
        %v3066 = vmul.f32 1.0, %v3065
        %v3067 = vrcp.pop %v3053
        %v3068 = vmul.f32 1.0, %v3067
        %v3069 = vrcp.pop %v3054
        %v3070 = vmul.f32 1.0, %v3069
        %v3071 = vtanh.pop %v2919
        %v3072 = vtanh.pop %v2920
        %v3073 = vtanh.pop %v2921
        %v3074 = vtanh.pop %v2922
        %v3075 = vtanh.pop %v2923
        %v3076 = vtanh.pop %v2924
        %v3077 = vtanh.pop %v2925
        %v3078 = vtanh.pop %v2926
        %v3079 = vld [vmem:[%s280] sm:$0xff]
        %v3080 = vld [vmem:[%s280 + $0x8] sm:$0xff]
        %v3081 = vld [vmem:[%s280 + $0x10] sm:$0xff]
        %v3082 = vld [vmem:[%s280 + $0x18] sm:$0xff]
        %v3083 = vld [vmem:[%s280 + $0x20] sm:$0xff]
        %v3084 = vld [vmem:[%s280 + $0x28] sm:$0xff]
        %v3085 = vld [vmem:[%s280 + $0x30] sm:$0xff]
        %v3086 = vld [vmem:[%s280 + $0x38] sm:$0xff]
        %v3087 = vmul.f32 %v3008, %v3079
        %v3088 = vmul.f32 %v3010, %v3080
        %v3089 = vmul.f32 %v3012, %v3081
        %v3090 = vmul.f32 %v3014, %v3082
        %v3091 = vmul.f32 %v3016, %v3083
        %v3092 = vmul.f32 %v3018, %v3084
        %v3093 = vmul.f32 %v3020, %v3085
        %v3094 = vmul.f32 %v3022, %v3086
        %v3095 = vmul.f32 %v2960, %v3071
        %v3096 = vmul.f32 %v2962, %v3072
        %v3097 = vmul.f32 %v2964, %v3073
        %v3098 = vmul.f32 %v2966, %v3074
        %v3099 = vmul.f32 %v2968, %v3075
        %v3100 = vmul.f32 %v2970, %v3076
        %v3101 = vmul.f32 %v2972, %v3077
        %v3102 = vmul.f32 %v2974, %v3078
        %v3103 = vadd.f32 %v3087, %v3095
        %v3104 = vadd.f32 %v3088, %v3096
        %v3105 = vadd.f32 %v3089, %v3097
        %v3106 = vadd.f32 %v3090, %v3098
        %v3107 = vadd.f32 %v3091, %v3099
        %v3108 = vadd.f32 %v3092, %v3100
        %v3109 = vadd.f32 %v3093, %v3101
        %v3110 = vadd.f32 %v3094, %v3102
        %v3111 = vtanh.pop %v3103
        %v3112 = vtanh.pop %v3104
        %v3113 = vtanh.pop %v3105
        %v3114 = vtanh.pop %v3106
        %v3115 = vtanh.pop %v3107
        %v3116 = vtanh.pop %v3108
        %v3117 = vtanh.pop %v3109
        %v3118 = vtanh.pop %v3110
        %v3119 = vmul.f32 %v3056, %v3111
        %v3120 = vmul.f32 %v3058, %v3112
        %v3121 = vmul.f32 %v3060, %v3113
        %v3122 = vmul.f32 %v3062, %v3114
        %v3123 = vmul.f32 %v3064, %v3115
        %v3124 = vmul.f32 %v3066, %v3116
        %v3125 = vmul.f32 %v3068, %v3117
        %v3126 = vmul.f32 %v3070, %v3118
        %3127 = vst [vmem:[%s270] sm:$0xff] %v3103
        %3128 = vst [vmem:[%s270 + $0x8] sm:$0xff] %v3104
        %3129 = vst [vmem:[%s270 + $0x10] sm:$0xff] %v3105
        %3130 = vst [vmem:[%s270 + $0x18] sm:$0xff] %v3106
        %3131 = vst [vmem:[%s270 + $0x20] sm:$0xff] %v3107
        %3132 = vst [vmem:[%s270 + $0x28] sm:$0xff] %v3108
        %3133 = vst [vmem:[%s270 + $0x30] sm:$0xff] %v3109
        %3134 = vst [vmem:[%s270 + $0x38] sm:$0xff] %v3110
        %3135 = vst [vmem:[%s263] sm:$0xff] %v3119
        %3136 = vst [vmem:[%s263 + $0x8] sm:$0xff] %v3120
        %3137 = vst [vmem:[%s263 + $0x10] sm:$0xff] %v3121
        %3138 = vst [vmem:[%s263 + $0x18] sm:$0xff] %v3122
        %3139 = vst [vmem:[%s263 + $0x20] sm:$0xff] %v3123
        %3140 = vst [vmem:[%s263 + $0x28] sm:$0xff] %v3124
        %3141 = vst [vmem:[%s263 + $0x30] sm:$0xff] %v3125
        %3142 = vst [vmem:[%s263 + $0x38] sm:$0xff] %v3126
        %s3143 = sand.u32 %s147, 1
        %s3144 = scalar_lea.sflag [#allocation3], %s3143
        %s3145 = sand.u32 %s147, 1
        %s3146 = smul.addr %s3145, 64
        %s3147 = scalar_lea.vmem [#allocation2], %s3146
        %s3148 = sand.u32 %s173, 1
        %s3149 = scalar_lea.sflag [#allocation5], %s3148
        %s3150 = sand.u32 %s173, 1
        %s3151 = smul.addr %s3150, 64
        %s3152 = scalar_lea.vmem [#allocation4], %s3151
        // Predicated region
        $region41: #{tpu_custom_call.1} parent=39 // pred_check
          %p3153 = pneg %p157
        $region42: #{tpu_custom_call.1} parent=39 // pred_check_branch
          %3155 = sbr.rel (%p3153) target = $region44
        $region43: #{tpu_custom_call.1} parent=39 // pred_region
          %s3157 = ssub.s32 1024, 1024
          %3158 = vsyncadd %s3144, %s3157
          %s3159 = smul.addr %s24, 8
          %s3160 = smul.addr %s3159, 128
          %s3161 = scalar_lea.hbm %s5, %s3160
          %s3162 = sshll.u32 %s3147, 4
          %s3163 = int_to_ptr.vmem [resolvable:$true] %s3162
          %3168 = dma.vmem_to_hbm [thread:$0]  %s3163, 1024, %s3161, %s3144, 256, 256, 16
        $region44: #{tpu_custom_call.1} parent=39 // pred_fallthru
          _
        // Predicated region
        $region45: #{tpu_custom_call.1} parent=39 // pred_check
          %p3169 = pneg %p183
        $region46: #{tpu_custom_call.1} parent=39 // pred_check_branch
          %3171 = sbr.rel (%p3169) target = $region48
        $region47: #{tpu_custom_call.1} parent=39 // pred_region
          %s3173 = ssub.s32 1024, 1024
          %3174 = vsyncadd %s3149, %s3173
          %s3175 = smul.addr %s24, 8
          %s3176 = smul.addr %s3175, 128
          %s3177 = scalar_lea.hbm %s6, %s3176
          %s3178 = sshll.u32 %s3152, 4
          %s3179 = int_to_ptr.vmem [resolvable:$true] %s3178
          %3184 = dma.vmem_to_hbm [thread:$0]  %s3179, 1024, %s3177, %s3149, 256, 256, 16
        $region48: #{tpu_custom_call.1} parent=39 // pred_fallthru
          _
      $region40: #{tpu_custom_call.1} parent=5 // pred_fallthru
        _
      %p3185 = scmp.le.s32.totalorder 2, %s19
      // Predicated region
      $region49: #{tpu_custom_call.1} parent=5 // pred_check
        %p3186 = pneg %p3185
      $region50: #{tpu_custom_call.1} parent=5 // pred_check_branch
        %3188 = sbr.rel (%p3186) target = $region52
      $region51: #{tpu_custom_call.1} parent=5 // pred_region
        %s3189 = ssub.s32 %s19, 2
        // Predicated region
        $region53: #{tpu_custom_call.1} parent=51 // pred_check
          %p3190 = pneg %p163
        $region54: #{tpu_custom_call.1} parent=51 // pred_check_branch
          %3192 = sbr.rel (%p3190) target = $region56
        $region55: #{tpu_custom_call.1} parent=51 // pred_region
          %s3193 = sand.u32 %s148, 1
          %s3194 = scalar_lea.sflag [#allocation3], %s3193
          %s3195 = sand.u32 %s148, 1
          %s3196 = smul.addr %s3195, 64
          %s3197 = scalar_lea.vmem [#allocation2], %s3196
          %3198 = dma.done %s3194, 1024
        $region56: #{tpu_custom_call.1} parent=51 // pred_fallthru
          _
        // Predicated region
        $region57: #{tpu_custom_call.1} parent=51 // pred_check
          %p3199 = pneg %p189
        $region58: #{tpu_custom_call.1} parent=51 // pred_check_branch
          %3201 = sbr.rel (%p3199) target = $region60
        $region59: #{tpu_custom_call.1} parent=51 // pred_region
          %s3202 = sand.u32 %s174, 1
          %s3203 = scalar_lea.sflag [#allocation5], %s3202
          %s3204 = sand.u32 %s174, 1
          %s3205 = smul.addr %s3204, 64
          %s3206 = scalar_lea.vmem [#allocation4], %s3205
          %3207 = dma.done %s3203, 1024
        $region60: #{tpu_custom_call.1} parent=51 // pred_fallthru
          _
      $region52: #{tpu_custom_call.1} parent=5 // pred_fallthru
        _
    $region6: #{tpu_custom_call.1} parent=1 // loop_footer
      %s23 = sadd.s32 1, %s19
    $region7: #{tpu_custom_call.1} parent=1 // loop_footer_branch
      %18 = sbr.rel target = $region3
    $region8: #{tpu_custom_call.1} parent=1 // loop_exit
      _
    %3208 = vsyncpa [#allocation3], 1
    %s3209 = scalar_lea.sflag [#allocation3], 1
    %3210 = vsyncpa %s3209, 1
    %3211 = vsyncpa [#allocation5], 1
    %s3212 = scalar_lea.sflag [#allocation5], 1
    %3213 = vsyncpa %s3212, 1

// kernel: tpu_custom_call.1
$region0: #{tpu_custom_call.1}
  #allocation0 [shape = 'u32[]', space=smem, size = 0x4, offset = 0x4, fixed_abs, tag = 'smem constant byte address 0x4 - core index']
  #allocation1 [shape = 'u32[144,128]{1,0:T(1,128)}', space=vmem, size = 0x12000, scoped, tag = 'internal scratch']
  %s0 = inlined_call_operand.vmem [shape: bf16[2,36,256], index: 0, kind: input, shape index: {}]
  %s1 = inlined_call_operand.vmem [shape: bf16[9,128,36], index: 1, kind: input, shape index: {}]
  %s2 = inlined_call_operand.vmem [shape: f32[128,1], index: 2, kind: input, shape index: {}]
  %s3 = inlined_call_operand.vmem [shape: bf16[9,256], index: 3, kind: input, shape index: {}]
  %s4 = inlined_call_operand.vmem [shape: f32[2,32,256], index: 4, kind: input, shape index: {}]
  %s5 = inlined_call_operand.hbm [shape: f32[2,32,256], index: 5, kind: output, shape index: {0}]
  %s6 = inlined_call_operand.hbm [shape: f32[2,32,256], index: 6, kind: output, shape index: {1}]
  %7 = xla_tuple %s5, %s6
  %s8 = sld [smem:[#allocation0]]
  $region61: #{tpu_custom_call.1} parent=0
    _
  %s10 = ssub.s32 1, %s8
  %s11 = scalar_select 0, %s10, %s8
  $region1: #{tpu_custom_call.1} parent=0
    #allocation2 [shape = 'u8[65536]{0}', space=vmem, size = 0x10000, scoped, tag = 'output window, operand 0']
    #allocation3 [shape = 's32[2]{0}', space=sflag, size = 0x8, scoped, tag = 'scoped memory for tpu_custom_call.1']
    #allocation4 [shape = 'u8[65536]{0}', space=vmem, size = 0x10000, scoped, tag = 'output window, operand 1']
    #allocation5 [shape = 's32[2]{0}', space=sflag, size = 0x8, scoped, tag = 'scoped memory for tpu_custom_call.1']
    %12 = vsyncpa [#allocation3], 0
    %s13 = scalar_lea.sflag [#allocation3], 1
    %14 = vsyncpa %s13, 0
    %15 = vsyncpa [#allocation5], 0
    %s16 = scalar_lea.sflag [#allocation5], 1
    %17 = vsyncpa %s16, 0
    loop: start=0, step=1, limit=4
    $region2: #{tpu_custom_call.1} parent=1 // loop_pre_header
      _
    $region3: #{tpu_custom_call.1} parent=1 // loop_header
      %s19 = sphi 0, %s23
      %p20 = scmp.ge.s32.totalorder %s19, 4
      %s29 = sphi 0, %s31
      %s32 = sphi 0, %s29
      %s33 = sphi 0, %s32
      %s49 = sphi 0, %s33
      %s53 = sphi 0, %s53
      %s55 = sphi 0, %s53
      %s56 = sphi 0, %s55
      %s70 = sphi 0, %s56
      %s74 = sphi 0, %s74
      %s76 = sphi 0, %s74
      %s77 = sphi 0, %s76
      %s91 = sphi 0, %s77
      %s95 = sphi 0, %s95
      %s97 = sphi 0, %s95
      %s98 = sphi 0, %s97
      %s112 = sphi 0, %s98
      %s118 = sphi 0, %s120
      %s121 = sphi 0, %s118
      %s122 = sphi 0, %s121
      %s138 = sphi 0, %s122
      %s144 = sphi 0, %s146
      %s147 = sphi 0, %s144
      %s148 = sphi 0, %s147
      %s164 = sphi 0, %s148
      %s170 = sphi 0, %s172
      %s173 = sphi 0, %s170
      %s174 = sphi 0, %s173
      %s190 = sphi 0, %s174
    $region4: #{tpu_custom_call.1} parent=1 // loop_header_branch
      %22 = sbr.rel (%p20) target = $region8
    $region5: #{tpu_custom_call.1} parent=1 // loop_body
      %s24 = ssub.s32 %s19, 1
      %s25 = ssub.s32 %s19, 2
      %s26 = sadd.s32 %s19, 1
      %s27 = ssub.s32 %s19, %s26
      %p28 = scmp.eq.s32.totalorder %s27, 0
      %s30 = sadd.s32 %s29, 1
      %s31 = scalar_select %p28, %s29, %s30
      %p34 = pneg %p28
      %p35 = scmp.eq.s32.totalorder %s19, 1
      %p36 = por %p34, %p35
      %p37 = scmp.ne.s32.totalorder %s29, %s32
      %p38 = scmp.eq.s32.totalorder %s19, 0
      %p39 = por %p37, %p38
      %p40 = scmp.ne.s32.totalorder %s29, %s32
      %p41 = scmp.eq.s32.totalorder %s24, 1
      %p42 = por %p40, %p41
      %p43 = scmp.ne.s32.totalorder %s32, %s33
      %p44 = scmp.eq.s32.totalorder %s24, 0
      %p45 = por %p43, %p44
      %p46 = scmp.ne.s32.totalorder %s32, %s33
      %p47 = scmp.eq.s32.totalorder %s25, 1
      %p48 = por %p46, %p47
      %p50 = scmp.ne.s32.totalorder %s33, %s49
      %p51 = scmp.eq.s32.totalorder %s25, 0
      %p52 = por %p50, %p51
      %s54 = sadd.s32 %s53, 1
      %p57 = scmp.eq.s32.totalorder %s19, 1
      %p58 = scmp.ne.s32.totalorder %s53, %s55
      %p59 = scmp.eq.s32.totalorder %s19, 0
      %p60 = por %p58, %p59
      %p61 = scmp.ne.s32.totalorder %s53, %s55
      %p62 = scmp.eq.s32.totalorder %s24, 1
      %p63 = por %p61, %p62
      %p64 = scmp.ne.s32.totalorder %s55, %s56
      %p65 = scmp.eq.s32.totalorder %s24, 0
      %p66 = por %p64, %p65
      %p67 = scmp.ne.s32.totalorder %s55, %s56
      %p68 = scmp.eq.s32.totalorder %s25, 1
      %p69 = por %p67, %p68
      %p71 = scmp.ne.s32.totalorder %s56, %s70
      %p72 = scmp.eq.s32.totalorder %s25, 0
      %p73 = por %p71, %p72
      %s75 = sadd.s32 %s74, 1
      %p78 = scmp.eq.s32.totalorder %s19, 1
      %p79 = scmp.ne.s32.totalorder %s74, %s76
      %p80 = scmp.eq.s32.totalorder %s19, 0
      %p81 = por %p79, %p80
      %p82 = scmp.ne.s32.totalorder %s74, %s76
      %p83 = scmp.eq.s32.totalorder %s24, 1
      %p84 = por %p82, %p83
      %p85 = scmp.ne.s32.totalorder %s76, %s77
      %p86 = scmp.eq.s32.totalorder %s24, 0
      %p87 = por %p85, %p86
      %p88 = scmp.ne.s32.totalorder %s76, %s77
      %p89 = scmp.eq.s32.totalorder %s25, 1
      %p90 = por %p88, %p89
      %p92 = scmp.ne.s32.totalorder %s77, %s91
      %p93 = scmp.eq.s32.totalorder %s25, 0
      %p94 = por %p92, %p93
      %s96 = sadd.s32 %s95, 1
      %p99 = scmp.eq.s32.totalorder %s19, 1
      %p100 = scmp.ne.s32.totalorder %s95, %s97
      %p101 = scmp.eq.s32.totalorder %s19, 0
      %p102 = por %p100, %p101
      %p103 = scmp.ne.s32.totalorder %s95, %s97
      %p104 = scmp.eq.s32.totalorder %s24, 1
      %p105 = por %p103, %p104
      %p106 = scmp.ne.s32.totalorder %s97, %s98
      %p107 = scmp.eq.s32.totalorder %s24, 0
      %p108 = por %p106, %p107
      %p109 = scmp.ne.s32.totalorder %s97, %s98
      %p110 = scmp.eq.s32.totalorder %s25, 1
      %p111 = por %p109, %p110
      %p113 = scmp.ne.s32.totalorder %s98, %s112
      %p114 = scmp.eq.s32.totalorder %s25, 0
      %p115 = por %p113, %p114
      %s116 = ssub.s32 %s19, %s26
      %p117 = scmp.eq.s32.totalorder %s116, 0
      %s119 = sadd.s32 %s118, 1
      %s120 = scalar_select %p117, %s118, %s119
      %p123 = pneg %p117
      %p124 = scmp.eq.s32.totalorder %s19, 1
      %p125 = por %p123, %p124
      %p126 = scmp.ne.s32.totalorder %s118, %s121
      %p127 = scmp.eq.s32.totalorder %s19, 0
      %p128 = por %p126, %p127
      %p129 = scmp.ne.s32.totalorder %s118, %s121
      %p130 = scmp.eq.s32.totalorder %s24, 1
      %p131 = por %p129, %p130
      %p132 = scmp.ne.s32.totalorder %s121, %s122
      %p133 = scmp.eq.s32.totalorder %s24, 0
      %p134 = por %p132, %p133
      %p135 = scmp.ne.s32.totalorder %s121, %s122
      %p136 = scmp.eq.s32.totalorder %s25, 1
      %p137 = por %p135, %p136
      %p139 = scmp.ne.s32.totalorder %s122, %s138
      %p140 = scmp.eq.s32.totalorder %s25, 0
      %p141 = por %p139, %p140
      %s142 = ssub.s32 %s19, %s26
      %p143 = scmp.eq.s32.totalorder %s142, 0
      %s145 = sadd.s32 %s144, 1
      %s146 = scalar_select %p143, %s144, %s145
      %p149 = pneg %p143
      %p150 = scmp.eq.s32.totalorder %s19, 1
      %p151 = por %p149, %p150
      %p152 = scmp.ne.s32.totalorder %s144, %s147
      %p153 = scmp.eq.s32.totalorder %s19, 0
      %p154 = por %p152, %p153
      %p155 = scmp.ne.s32.totalorder %s144, %s147
      %p156 = scmp.eq.s32.totalorder %s24, 1
      %p157 = por %p155, %p156
      %p158 = scmp.ne.s32.totalorder %s147, %s148
      %p159 = scmp.eq.s32.totalorder %s24, 0
      %p160 = por %p158, %p159
      %p161 = scmp.ne.s32.totalorder %s147, %s148
      %p162 = scmp.eq.s32.totalorder %s25, 1
      %p163 = por %p161, %p162
      %p165 = scmp.ne.s32.totalorder %s148, %s164
      %p166 = scmp.eq.s32.totalorder %s25, 0
      %p167 = por %p165, %p166
      %s168 = ssub.s32 %s19, %s26
      %p169 = scmp.eq.s32.totalorder %s168, 0
      %s171 = sadd.s32 %s170, 1
      %s172 = scalar_select %p169, %s170, %s171
      %p175 = pneg %p169
      %p176 = scmp.eq.s32.totalorder %s19, 1
      %p177 = por %p175, %p176
      %p178 = scmp.ne.s32.totalorder %s170, %s173
      %p179 = scmp.eq.s32.totalorder %s19, 0
      %p180 = por %p178, %p179
      %p181 = scmp.ne.s32.totalorder %s170, %s173
      %p182 = scmp.eq.s32.totalorder %s24, 1
      %p183 = por %p181, %p182
      %p184 = scmp.ne.s32.totalorder %s173, %s174
      %p185 = scmp.eq.s32.totalorder %s24, 0
      %p186 = por %p184, %p185
      %p187 = scmp.ne.s32.totalorder %s173, %s174
      %p188 = scmp.eq.s32.totalorder %s25, 1
      %p189 = por %p187, %p188
      %p191 = scmp.ne.s32.totalorder %s174, %s190
      %p192 = scmp.eq.s32.totalorder %s25, 0
      %p193 = por %p191, %p192
      %p194 = scmp.le.s32.totalorder 1, %s19
      %p195 = scmp.lt.s32.totalorder %s19, 3
      %p196 = pnand %p194, %p195
      %p197 = pneg %p196
      // Predicated region
      $region9: #{tpu_custom_call.1} parent=5 // pred_check
        _
      $region10: #{tpu_custom_call.1} parent=5 // pred_check_branch
        %199 = sbr.rel (%p196) target = $region12
      $region11: #{tpu_custom_call.1} parent=5 // pred_region
        %s200 = ssub.s32 %s19, 1
        // Predicated region
        $region13: #{tpu_custom_call.1} parent=11 // pred_check
          %p201 = pneg %p66
        $region14: #{tpu_custom_call.1} parent=11 // pred_check_branch
          %203 = sbr.rel (%p201) target = $region16
        $region15: #{tpu_custom_call.1} parent=11 // pred_region
          _
        $region16: #{tpu_custom_call.1} parent=11 // pred_fallthru
          _
        // Predicated region
        $region17: #{tpu_custom_call.1} parent=11 // pred_check
          %p204 = pneg %p87
        $region18: #{tpu_custom_call.1} parent=11 // pred_check_branch
          %206 = sbr.rel (%p204) target = $region20
        $region19: #{tpu_custom_call.1} parent=11 // pred_region
          _
        $region20: #{tpu_custom_call.1} parent=11 // pred_fallthru
          _
        // Predicated region
        $region21: #{tpu_custom_call.1} parent=11 // pred_check
          %p207 = pneg %p108
        $region22: #{tpu_custom_call.1} parent=11 // pred_check_branch
          %209 = sbr.rel (%p207) target = $region24
        $region23: #{tpu_custom_call.1} parent=11 // pred_region
          _
        $region24: #{tpu_custom_call.1} parent=11 // pred_fallthru
          _
      $region12: #{tpu_custom_call.1} parent=5 // pred_fallthru
        _
      %p210 = scmp.lt.s32.totalorder %s19, 2
      // Predicated region
      $region25: #{tpu_custom_call.1} parent=5 // pred_check
        %p211 = pneg %p210
      $region26: #{tpu_custom_call.1} parent=5 // pred_check_branch
        %213 = sbr.rel (%p211) target = $region28
      $region27: #{tpu_custom_call.1} parent=5 // pred_region
        // Predicated region
        $region29: #{tpu_custom_call.1} parent=27 // pred_check
          %p214 = pneg %p39
        $region30: #{tpu_custom_call.1} parent=27 // pred_check_branch
          %216 = sbr.rel (%p214) target = $region32
        $region31: #{tpu_custom_call.1} parent=27 // pred_region
          %p217 = scmp.lt.s32.totalorder %s19, 1
          %s218 = scalar_select %p217, %s19, 1
          %s219 = smul.addr %s218, 10
          %s220 = smul.addr %s219, 4
          %s221 = scalar_lea.vmem %s0, %s220
        $region32: #{tpu_custom_call.1} parent=27 // pred_fallthru
          _
        // Predicated region
        $region33: #{tpu_custom_call.1} parent=27 // pred_check
          %p222 = pneg %p128
        $region34: #{tpu_custom_call.1} parent=27 // pred_check_branch
          %224 = sbr.rel (%p222) target = $region36
        $region35: #{tpu_custom_call.1} parent=27 // pred_region
          %p225 = scmp.lt.s32.totalorder %s19, 1
          %s226 = scalar_select %p225, %s19, 1
          %s227 = smul.addr %s226, 8
          %s228 = smul.addr %s227, 8
          %s229 = scalar_lea.vmem %s4, %s228
        $region36: #{tpu_custom_call.1} parent=27 // pred_fallthru
          _
      $region28: #{tpu_custom_call.1} parent=5 // pred_fallthru
        _
      %p230 = scmp.le.s32.totalorder 1, %s19
      %p231 = scmp.lt.s32.totalorder %s19, 3
      %p232 = pnand %p230, %p231
      %p233 = pneg %p232
      // Predicated region
      $region37: #{tpu_custom_call.1} parent=5 // pred_check
        _
      $region38: #{tpu_custom_call.1} parent=5 // pred_check_branch
        %235 = sbr.rel (%p232) target = $region40
      $region39: #{tpu_custom_call.1} parent=5 // pred_region
        %s236 = ssub.s32 %s19, 1
        %p237 = scmp.lt.s32.totalorder %s24, 1
        %s238 = scalar_select %p237, %s24, 1
        %s239 = smul.addr %s238, 10
        %s240 = smul.addr %s239, 4
        %s241 = scalar_lea.vmem %s0, %s240
        %p242 = pneg %p45
        %p243 = pneg %p42
        %p244 = pneg %p66
        %p245 = pneg %p63
        %p246 = pneg %p87
        %p247 = pneg %p84
        %p248 = pneg %p108
        %p249 = pneg %p105
        %p250 = scmp.lt.s32.totalorder %s24, 1
        %s251 = scalar_select %p250, %s24, 1
        %s252 = smul.addr %s251, 8
        %s253 = smul.addr %s252, 8
        %s254 = scalar_lea.vmem %s4, %s253
        %p255 = pneg %p134
        %p256 = pneg %p131
        %p257 = pneg %p160
        %p258 = pneg %p157
        %s259 = sand.u32 %s147, 1
        %s260 = scalar_lea.sflag [#allocation3], %s259
        %s261 = sand.u32 %s147, 1
        %s262 = smul.addr %s261, 64
        %s263 = scalar_lea.vmem [#allocation2], %s262
        %p264 = pneg %p186
        %p265 = pneg %p183
        %s266 = sand.u32 %s173, 1
        %s267 = scalar_lea.sflag [#allocation5], %s266
        %s268 = sand.u32 %s173, 1
        %s269 = smul.addr %s268, 64
        %s270 = scalar_lea.vmem [#allocation4], %s269
        %p271 = scmp.lt.s32.totalorder %s24, 1
        %s272 = scalar_select %p271, %s24, 1
        %s273 = smul.addr %s272, 10
        %s274 = smul.addr %s273, 4
        %s275 = scalar_lea.vmem %s0, %s274
        %p276 = scmp.lt.s32.totalorder %s24, 1
        %s277 = scalar_select %p276, %s24, 1
        %s278 = smul.addr %s277, 8
        %s279 = smul.addr %s278, 8
        %s280 = scalar_lea.vmem %s4, %s279
        %v282 = vld [vmem:[%s275] sm:$0xff]
        %v283 = vld [vmem:[%s275 + $0x8] sm:$0xff]
        %v284 = vld [vmem:[%s275 + $0x10] sm:$0xff]
        %v285 = vld [vmem:[%s275 + $0x18] sm:$0xff]
        %v286 = vld [vmem:[%s275 + $0x20] sm:$0x33]
        %v287 = vld [vmem:[%s1] sm:$0xf]
        %v288 = vld [vmem:[%s1 + $0x4] sm:$0xf]
        %v289 = vld [vmem:[%s1 + $0x8] sm:$0xf]
        %v290 = vld [vmem:[%s1 + $0xc] sm:$0xf]
        %v291 = vld [vmem:[%s1 + $0x10] sm:$0xf]
        %v292 = vld [vmem:[%s1 + $0x14] sm:$0xf]
        %v293 = vld [vmem:[%s1 + $0x18] sm:$0xf]
        %v294 = vld [vmem:[%s1 + $0x1c] sm:$0xf]
        %v295 = vld [vmem:[%s1 + $0x20] sm:$0xf]
        %v296 = vld [vmem:[%s1 + $0x24] sm:$0xf]
        %v297 = vld [vmem:[%s1 + $0x28] sm:$0xf]
        %v298 = vld [vmem:[%s1 + $0x2c] sm:$0xf]
        %v299 = vld [vmem:[%s1 + $0x30] sm:$0xf]
        %v300 = vld [vmem:[%s1 + $0x34] sm:$0xf]
        %v301 = vld [vmem:[%s1 + $0x38] sm:$0xf]
        %v302 = vld [vmem:[%s1 + $0x3c] sm:$0xf]
        %v303 = vld [vmem:[%s1 + $0x40] sm:$0xf]
        %v304 = vld [vmem:[%s1 + $0x44] sm:$0xf]
        %v305 = vld [vmem:[%s1 + $0x48] sm:$0xf]
        %v306 = vld [vmem:[%s1 + $0x4c] sm:$0xf]
        %v307 = vld [vmem:[%s1 + $0x50] sm:$0xf]
        %v308 = vld [vmem:[%s1 + $0x54] sm:$0xf]
        %v309 = vld [vmem:[%s1 + $0x58] sm:$0xf]
        %v310 = vld [vmem:[%s1 + $0x5c] sm:$0xf]
        %v311 = vld [vmem:[%s1 + $0x60] sm:$0xf]
        %v312 = vld [vmem:[%s1 + $0x64] sm:$0xf]
        %v313 = vld [vmem:[%s1 + $0x68] sm:$0xf]
        %v314 = vld [vmem:[%s1 + $0x6c] sm:$0xf]
        %v315 = vld [vmem:[%s1 + $0x70] sm:$0xf]
        %v316 = vld [vmem:[%s1 + $0x74] sm:$0xf]
        %v317 = vld [vmem:[%s1 + $0x78] sm:$0xf]
        %v318 = vld [vmem:[%s1 + $0x7c] sm:$0xf]
        %v319 = vld [vmem:[%s1 + $0x80] sm:$0xf]
        %v320 = vld [vmem:[%s1 + $0x84] sm:$0xf]
        %v321 = vld [vmem:[%s1 + $0x88] sm:$0xf]
        %v322 = vld [vmem:[%s1 + $0x8c] sm:$0xf]
        %v323 = vld [vmem:[%s1 + $0x90] sm:$0xf]
        %v324 = vld [vmem:[%s1 + $0x94] sm:$0xf]
        %v325 = vld [vmem:[%s1 + $0x98] sm:$0xf]
        %v326 = vld [vmem:[%s1 + $0x9c] sm:$0xf]
        %v327 = vld [vmem:[%s1 + $0xa0] sm:$0xf]
        %v328 = vld [vmem:[%s1 + $0xa4] sm:$0xf]
        %v329 = vld [vmem:[%s1 + $0xa8] sm:$0xf]
        %v330 = vld [vmem:[%s1 + $0xac] sm:$0xf]
        %v331 = vld [vmem:[%s1 + $0xb0] sm:$0xf]
        %v332 = vld [vmem:[%s1 + $0xb4] sm:$0xf]
        %v333 = vld [vmem:[%s1 + $0xb8] sm:$0xf]
        %v334 = vld [vmem:[%s1 + $0xbc] sm:$0xf]
        %v335 = vld [vmem:[%s1 + $0xc0] sm:$0xf]
        %v336 = vld [vmem:[%s1 + $0xc4] sm:$0xf]
        %v337 = vld [vmem:[%s1 + $0xc8] sm:$0xf]
        %v338 = vld [vmem:[%s1 + $0xcc] sm:$0xf]
        %v339 = vld [vmem:[%s1 + $0xd0] sm:$0xf]
        %v340 = vld [vmem:[%s1 + $0xd4] sm:$0xf]
        %v341 = vld [vmem:[%s1 + $0xd8] sm:$0xf]
        %v342 = vld [vmem:[%s1 + $0xdc] sm:$0xf]
        %v343 = vld [vmem:[%s1 + $0xe0] sm:$0xf]
        %v344 = vld [vmem:[%s1 + $0xe4] sm:$0xf]
        %v345 = vld [vmem:[%s1 + $0xe8] sm:$0xf]
        %v346 = vld [vmem:[%s1 + $0xec] sm:$0xf]
        %v347 = vld [vmem:[%s1 + $0xf0] sm:$0xf]
        %v348 = vld [vmem:[%s1 + $0xf4] sm:$0xf]
        %v349 = vld [vmem:[%s1 + $0xf8] sm:$0xf]
        %v350 = vld [vmem:[%s1 + $0xfc] sm:$0xf]
        %v351 = vld [vmem:[%s1 + $0x100] sm:$0xf]
        %v352 = vld [vmem:[%s1 + $0x104] sm:$0xf]
        %v353 = vld [vmem:[%s1 + $0x108] sm:$0xf]
        %v354 = vld [vmem:[%s1 + $0x10c] sm:$0xf]
        %v355 = vld [vmem:[%s1 + $0x110] sm:$0xf]
        %v356 = vld [vmem:[%s1 + $0x114] sm:$0xf]
        %v357 = vld [vmem:[%s1 + $0x118] sm:$0xf]
        %v358 = vld [vmem:[%s1 + $0x11c] sm:$0xf]
        %v359 = vld [vmem:[%s1 + $0x120] sm:$0xf]
        %v360 = vld [vmem:[%s1 + $0x124] sm:$0xf]
        %v361 = vld [vmem:[%s1 + $0x128] sm:$0xf]
        %v362 = vld [vmem:[%s1 + $0x12c] sm:$0xf]
        %v363 = vld [vmem:[%s1 + $0x130] sm:$0xf]
        %v364 = vld [vmem:[%s1 + $0x134] sm:$0xf]
        %v365 = vld [vmem:[%s1 + $0x138] sm:$0xf]
        %v366 = vld [vmem:[%s1 + $0x13c] sm:$0xf]
        %v367 = vld [vmem:[%s1 + $0x140] sm:$0xf]
        %v368 = vld [vmem:[%s1 + $0x144] sm:$0xf]
        %v369 = vld [vmem:[%s1 + $0x148] sm:$0xf]
        %v370 = vld [vmem:[%s1 + $0x14c] sm:$0xf]
        %v371 = vld [vmem:[%s1 + $0x150] sm:$0xf]
        %v372 = vld [vmem:[%s1 + $0x154] sm:$0xf]
        %v373 = vld [vmem:[%s1 + $0x158] sm:$0xf]
        %v374 = vld [vmem:[%s1 + $0x15c] sm:$0xf]
        %v375 = vld [vmem:[%s1 + $0x160] sm:$0xf]
        %v376 = vld [vmem:[%s1 + $0x164] sm:$0xf]
        %v377 = vld [vmem:[%s1 + $0x168] sm:$0xf]
        %v378 = vld [vmem:[%s1 + $0x16c] sm:$0xf]
        %v379 = vld [vmem:[%s1 + $0x170] sm:$0xf]
        %v380 = vld [vmem:[%s1 + $0x174] sm:$0xf]
        %v381 = vld [vmem:[%s1 + $0x178] sm:$0xf]
        %v382 = vld [vmem:[%s1 + $0x17c] sm:$0xf]
        %v383 = vld [vmem:[%s1 + $0x180] sm:$0xf]
        %v384 = vld [vmem:[%s1 + $0x184] sm:$0xf]
        %v385 = vld [vmem:[%s1 + $0x188] sm:$0xf]
        %v386 = vld [vmem:[%s1 + $0x18c] sm:$0xf]
        %v387 = vld [vmem:[%s1 + $0x190] sm:$0xf]
        %v388 = vld [vmem:[%s1 + $0x194] sm:$0xf]
        %v389 = vld [vmem:[%s1 + $0x198] sm:$0xf]
        %v390 = vld [vmem:[%s1 + $0x19c] sm:$0xf]
        %v391 = vld [vmem:[%s1 + $0x1a0] sm:$0xf]
        %v392 = vld [vmem:[%s1 + $0x1a4] sm:$0xf]
        %v393 = vld [vmem:[%s1 + $0x1a8] sm:$0xf]
        %v394 = vld [vmem:[%s1 + $0x1ac] sm:$0xf]
        %v395 = vld [vmem:[%s1 + $0x1b0] sm:$0xf]
        %v396 = vld [vmem:[%s1 + $0x1b4] sm:$0xf]
        %v397 = vld [vmem:[%s1 + $0x1b8] sm:$0xf]
        %v398 = vld [vmem:[%s1 + $0x1bc] sm:$0xf]
        %v399 = vld [vmem:[%s1 + $0x1c0] sm:$0xf]
        %v400 = vld [vmem:[%s1 + $0x1c4] sm:$0xf]
        %v401 = vld [vmem:[%s1 + $0x1c8] sm:$0xf]
        %v402 = vld [vmem:[%s1 + $0x1cc] sm:$0xf]
        %v403 = vld [vmem:[%s1 + $0x1d0] sm:$0xf]
        %v404 = vld [vmem:[%s1 + $0x1d4] sm:$0xf]
        %v405 = vld [vmem:[%s1 + $0x1d8] sm:$0xf]
        %v406 = vld [vmem:[%s1 + $0x1dc] sm:$0xf]
        %v407 = vld [vmem:[%s1 + $0x1e0] sm:$0xf]
        %v408 = vld [vmem:[%s1 + $0x1e4] sm:$0xf]
        %v409 = vld [vmem:[%s1 + $0x1e8] sm:$0xf]
        %v410 = vld [vmem:[%s1 + $0x1ec] sm:$0xf]
        %v411 = vld [vmem:[%s1 + $0x1f0] sm:$0xf]
        %v412 = vld [vmem:[%s1 + $0x1f4] sm:$0xf]
        %v413 = vld [vmem:[%s1 + $0x1f8] sm:$0xf]
        %v414 = vld [vmem:[%s1 + $0x1fc] sm:$0xf]
        %v415 = vld [vmem:[%s1 + $0x200] sm:$0xf]
        %v416 = vld [vmem:[%s1 + $0x204] sm:$0xf]
        %v417 = vld [vmem:[%s1 + $0x208] sm:$0xf]
        %v418 = vld [vmem:[%s1 + $0x20c] sm:$0xf]
        %v419 = vld [vmem:[%s1 + $0x210] sm:$0xf]
        %v420 = vld [vmem:[%s1 + $0x214] sm:$0xf]
        %v421 = vld [vmem:[%s1 + $0x218] sm:$0xf]
        %v422 = vld [vmem:[%s1 + $0x21c] sm:$0xf]
        %v423 = vld [vmem:[%s1 + $0x220] sm:$0xf]
        %v424 = vld [vmem:[%s1 + $0x224] sm:$0xf]
        %v425 = vld [vmem:[%s1 + $0x228] sm:$0xf]
        %v426 = vld [vmem:[%s1 + $0x22c] sm:$0xf]
        %v427 = vld [vmem:[%s1 + $0x230] sm:$0xf]
        %v428 = vld [vmem:[%s1 + $0x234] sm:$0xf]
        %v429 = vld [vmem:[%s1 + $0x238] sm:$0xf]
        %v430 = vld [vmem:[%s1 + $0x23c] sm:$0xf]
        %v431 = vld [vmem:[%s2] sm:$0xff]
        %v432 = vld [vmem:[%s2 + $0x8] sm:$0xff]
        %v433 = vld [vmem:[%s2 + $0x10] sm:$0xff]
        %v434 = vld [vmem:[%s2 + $0x18] sm:$0xff]
        %v435 = vld [vmem:[%s2 + $0x20] sm:$0xff]
        %v436 = vld [vmem:[%s2 + $0x28] sm:$0xff]
        %v437 = vld [vmem:[%s2 + $0x30] sm:$0xff]
        %v438 = vld [vmem:[%s2 + $0x38] sm:$0xff]
        %v439 = vld [vmem:[%s2 + $0x40] sm:$0xff]
        %v440 = vld [vmem:[%s2 + $0x48] sm:$0xff]
        %v441 = vld [vmem:[%s2 + $0x50] sm:$0xff]
        %v442 = vld [vmem:[%s2 + $0x58] sm:$0xff]
        %v443 = vld [vmem:[%s2 + $0x60] sm:$0xff]
        %v444 = vld [vmem:[%s2 + $0x68] sm:$0xff]
        %v445 = vld [vmem:[%s2 + $0x70] sm:$0xff]
        %v446 = vld [vmem:[%s2 + $0x78] sm:$0xff]
        %v447 = vld [vmem:[%s3] sm:$0xff]
        %v448 = vld [vmem:[%s3 + $0x8] sm:$0x11]
        %v454 = vunpack.c.h.b16 %v282
        %v455 = vunpack.c.h.b16 %v283
        %v456 = vunpack.c.h.b16 %v284
        %v457 = vunpack.c.h.b16 %v285
        %v458 = vunpack.c.h.b16 %v286
        %v459 = vpack.c.b16 %v455, %v454
        %v460 = vpack.c.b16 %v457, %v456
        %v461 = vpack.c.b16 %v458, %v458
        %462 = vrot.lane.b32.xlu0 %v459, 17
        %v463 = vpop.permute.xlu0 %462
        %464 = vrot.lane.b32.xlu0 %v460, 17
        %v465 = vpop.permute.xlu0 %464
        %466 = vrot.lane.b32.xlu0 %v461, 17
        %v467 = vpop.permute.xlu0 %466
        %v468 = vunpack.c.l.b16 %v282
        %v469 = vunpack.c.l.b16 %v283
        %v470 = vunpack.c.l.b16 %v284
        %v471 = vunpack.c.l.b16 %v285
        %v472 = vunpack.c.l.b16 %v286
        %v473 = vpack.c.b16 %v469, %v468
        %v474 = vpack.c.b16 %v471, %v470
        %v475 = vpack.c.b16 %v472, %v472
        %476 = vrot.lane.b32.xlu0 %v473, 17
        %v477 = vpop.permute.xlu0 %476
        %478 = vrot.lane.b32.xlu0 %v474, 17
        %v479 = vpop.permute.xlu0 %478
        %480 = vrot.lane.b32.xlu0 %v475, 17
        %v481 = vpop.permute.xlu0 %480
        %vm482 = vcmask 138240
        %v483 = vsel %vm482, %v477, %v463
        %v484 = vsel %vm482, %v479, %v465
        %v485 = vsel %vm482, %v481, %v467
        %vm489 = vcmask 138240
        %v492 = vsel %vm489, %v463, %v477
        %v496 = vsel %vm489, %v465, %v479
        %v500 = vsel %vm489, %v467, %v481
        %v503 = vunpack.c.l.b16 %v447
        %v504 = vunpack.c.h.b16 %v447
        %v505 = vpack.c.b16 %v503, %v503
        %v506 = vpack.c.b16 %v504, %v504
        %v508 = vpack.i.b16 %v505, %v505
        %v510 = vlaneseq
        %v511 = vshrl.u32 %v510, 7
        %v512 = vsub.s32 0, %v511
        %v513 = vrot.slane %v508, %v512
        %v515 = vpack.i.b16 %v506, %v506
        %v517 = vlaneseq
        %v518 = vshrl.u32 %v517, 7
        %v519 = vsub.s32 0, %v518
        %v520 = vrot.slane %v515, %v519
        %v521 = vmul.bf16 %v492, %v513
        %v522 = vmul.bf16 %v483, %v520
        %v523 = vmul.bf16 %v496, %v513
        %v524 = vmul.bf16 %v484, %v520
        %v525 = vmul.bf16 %v500, %v513
        %v526 = vmul.bf16 %v485, %v520
        %527 = vrot.lane.b32.xlu0 %v459, 16
        %v528 = vpop.permute.xlu0 %527
        %529 = vrot.lane.b32.xlu0 %v460, 16
        %v530 = vpop.permute.xlu0 %529
        %531 = vrot.lane.b32.xlu0 %v461, 16
        %v532 = vpop.permute.xlu0 %531
        %533 = vrot.lane.b32.xlu0 %v473, 16
        %v534 = vpop.permute.xlu0 %533
        %535 = vrot.lane.b32.xlu0 %v474, 16
        %v536 = vpop.permute.xlu0 %535
        %537 = vrot.lane.b32.xlu0 %v475, 16
        %v538 = vpop.permute.xlu0 %537
        %vm539 = vcmask 130048
        %v540 = vsel %vm539, %v534, %v528
        %v541 = vsel %vm539, %v536, %v530
        %v542 = vsel %vm539, %v538, %v532
        %vm546 = vcmask 130048
        %v549 = vsel %vm546, %v528, %v534
        %v553 = vsel %vm546, %v530, %v536
        %v557 = vsel %vm546, %v532, %v538
        %v559 = vshrl.u32 %v505, 16
        %v560 = vpack.i.b16 %v559, %v559
        %v562 = vlaneseq
        %v563 = vshrl.u32 %v562, 7
        %v564 = vsub.s32 0, %v563
        %v565 = vrot.slane %v560, %v564
        %v566 = vshrl.u32 %v506, 16
        %v567 = vpack.i.b16 %v566, %v566
        %v569 = vlaneseq
        %v570 = vshrl.u32 %v569, 7
        %v571 = vsub.s32 0, %v570
        %v572 = vrot.slane %v567, %v571
        %v573 = vmul.bf16 %v549, %v565
        %v574 = vmul.bf16 %v540, %v572
        %v575 = vmul.bf16 %v553, %v565
        %v576 = vmul.bf16 %v541, %v572
        %v577 = vmul.bf16 %v557, %v565
        %v578 = vmul.bf16 %v542, %v572
        %579 = vrot.lane.b32.xlu0 %v459, 15
        %v580 = vpop.permute.xlu0 %579
        %581 = vrot.lane.b32.xlu0 %v460, 15
        %v582 = vpop.permute.xlu0 %581
        %583 = vrot.lane.b32.xlu0 %v461, 15
        %v584 = vpop.permute.xlu0 %583
        %585 = vrot.lane.b32.xlu0 %v473, 15
        %v586 = vpop.permute.xlu0 %585
        %587 = vrot.lane.b32.xlu0 %v474, 15
        %v588 = vpop.permute.xlu0 %587
        %589 = vrot.lane.b32.xlu0 %v475, 15
        %v590 = vpop.permute.xlu0 %589
        %vm591 = vcmask 121856
        %v592 = vsel %vm591, %v586, %v580
        %v593 = vsel %vm591, %v588, %v582
        %v594 = vsel %vm591, %v590, %v584
        %vm598 = vcmask 121856
        %v601 = vsel %vm598, %v580, %v586
        %v605 = vsel %vm598, %v582, %v588
        %v609 = vsel %vm598, %v584, %v590
        %v611 = vlaneseq
        %v612 = vshrl.u32 %v611, 7
        %v613 = vsub.s32 1, %v612
        %v614 = vrot.slane %v508, %v613
        %v615 = vlaneseq
        %v616 = vshrl.u32 %v615, 7
        %v617 = vsub.s32 1, %v616
        %v618 = vrot.slane %v515, %v617
        %v619 = vmul.bf16 %v601, %v614
        %v620 = vmul.bf16 %v592, %v618
        %v621 = vmul.bf16 %v605, %v614
        %v622 = vmul.bf16 %v593, %v618
        %v623 = vmul.bf16 %v609, %v614
        %v624 = vmul.bf16 %v594, %v618
        %625 = vrot.lane.b32.xlu0 %v459, 1
        %v626 = vpop.permute.xlu0 %625
        %627 = vrot.lane.b32.xlu0 %v460, 1
        %v628 = vpop.permute.xlu0 %627
        %629 = vrot.lane.b32.xlu0 %v461, 1
        %v630 = vpop.permute.xlu0 %629
        %631 = vrot.lane.b32.xlu0 %v473, 1
        %v632 = vpop.permute.xlu0 %631
        %633 = vrot.lane.b32.xlu0 %v474, 1
        %v634 = vpop.permute.xlu0 %633
        %635 = vrot.lane.b32.xlu0 %v475, 1
        %v636 = vpop.permute.xlu0 %635
        %vm637 = vcmask 7168
        %v638 = vsel %vm637, %v632, %v626
        %v639 = vsel %vm637, %v634, %v628
        %v640 = vsel %vm637, %v636, %v630
        %vm644 = vcmask 7168
        %v647 = vsel %vm644, %v626, %v632
        %v651 = vsel %vm644, %v628, %v634
        %v655 = vsel %vm644, %v630, %v636
        %v657 = vlaneseq
        %v658 = vshrl.u32 %v657, 7
        %v659 = vsub.s32 1, %v658
        %v660 = vrot.slane %v560, %v659
        %v661 = vlaneseq
        %v662 = vshrl.u32 %v661, 7
        %v663 = vsub.s32 1, %v662
        %v664 = vrot.slane %v567, %v663
        %v665 = vmul.bf16 %v647, %v660
        %v666 = vmul.bf16 %v638, %v664
        %v667 = vmul.bf16 %v651, %v660
        %v668 = vmul.bf16 %v639, %v664
        %v669 = vmul.bf16 %v655, %v660
        %v670 = vmul.bf16 %v640, %v664
        %v671 = vlaneseq
        %v672 = vshrl.u32 %v671, 7
        %v673 = vsub.s32 2, %v672
        %v674 = vrot.slane %v508, %v673
        %v675 = vlaneseq
        %v676 = vshrl.u32 %v675, 7
        %v677 = vsub.s32 2, %v676
        %v678 = vrot.slane %v515, %v677
        %v681 = vunpack.c.l.b16 %v674
        %v682 = vunpack.c.l.b16 %v678
        %v683 = vpack.c.b16 %v682, %v681
        %v685 = vmul.bf16 %v282, %v683
        %v686 = vmul.bf16 %v283, %v683
        %v687 = vmul.bf16 %v284, %v683
        %v688 = vmul.bf16 %v285, %v683
        %v689 = vmul.bf16 %v286, %v683
        %690 = vrot.lane.b32.xlu0 %v473, 127
        %v691 = vpop.permute.xlu0 %690
        %692 = vrot.lane.b32.xlu0 %v459, 127
        %v693 = vpop.permute.xlu0 %692
        %694 = vrot.lane.b32.xlu0 %v474, 127
        %v695 = vpop.permute.xlu0 %694
        %696 = vrot.lane.b32.xlu0 %v460, 127
        %v697 = vpop.permute.xlu0 %696
        %698 = vrot.lane.b32.xlu0 %v475, 127
        %v699 = vpop.permute.xlu0 %698
        %700 = vrot.lane.b32.xlu0 %v461, 127
        %v701 = vpop.permute.xlu0 %700
        %vm702 = vcmask 1039360
        %v703 = vsel %vm702, %v691, %v693
        %v704 = vsel %vm702, %v695, %v697
        %v705 = vsel %vm702, %v699, %v701
        %vm709 = vcmask 1039360
        %v712 = vsel %vm709, %v693, %v691
        %v716 = vsel %vm709, %v697, %v695
        %v720 = vsel %vm709, %v701, %v699
        %v722 = vlaneseq
        %v723 = vshrl.u32 %v722, 7
        %v724 = vsub.s32 2, %v723
        %v725 = vrot.slane %v560, %v724
        %v726 = vlaneseq
        %v727 = vshrl.u32 %v726, 7
        %v728 = vsub.s32 2, %v727
        %v729 = vrot.slane %v567, %v728
        %v730 = vmul.bf16 %v703, %v725
        %v731 = vmul.bf16 %v712, %v729
        %v732 = vmul.bf16 %v704, %v725
        %v733 = vmul.bf16 %v716, %v729
        %v734 = vmul.bf16 %v705, %v725
        %v735 = vmul.bf16 %v720, %v729
        %736 = vrot.lane.b32.xlu0 %v473, 113
        %v737 = vpop.permute.xlu0 %736
        %738 = vrot.lane.b32.xlu0 %v459, 113
        %v739 = vpop.permute.xlu0 %738
        %740 = vrot.lane.b32.xlu0 %v474, 113
        %v741 = vpop.permute.xlu0 %740
        %742 = vrot.lane.b32.xlu0 %v460, 113
        %v743 = vpop.permute.xlu0 %742
        %744 = vrot.lane.b32.xlu0 %v475, 113
        %v745 = vpop.permute.xlu0 %744
        %746 = vrot.lane.b32.xlu0 %v461, 113
        %v747 = vpop.permute.xlu0 %746
        %vm748 = vcmask 924672
        %v749 = vsel %vm748, %v737, %v739
        %v750 = vsel %vm748, %v741, %v743
        %v751 = vsel %vm748, %v745, %v747
        %vm755 = vcmask 924672
        %v758 = vsel %vm755, %v739, %v737
        %v762 = vsel %vm755, %v743, %v741
        %v766 = vsel %vm755, %v747, %v745
        %v768 = vlaneseq
        %v769 = vshrl.u32 %v768, 7
        %v770 = vsub.s32 3, %v769
        %v771 = vrot.slane %v508, %v770
        %v772 = vlaneseq
        %v773 = vshrl.u32 %v772, 7
        %v774 = vsub.s32 3, %v773
        %v775 = vrot.slane %v515, %v774
        %v776 = vmul.bf16 %v749, %v771
        %v777 = vmul.bf16 %v758, %v775
        %v778 = vmul.bf16 %v750, %v771
        %v779 = vmul.bf16 %v762, %v775
        %v780 = vmul.bf16 %v751, %v771
        %v781 = vmul.bf16 %v766, %v775
        %782 = vrot.lane.b32.xlu0 %v473, 112
        %v783 = vpop.permute.xlu0 %782
        %784 = vrot.lane.b32.xlu0 %v459, 112
        %v785 = vpop.permute.xlu0 %784
        %786 = vrot.lane.b32.xlu0 %v474, 112
        %v787 = vpop.permute.xlu0 %786
        %788 = vrot.lane.b32.xlu0 %v460, 112
        %v789 = vpop.permute.xlu0 %788
        %790 = vrot.lane.b32.xlu0 %v475, 112
        %v791 = vpop.permute.xlu0 %790
        %792 = vrot.lane.b32.xlu0 %v461, 112
        %v793 = vpop.permute.xlu0 %792
        %vm794 = vcmask 916480
        %v795 = vsel %vm794, %v783, %v785
        %v796 = vsel %vm794, %v787, %v789
        %v797 = vsel %vm794, %v791, %v793
        %vm801 = vcmask 916480
        %v804 = vsel %vm801, %v785, %v783
        %v808 = vsel %vm801, %v789, %v787
        %v812 = vsel %vm801, %v793, %v791
        %v814 = vlaneseq
        %v815 = vshrl.u32 %v814, 7
        %v816 = vsub.s32 3, %v815
        %v817 = vrot.slane %v560, %v816
        %v818 = vlaneseq
        %v819 = vshrl.u32 %v818, 7
        %v820 = vsub.s32 3, %v819
        %v821 = vrot.slane %v567, %v820
        %v822 = vmul.bf16 %v795, %v817
        %v823 = vmul.bf16 %v804, %v821
        %v824 = vmul.bf16 %v796, %v817
        %v825 = vmul.bf16 %v808, %v821
        %v826 = vmul.bf16 %v797, %v817
        %v827 = vmul.bf16 %v812, %v821
        %828 = vrot.lane.b32.xlu0 %v473, 111
        %v829 = vpop.permute.xlu0 %828
        %830 = vrot.lane.b32.xlu0 %v459, 111
        %v831 = vpop.permute.xlu0 %830
        %832 = vrot.lane.b32.xlu0 %v474, 111
        %v833 = vpop.permute.xlu0 %832
        %834 = vrot.lane.b32.xlu0 %v460, 111
        %v835 = vpop.permute.xlu0 %834
        %836 = vrot.lane.b32.xlu0 %v475, 111
        %v837 = vpop.permute.xlu0 %836
        %838 = vrot.lane.b32.xlu0 %v461, 111
        %v839 = vpop.permute.xlu0 %838
        %vm840 = vcmask 908288
        %v841 = vsel %vm840, %v829, %v831
        %v842 = vsel %vm840, %v833, %v835
        %v843 = vsel %vm840, %v837, %v839
        %vm847 = vcmask 908288
        %v850 = vsel %vm847, %v831, %v829
        %v854 = vsel %vm847, %v835, %v833
        %v858 = vsel %vm847, %v839, %v837
        %v861 = vunpack.c.l.b16 %v448
        %v862 = vunpack.c.h.b16 %v448
        %v863 = vpack.c.b16 %v861, %v861
        %v864 = vpack.c.b16 %v862, %v862
        %v866 = vpack.i.b16 %v863, %v863
        %v868 = vlaneseq
        %v869 = vshrl.u32 %v868, 7
        %v870 = vsub.s32 0, %v869
        %v871 = vrot.slane %v866, %v870
        %v873 = vpack.i.b16 %v864, %v864
        %v875 = vlaneseq
        %v876 = vshrl.u32 %v875, 7
        %v877 = vsub.s32 0, %v876
        %v878 = vrot.slane %v873, %v877
        %v879 = vmul.bf16 %v841, %v871
        %v880 = vmul.bf16 %v850, %v878
        %v881 = vmul.bf16 %v842, %v871
        %v882 = vmul.bf16 %v854, %v878
        %v883 = vmul.bf16 %v843, %v871
        %v884 = vmul.bf16 %v858, %v878
        %v901 = vunpack.c.l.b16 %v287
        %v902 = vunpack.c.l.b16 %v288
        %v903 = vunpack.c.l.b16 %v289
        %v904 = vunpack.c.l.b16 %v290
        %v905 = vunpack.c.l.b16 %v291
        %v906 = vunpack.c.l.b16 %v292
        %v907 = vunpack.c.l.b16 %v293
        %v908 = vunpack.c.l.b16 %v294
        %v909 = vunpack.c.l.b16 %v295
        %v910 = vunpack.c.l.b16 %v296
        %v911 = vunpack.c.l.b16 %v297
        %v912 = vunpack.c.l.b16 %v298
        %v913 = vunpack.c.l.b16 %v299
        %v914 = vunpack.c.l.b16 %v300
        %v915 = vunpack.c.l.b16 %v301
        %v916 = vunpack.c.l.b16 %v302
        %v917 = vpack.c.b16 %v902, %v901
        %v918 = vpack.c.b16 %v904, %v903
        %v919 = vpack.c.b16 %v906, %v905
        %v920 = vpack.c.b16 %v908, %v907
        %v921 = vpack.c.b16 %v910, %v909
        %v922 = vpack.c.b16 %v912, %v911
        %v923 = vpack.c.b16 %v914, %v913
        %v924 = vpack.c.b16 %v916, %v915
        %vm925 = vcmask 293888
        %v927 = vsel %vm925, %v917, 0
        %v930 = vsel %vm925, %v918, 0
        %v933 = vsel %vm925, %v919, 0
        %v936 = vsel %vm925, %v920, 0
        %v939 = vsel %vm925, %v921, 0
        %v942 = vsel %vm925, %v922, 0
        %v945 = vsel %vm925, %v923, 0
        %v948 = vsel %vm925, %v924, 0
        %vm950 = vcmask 1041408
        %v952 = vsel %vm950, %v525, 0
        %v955 = vsel %vm950, %v526, 0
        %957 = vmatprep.subr.bf16.mxu0 0
        %958 = vmatpush1.bf16.msra.mxu0 0
        %959 = vmatprep.subr.bf16.mxu0 0
        %960 = vmatpush1.bf16.msra.mxu0 0
        %961 = vmatprep.subr.bf16.mxu0 0
        %962 = vmatpush1.bf16.msra.mxu0 0
        %963 = vmatprep.subr.bf16.mxu0 0
        %964 = vmatpush1.bf16.msra.mxu0 0
        %965 = vmatprep.subr.bf16.mxu0 0
        %966 = vmatpush1.bf16.msra.mxu0 0
        %967 = vmatprep.subr.bf16.mxu0 %v955
        %968 = vmatpush1.bf16.msra.mxu0 %v952
        %969 = vmatprep.subr.bf16.mxu0 %v524
        %970 = vmatpush1.bf16.msra.mxu0 %v523
        %971 = vmatprep.subr.bf16.mxu0 %v522
        %972 = vmatpush1.bf16.msra.mxu0 %v521
        %973 = vmatprep.subr.bf16.mxu0 0
        %974 = vmatpush2.bf16.msra.mxu0 0
        %975 = vmatprep.subr.bf16.mxu0 0
        %976 = vmatpush2.bf16.msra.mxu0 0
        %977 = vmatprep.subr.bf16.mxu0 0
        %978 = vmatpush2.bf16.msra.mxu0 0
        %979 = vmatprep.subr.bf16.mxu0 0
        %980 = vmatpush2.bf16.msra.mxu0 0
        %981 = vmatprep.subr.bf16.mxu0 0
        %982 = vmatpush2.bf16.msra.mxu0 0
        %983 = vmatprep.subr.bf16.mxu0 0
        %984 = vmatpush2.bf16.msra.mxu0 0
        %985 = vmatprep.subr.bf16.mxu0 0
        %986 = vmatpush2.bf16.msra.mxu0 0
        %987 = vmatprep.subr.bf16.mxu0 0
        %988 = vmatpush2.bf16.msra.mxu0 0
        %989 = vmatprep.mubr.bf16.mxu0 0
        %990 = vmatmul.mubr.bf16.gmra.mxu0 %v927
        %v991 = vpop.f32.mrf.mxu0
        %v992 = vadd.f32 0.0, %v991
        %v993 = vpop.f32.mrf.mxu0
        %v994 = vadd.f32 0.0, %v993
        %v995 = vpop.f32.mrf.mxu0
        %v996 = vadd.f32 0.0, %v995
        %v997 = vpop.f32.mrf.mxu0
        %v998 = vadd.f32 0.0, %v997
        %999 = vmatprep.mubr.bf16.mxu0 0
        %1000 = vmatmul.mubr.bf16.gmra.mxu0 %v930
        %v1001 = vpop.f32.mrf.mxu0
        %v1002 = vadd.f32 0.0, %v1001
        %v1003 = vpop.f32.mrf.mxu0
        %v1004 = vadd.f32 0.0, %v1003
        %v1005 = vpop.f32.mrf.mxu0
        %v1006 = vadd.f32 0.0, %v1005
        %v1007 = vpop.f32.mrf.mxu0
        %v1008 = vadd.f32 0.0, %v1007
        %1009 = vmatprep.mubr.bf16.mxu0 0
        %1010 = vmatmul.mubr.bf16.gmra.mxu0 %v933
        %v1011 = vpop.f32.mrf.mxu0
        %v1012 = vadd.f32 0.0, %v1011
        %v1013 = vpop.f32.mrf.mxu0
        %v1014 = vadd.f32 0.0, %v1013
        %v1015 = vpop.f32.mrf.mxu0
        %v1016 = vadd.f32 0.0, %v1015
        %v1017 = vpop.f32.mrf.mxu0
        %v1018 = vadd.f32 0.0, %v1017
        %1019 = vmatprep.mubr.bf16.mxu0 0
        %1020 = vmatmul.mubr.bf16.gmra.mxu0 %v936
        %v1021 = vpop.f32.mrf.mxu0
        %v1022 = vadd.f32 0.0, %v1021
        %v1023 = vpop.f32.mrf.mxu0
        %v1024 = vadd.f32 0.0, %v1023
        %v1025 = vpop.f32.mrf.mxu0
        %v1026 = vadd.f32 0.0, %v1025
        %v1027 = vpop.f32.mrf.mxu0
        %v1028 = vadd.f32 0.0, %v1027
        %1029 = vmatprep.mubr.bf16.mxu0 0
        %1030 = vmatmul.mubr.bf16.gmra.mxu0 %v939
        %v1031 = vpop.f32.mrf.mxu0
        %v1032 = vadd.f32 0.0, %v1031
        %v1033 = vpop.f32.mrf.mxu0
        %v1034 = vadd.f32 0.0, %v1033
        %v1035 = vpop.f32.mrf.mxu0
        %v1036 = vadd.f32 0.0, %v1035
        %v1037 = vpop.f32.mrf.mxu0
        %v1038 = vadd.f32 0.0, %v1037
        %1039 = vmatprep.mubr.bf16.mxu0 0
        %1040 = vmatmul.mubr.bf16.gmra.mxu0 %v942
        %v1041 = vpop.f32.mrf.mxu0
        %v1042 = vadd.f32 0.0, %v1041
        %v1043 = vpop.f32.mrf.mxu0
        %v1044 = vadd.f32 0.0, %v1043
        %v1045 = vpop.f32.mrf.mxu0
        %v1046 = vadd.f32 0.0, %v1045
        %v1047 = vpop.f32.mrf.mxu0
        %v1048 = vadd.f32 0.0, %v1047
        %1049 = vmatprep.mubr.bf16.mxu0 0
        %1050 = vmatmul.mubr.bf16.gmra.mxu0 %v945
        %v1051 = vpop.f32.mrf.mxu0
        %v1052 = vadd.f32 0.0, %v1051
        %v1053 = vpop.f32.mrf.mxu0
        %v1054 = vadd.f32 0.0, %v1053
        %v1055 = vpop.f32.mrf.mxu0
        %v1056 = vadd.f32 0.0, %v1055
        %v1057 = vpop.f32.mrf.mxu0
        %v1058 = vadd.f32 0.0, %v1057
        %1059 = vmatprep.mubr.bf16.mxu0 0
        %1060 = vmatmul.mubr.bf16.gmra.mxu0 %v948
        %v1061 = vpop.f32.mrf.mxu0
        %v1062 = vadd.f32 0.0, %v1061
        %v1063 = vpop.f32.mrf.mxu0
        %v1064 = vadd.f32 0.0, %v1063
        %v1065 = vpop.f32.mrf.mxu0
        %v1066 = vadd.f32 0.0, %v1065
        %v1067 = vpop.f32.mrf.mxu0
        %v1068 = vadd.f32 0.0, %v1067
        %1069 = vdwg.mxu0
        %1071 = vset.pattern.permute.xlu0 0
        %1072 = vperm.xlu0 %1071, %v431
        %v1073 = vpop.permute.xlu0 %1072
        %1076 = vset.pattern.permute.xlu0 0
        %1077 = vperm.xlu0 %1076, %v432
        %v1078 = vpop.permute.xlu0 %1077
        %1081 = vset.pattern.permute.xlu0 0
        %1082 = vperm.xlu0 %1081, %v433
        %v1083 = vpop.permute.xlu0 %1082
        %1086 = vset.pattern.permute.xlu0 0
        %1087 = vperm.xlu0 %1086, %v434
        %v1088 = vpop.permute.xlu0 %1087
        %1091 = vset.pattern.permute.xlu0 0
        %1092 = vperm.xlu0 %1091, %v435
        %v1093 = vpop.permute.xlu0 %1092
        %1096 = vset.pattern.permute.xlu0 0
        %1097 = vperm.xlu0 %1096, %v436
        %v1098 = vpop.permute.xlu0 %1097
        %1101 = vset.pattern.permute.xlu0 0
        %1102 = vperm.xlu0 %1101, %v437
        %v1103 = vpop.permute.xlu0 %1102
        %1106 = vset.pattern.permute.xlu0 0
        %1107 = vperm.xlu0 %1106, %v438
        %v1108 = vpop.permute.xlu0 %1107
        %1111 = vset.pattern.permute.xlu0 0
        %1112 = vperm.xlu0 %1111, %v439
        %v1113 = vpop.permute.xlu0 %1112
        %1116 = vset.pattern.permute.xlu0 0
        %1117 = vperm.xlu0 %1116, %v440
        %v1118 = vpop.permute.xlu0 %1117
        %1121 = vset.pattern.permute.xlu0 0
        %1122 = vperm.xlu0 %1121, %v441
        %v1123 = vpop.permute.xlu0 %1122
        %1126 = vset.pattern.permute.xlu0 0
        %1127 = vperm.xlu0 %1126, %v442
        %v1128 = vpop.permute.xlu0 %1127
        %1131 = vset.pattern.permute.xlu0 0
        %1132 = vperm.xlu0 %1131, %v443
        %v1133 = vpop.permute.xlu0 %1132
        %1136 = vset.pattern.permute.xlu0 0
        %1137 = vperm.xlu0 %1136, %v444
        %v1138 = vpop.permute.xlu0 %1137
        %1141 = vset.pattern.permute.xlu0 0
        %1142 = vperm.xlu0 %1141, %v445
        %v1143 = vpop.permute.xlu0 %1142
        %1146 = vset.pattern.permute.xlu0 0
        %1147 = vperm.xlu0 %1146, %v446
        %v1148 = vpop.permute.xlu0 %1147
        %v1150 = vadd.f32 %v1073, %v992
        %v1151 = vadd.f32 %v1073, %v994
        %v1152 = vadd.f32 %v1078, %v996
        %v1153 = vadd.f32 %v1078, %v998
        %v1154 = vadd.f32 %v1083, %v1002
        %v1155 = vadd.f32 %v1083, %v1004
        %v1156 = vadd.f32 %v1088, %v1006
        %v1157 = vadd.f32 %v1088, %v1008
        %v1158 = vadd.f32 %v1093, %v1012
        %v1159 = vadd.f32 %v1093, %v1014
        %v1160 = vadd.f32 %v1098, %v1016
        %v1161 = vadd.f32 %v1098, %v1018
        %v1162 = vadd.f32 %v1103, %v1022
        %v1163 = vadd.f32 %v1103, %v1024
        %v1164 = vadd.f32 %v1108, %v1026
        %v1165 = vadd.f32 %v1108, %v1028
        %v1166 = vadd.f32 %v1113, %v1032
        %v1167 = vadd.f32 %v1113, %v1034
        %v1168 = vadd.f32 %v1118, %v1036
        %v1169 = vadd.f32 %v1118, %v1038
        %v1170 = vadd.f32 %v1123, %v1042
        %v1171 = vadd.f32 %v1123, %v1044
        %v1172 = vadd.f32 %v1128, %v1046
        %v1173 = vadd.f32 %v1128, %v1048
        %v1174 = vadd.f32 %v1133, %v1052
        %v1175 = vadd.f32 %v1133, %v1054
        %v1176 = vadd.f32 %v1138, %v1056
        %v1177 = vadd.f32 %v1138, %v1058
        %v1178 = vadd.f32 %v1143, %v1062
        %v1179 = vadd.f32 %v1143, %v1064
        %v1180 = vadd.f32 %v1148, %v1066
        %v1181 = vadd.f32 %v1148, %v1068
        %v1198 = vunpack.c.l.b16 %v303
        %v1199 = vunpack.c.l.b16 %v304
        %v1200 = vunpack.c.l.b16 %v305
        %v1201 = vunpack.c.l.b16 %v306
        %v1202 = vunpack.c.l.b16 %v307
        %v1203 = vunpack.c.l.b16 %v308
        %v1204 = vunpack.c.l.b16 %v309
        %v1205 = vunpack.c.l.b16 %v310
        %v1206 = vunpack.c.l.b16 %v311
        %v1207 = vunpack.c.l.b16 %v312
        %v1208 = vunpack.c.l.b16 %v313
        %v1209 = vunpack.c.l.b16 %v314
        %v1210 = vunpack.c.l.b16 %v315
        %v1211 = vunpack.c.l.b16 %v316
        %v1212 = vunpack.c.l.b16 %v317
        %v1213 = vunpack.c.l.b16 %v318
        %v1214 = vpack.c.b16 %v1199, %v1198
        %v1215 = vpack.c.b16 %v1201, %v1200
        %v1216 = vpack.c.b16 %v1203, %v1202
        %v1217 = vpack.c.b16 %v1205, %v1204
        %v1218 = vpack.c.b16 %v1207, %v1206
        %v1219 = vpack.c.b16 %v1209, %v1208
        %v1220 = vpack.c.b16 %v1211, %v1210
        %v1221 = vpack.c.b16 %v1213, %v1212
        %v1223 = vsel %vm925, %v1214, 0
        %v1226 = vsel %vm925, %v1215, 0
        %v1229 = vsel %vm925, %v1216, 0
        %v1232 = vsel %vm925, %v1217, 0
        %v1235 = vsel %vm925, %v1218, 0
        %v1238 = vsel %vm925, %v1219, 0
        %v1241 = vsel %vm925, %v1220, 0
        %v1244 = vsel %vm925, %v1221, 0
        %v1247 = vsel %vm950, %v577, 0
        %v1250 = vsel %vm950, %v578, 0
        %1252 = vmatprep.subr.bf16.mxu0 0
        %1253 = vmatpush1.bf16.msra.mxu0 0
        %1254 = vmatprep.subr.bf16.mxu0 0
        %1255 = vmatpush1.bf16.msra.mxu0 0
        %1256 = vmatprep.subr.bf16.mxu0 0
        %1257 = vmatpush1.bf16.msra.mxu0 0
        %1258 = vmatprep.subr.bf16.mxu0 0
        %1259 = vmatpush1.bf16.msra.mxu0 0
        %1260 = vmatprep.subr.bf16.mxu0 0
        %1261 = vmatpush1.bf16.msra.mxu0 0
        %1262 = vmatprep.subr.bf16.mxu0 %v1250
        %1263 = vmatpush1.bf16.msra.mxu0 %v1247
        %1264 = vmatprep.subr.bf16.mxu0 %v576
        %1265 = vmatpush1.bf16.msra.mxu0 %v575
        %1266 = vmatprep.subr.bf16.mxu0 %v574
        %1267 = vmatpush1.bf16.msra.mxu0 %v573
        %1268 = vmatprep.subr.bf16.mxu0 0
        %1269 = vmatpush2.bf16.msra.mxu0 0
        %1270 = vmatprep.subr.bf16.mxu0 0
        %1271 = vmatpush2.bf16.msra.mxu0 0
        %1272 = vmatprep.subr.bf16.mxu0 0
        %1273 = vmatpush2.bf16.msra.mxu0 0
        %1274 = vmatprep.subr.bf16.mxu0 0
        %1275 = vmatpush2.bf16.msra.mxu0 0
        %1276 = vmatprep.subr.bf16.mxu0 0
        %1277 = vmatpush2.bf16.msra.mxu0 0
        %1278 = vmatprep.subr.bf16.mxu0 0
        %1279 = vmatpush2.bf16.msra.mxu0 0
        %1280 = vmatprep.subr.bf16.mxu0 0
        %1281 = vmatpush2.bf16.msra.mxu0 0
        %1282 = vmatprep.subr.bf16.mxu0 0
        %1283 = vmatpush2.bf16.msra.mxu0 0
        %1284 = vmatprep.mubr.bf16.mxu0 0
        %1285 = vmatmul.mubr.bf16.gmra.mxu0 %v1223
        %v1286 = vpop.f32.mrf.mxu0
        %v1287 = vadd.f32 0.0, %v1286
        %v1288 = vpop.f32.mrf.mxu0
        %v1289 = vadd.f32 0.0, %v1288
        %v1290 = vpop.f32.mrf.mxu0
        %v1291 = vadd.f32 0.0, %v1290
        %v1292 = vpop.f32.mrf.mxu0
        %v1293 = vadd.f32 0.0, %v1292
        %1294 = vmatprep.mubr.bf16.mxu0 0
        %1295 = vmatmul.mubr.bf16.gmra.mxu0 %v1226
        %v1296 = vpop.f32.mrf.mxu0
        %v1297 = vadd.f32 0.0, %v1296
        %v1298 = vpop.f32.mrf.mxu0
        %v1299 = vadd.f32 0.0, %v1298
        %v1300 = vpop.f32.mrf.mxu0
        %v1301 = vadd.f32 0.0, %v1300
        %v1302 = vpop.f32.mrf.mxu0
        %v1303 = vadd.f32 0.0, %v1302
        %1304 = vmatprep.mubr.bf16.mxu0 0
        %1305 = vmatmul.mubr.bf16.gmra.mxu0 %v1229
        %v1306 = vpop.f32.mrf.mxu0
        %v1307 = vadd.f32 0.0, %v1306
        %v1308 = vpop.f32.mrf.mxu0
        %v1309 = vadd.f32 0.0, %v1308
        %v1310 = vpop.f32.mrf.mxu0
        %v1311 = vadd.f32 0.0, %v1310
        %v1312 = vpop.f32.mrf.mxu0
        %v1313 = vadd.f32 0.0, %v1312
        %1314 = vmatprep.mubr.bf16.mxu0 0
        %1315 = vmatmul.mubr.bf16.gmra.mxu0 %v1232
        %v1316 = vpop.f32.mrf.mxu0
        %v1317 = vadd.f32 0.0, %v1316
        %v1318 = vpop.f32.mrf.mxu0
        %v1319 = vadd.f32 0.0, %v1318
        %v1320 = vpop.f32.mrf.mxu0
        %v1321 = vadd.f32 0.0, %v1320
        %v1322 = vpop.f32.mrf.mxu0
        %v1323 = vadd.f32 0.0, %v1322
        %1324 = vmatprep.mubr.bf16.mxu0 0
        %1325 = vmatmul.mubr.bf16.gmra.mxu0 %v1235
        %v1326 = vpop.f32.mrf.mxu0
        %v1327 = vadd.f32 0.0, %v1326
        %v1328 = vpop.f32.mrf.mxu0
        %v1329 = vadd.f32 0.0, %v1328
        %v1330 = vpop.f32.mrf.mxu0
        %v1331 = vadd.f32 0.0, %v1330
        %v1332 = vpop.f32.mrf.mxu0
        %v1333 = vadd.f32 0.0, %v1332
        %1334 = vmatprep.mubr.bf16.mxu0 0
        %1335 = vmatmul.mubr.bf16.gmra.mxu0 %v1238
        %v1336 = vpop.f32.mrf.mxu0
        %v1337 = vadd.f32 0.0, %v1336
        %v1338 = vpop.f32.mrf.mxu0
        %v1339 = vadd.f32 0.0, %v1338
        %v1340 = vpop.f32.mrf.mxu0
        %v1341 = vadd.f32 0.0, %v1340
        %v1342 = vpop.f32.mrf.mxu0
        %v1343 = vadd.f32 0.0, %v1342
        %1344 = vmatprep.mubr.bf16.mxu0 0
        %1345 = vmatmul.mubr.bf16.gmra.mxu0 %v1241
        %v1346 = vpop.f32.mrf.mxu0
        %v1347 = vadd.f32 0.0, %v1346
        %v1348 = vpop.f32.mrf.mxu0
        %v1349 = vadd.f32 0.0, %v1348
        %v1350 = vpop.f32.mrf.mxu0
        %v1351 = vadd.f32 0.0, %v1350
        %v1352 = vpop.f32.mrf.mxu0
        %v1353 = vadd.f32 0.0, %v1352
        %1354 = vmatprep.mubr.bf16.mxu0 0
        %1355 = vmatmul.mubr.bf16.gmra.mxu0 %v1244
        %v1356 = vpop.f32.mrf.mxu0
        %v1357 = vadd.f32 0.0, %v1356
        %v1358 = vpop.f32.mrf.mxu0
        %v1359 = vadd.f32 0.0, %v1358
        %v1360 = vpop.f32.mrf.mxu0
        %v1361 = vadd.f32 0.0, %v1360
        %v1362 = vpop.f32.mrf.mxu0
        %v1363 = vadd.f32 0.0, %v1362
        %1364 = vdwg.mxu0
        %v1365 = vadd.f32 %v1150, %v1287
        %v1366 = vadd.f32 %v1151, %v1289
        %v1367 = vadd.f32 %v1152, %v1291
        %v1368 = vadd.f32 %v1153, %v1293
        %v1369 = vadd.f32 %v1154, %v1297
        %v1370 = vadd.f32 %v1155, %v1299
        %v1371 = vadd.f32 %v1156, %v1301
        %v1372 = vadd.f32 %v1157, %v1303
        %v1373 = vadd.f32 %v1158, %v1307
        %v1374 = vadd.f32 %v1159, %v1309
        %v1375 = vadd.f32 %v1160, %v1311
        %v1376 = vadd.f32 %v1161, %v1313
        %v1377 = vadd.f32 %v1162, %v1317
        %v1378 = vadd.f32 %v1163, %v1319
        %v1379 = vadd.f32 %v1164, %v1321
        %v1380 = vadd.f32 %v1165, %v1323
        %v1381 = vadd.f32 %v1166, %v1327
        %v1382 = vadd.f32 %v1167, %v1329
        %v1383 = vadd.f32 %v1168, %v1331
        %v1384 = vadd.f32 %v1169, %v1333
        %v1385 = vadd.f32 %v1170, %v1337
        %v1386 = vadd.f32 %v1171, %v1339
        %v1387 = vadd.f32 %v1172, %v1341
        %v1388 = vadd.f32 %v1173, %v1343
        %v1389 = vadd.f32 %v1174, %v1347
        %v1390 = vadd.f32 %v1175, %v1349
        %v1391 = vadd.f32 %v1176, %v1351
        %v1392 = vadd.f32 %v1177, %v1353
        %v1393 = vadd.f32 %v1178, %v1357
        %v1394 = vadd.f32 %v1179, %v1359
        %v1395 = vadd.f32 %v1180, %v1361
        %v1396 = vadd.f32 %v1181, %v1363
        %v1413 = vunpack.c.l.b16 %v319
        %v1414 = vunpack.c.l.b16 %v320
        %v1415 = vunpack.c.l.b16 %v321
        %v1416 = vunpack.c.l.b16 %v322
        %v1417 = vunpack.c.l.b16 %v323
        %v1418 = vunpack.c.l.b16 %v324
        %v1419 = vunpack.c.l.b16 %v325
        %v1420 = vunpack.c.l.b16 %v326
        %v1421 = vunpack.c.l.b16 %v327
        %v1422 = vunpack.c.l.b16 %v328
        %v1423 = vunpack.c.l.b16 %v329
        %v1424 = vunpack.c.l.b16 %v330
        %v1425 = vunpack.c.l.b16 %v331
        %v1426 = vunpack.c.l.b16 %v332
        %v1427 = vunpack.c.l.b16 %v333
        %v1428 = vunpack.c.l.b16 %v334
        %v1429 = vpack.c.b16 %v1414, %v1413
        %v1430 = vpack.c.b16 %v1416, %v1415
        %v1431 = vpack.c.b16 %v1418, %v1417
        %v1432 = vpack.c.b16 %v1420, %v1419
        %v1433 = vpack.c.b16 %v1422, %v1421
        %v1434 = vpack.c.b16 %v1424, %v1423
        %v1435 = vpack.c.b16 %v1426, %v1425
        %v1436 = vpack.c.b16 %v1428, %v1427
        %v1438 = vsel %vm925, %v1429, 0
        %v1441 = vsel %vm925, %v1430, 0
        %v1444 = vsel %vm925, %v1431, 0
        %v1447 = vsel %vm925, %v1432, 0
        %v1450 = vsel %vm925, %v1433, 0
        %v1453 = vsel %vm925, %v1434, 0
        %v1456 = vsel %vm925, %v1435, 0
        %v1459 = vsel %vm925, %v1436, 0
        %v1462 = vsel %vm950, %v623, 0
        %v1465 = vsel %vm950, %v624, 0
        %1467 = vmatprep.subr.bf16.mxu0 0
        %1468 = vmatpush1.bf16.msra.mxu0 0
        %1469 = vmatprep.subr.bf16.mxu0 0
        %1470 = vmatpush1.bf16.msra.mxu0 0
        %1471 = vmatprep.subr.bf16.mxu0 0
        %1472 = vmatpush1.bf16.msra.mxu0 0
        %1473 = vmatprep.subr.bf16.mxu0 0
        %1474 = vmatpush1.bf16.msra.mxu0 0
        %1475 = vmatprep.subr.bf16.mxu0 0
        %1476 = vmatpush1.bf16.msra.mxu0 0
        %1477 = vmatprep.subr.bf16.mxu0 %v1465
        %1478 = vmatpush1.bf16.msra.mxu0 %v1462
        %1479 = vmatprep.subr.bf16.mxu0 %v622
        %1480 = vmatpush1.bf16.msra.mxu0 %v621
        %1481 = vmatprep.subr.bf16.mxu0 %v620
        %1482 = vmatpush1.bf16.msra.mxu0 %v619
        %1483 = vmatprep.subr.bf16.mxu0 0
        %1484 = vmatpush2.bf16.msra.mxu0 0
        %1485 = vmatprep.subr.bf16.mxu0 0
        %1486 = vmatpush2.bf16.msra.mxu0 0
        %1487 = vmatprep.subr.bf16.mxu0 0
        %1488 = vmatpush2.bf16.msra.mxu0 0
        %1489 = vmatprep.subr.bf16.mxu0 0
        %1490 = vmatpush2.bf16.msra.mxu0 0
        %1491 = vmatprep.subr.bf16.mxu0 0
        %1492 = vmatpush2.bf16.msra.mxu0 0
        %1493 = vmatprep.subr.bf16.mxu0 0
        %1494 = vmatpush2.bf16.msra.mxu0 0
        %1495 = vmatprep.subr.bf16.mxu0 0
        %1496 = vmatpush2.bf16.msra.mxu0 0
        %1497 = vmatprep.subr.bf16.mxu0 0
        %1498 = vmatpush2.bf16.msra.mxu0 0
        %1499 = vmatprep.mubr.bf16.mxu0 0
        %1500 = vmatmul.mubr.bf16.gmra.mxu0 %v1438
        %v1501 = vpop.f32.mrf.mxu0
        %v1502 = vadd.f32 0.0, %v1501
        %v1503 = vpop.f32.mrf.mxu0
        %v1504 = vadd.f32 0.0, %v1503
        %v1505 = vpop.f32.mrf.mxu0
        %v1506 = vadd.f32 0.0, %v1505
        %v1507 = vpop.f32.mrf.mxu0
        %v1508 = vadd.f32 0.0, %v1507
        %1509 = vmatprep.mubr.bf16.mxu0 0
        %1510 = vmatmul.mubr.bf16.gmra.mxu0 %v1441
        %v1511 = vpop.f32.mrf.mxu0
        %v1512 = vadd.f32 0.0, %v1511
        %v1513 = vpop.f32.mrf.mxu0
        %v1514 = vadd.f32 0.0, %v1513
        %v1515 = vpop.f32.mrf.mxu0
        %v1516 = vadd.f32 0.0, %v1515
        %v1517 = vpop.f32.mrf.mxu0
        %v1518 = vadd.f32 0.0, %v1517
        %1519 = vmatprep.mubr.bf16.mxu0 0
        %1520 = vmatmul.mubr.bf16.gmra.mxu0 %v1444
        %v1521 = vpop.f32.mrf.mxu0
        %v1522 = vadd.f32 0.0, %v1521
        %v1523 = vpop.f32.mrf.mxu0
        %v1524 = vadd.f32 0.0, %v1523
        %v1525 = vpop.f32.mrf.mxu0
        %v1526 = vadd.f32 0.0, %v1525
        %v1527 = vpop.f32.mrf.mxu0
        %v1528 = vadd.f32 0.0, %v1527
        %1529 = vmatprep.mubr.bf16.mxu0 0
        %1530 = vmatmul.mubr.bf16.gmra.mxu0 %v1447
        %v1531 = vpop.f32.mrf.mxu0
        %v1532 = vadd.f32 0.0, %v1531
        %v1533 = vpop.f32.mrf.mxu0
        %v1534 = vadd.f32 0.0, %v1533
        %v1535 = vpop.f32.mrf.mxu0
        %v1536 = vadd.f32 0.0, %v1535
        %v1537 = vpop.f32.mrf.mxu0
        %v1538 = vadd.f32 0.0, %v1537
        %1539 = vmatprep.mubr.bf16.mxu0 0
        %1540 = vmatmul.mubr.bf16.gmra.mxu0 %v1450
        %v1541 = vpop.f32.mrf.mxu0
        %v1542 = vadd.f32 0.0, %v1541
        %v1543 = vpop.f32.mrf.mxu0
        %v1544 = vadd.f32 0.0, %v1543
        %v1545 = vpop.f32.mrf.mxu0
        %v1546 = vadd.f32 0.0, %v1545
        %v1547 = vpop.f32.mrf.mxu0
        %v1548 = vadd.f32 0.0, %v1547
        %1549 = vmatprep.mubr.bf16.mxu0 0
        %1550 = vmatmul.mubr.bf16.gmra.mxu0 %v1453
        %v1551 = vpop.f32.mrf.mxu0
        %v1552 = vadd.f32 0.0, %v1551
        %v1553 = vpop.f32.mrf.mxu0
        %v1554 = vadd.f32 0.0, %v1553
        %v1555 = vpop.f32.mrf.mxu0
        %v1556 = vadd.f32 0.0, %v1555
        %v1557 = vpop.f32.mrf.mxu0
        %v1558 = vadd.f32 0.0, %v1557
        %1559 = vmatprep.mubr.bf16.mxu0 0
        %1560 = vmatmul.mubr.bf16.gmra.mxu0 %v1456
        %v1561 = vpop.f32.mrf.mxu0
        %v1562 = vadd.f32 0.0, %v1561
        %v1563 = vpop.f32.mrf.mxu0
        %v1564 = vadd.f32 0.0, %v1563
        %v1565 = vpop.f32.mrf.mxu0
        %v1566 = vadd.f32 0.0, %v1565
        %v1567 = vpop.f32.mrf.mxu0
        %v1568 = vadd.f32 0.0, %v1567
        %1569 = vmatprep.mubr.bf16.mxu0 0
        %1570 = vmatmul.mubr.bf16.gmra.mxu0 %v1459
        %v1571 = vpop.f32.mrf.mxu0
        %v1572 = vadd.f32 0.0, %v1571
        %v1573 = vpop.f32.mrf.mxu0
        %v1574 = vadd.f32 0.0, %v1573
        %v1575 = vpop.f32.mrf.mxu0
        %v1576 = vadd.f32 0.0, %v1575
        %v1577 = vpop.f32.mrf.mxu0
        %v1578 = vadd.f32 0.0, %v1577
        %1579 = vdwg.mxu0
        %v1580 = vadd.f32 %v1365, %v1502
        %v1581 = vadd.f32 %v1366, %v1504
        %v1582 = vadd.f32 %v1367, %v1506
        %v1583 = vadd.f32 %v1368, %v1508
        %v1584 = vadd.f32 %v1369, %v1512
        %v1585 = vadd.f32 %v1370, %v1514
        %v1586 = vadd.f32 %v1371, %v1516
        %v1587 = vadd.f32 %v1372, %v1518
        %v1588 = vadd.f32 %v1373, %v1522
        %v1589 = vadd.f32 %v1374, %v1524
        %v1590 = vadd.f32 %v1375, %v1526
        %v1591 = vadd.f32 %v1376, %v1528
        %v1592 = vadd.f32 %v1377, %v1532
        %v1593 = vadd.f32 %v1378, %v1534
        %v1594 = vadd.f32 %v1379, %v1536
        %v1595 = vadd.f32 %v1380, %v1538
        %v1596 = vadd.f32 %v1381, %v1542
        %v1597 = vadd.f32 %v1382, %v1544
        %v1598 = vadd.f32 %v1383, %v1546
        %v1599 = vadd.f32 %v1384, %v1548
        %v1600 = vadd.f32 %v1385, %v1552
        %v1601 = vadd.f32 %v1386, %v1554
        %v1602 = vadd.f32 %v1387, %v1556
        %v1603 = vadd.f32 %v1388, %v1558
        %v1604 = vadd.f32 %v1389, %v1562
        %v1605 = vadd.f32 %v1390, %v1564
        %v1606 = vadd.f32 %v1391, %v1566
        %v1607 = vadd.f32 %v1392, %v1568
        %v1608 = vadd.f32 %v1393, %v1572
        %v1609 = vadd.f32 %v1394, %v1574
        %v1610 = vadd.f32 %v1395, %v1576
        %v1611 = vadd.f32 %v1396, %v1578
        %v1628 = vunpack.c.l.b16 %v335
        %v1629 = vunpack.c.l.b16 %v336
        %v1630 = vunpack.c.l.b16 %v337
        %v1631 = vunpack.c.l.b16 %v338
        %v1632 = vunpack.c.l.b16 %v339
        %v1633 = vunpack.c.l.b16 %v340
        %v1634 = vunpack.c.l.b16 %v341
        %v1635 = vunpack.c.l.b16 %v342
        %v1636 = vunpack.c.l.b16 %v343
        %v1637 = vunpack.c.l.b16 %v344
        %v1638 = vunpack.c.l.b16 %v345
        %v1639 = vunpack.c.l.b16 %v346
        %v1640 = vunpack.c.l.b16 %v347
        %v1641 = vunpack.c.l.b16 %v348
        %v1642 = vunpack.c.l.b16 %v349
        %v1643 = vunpack.c.l.b16 %v350
        %v1644 = vpack.c.b16 %v1629, %v1628
        %v1645 = vpack.c.b16 %v1631, %v1630
        %v1646 = vpack.c.b16 %v1633, %v1632
        %v1647 = vpack.c.b16 %v1635, %v1634
        %v1648 = vpack.c.b16 %v1637, %v1636
        %v1649 = vpack.c.b16 %v1639, %v1638
        %v1650 = vpack.c.b16 %v1641, %v1640
        %v1651 = vpack.c.b16 %v1643, %v1642
        %v1653 = vsel %vm925, %v1644, 0
        %v1656 = vsel %vm925, %v1645, 0
        %v1659 = vsel %vm925, %v1646, 0
        %v1662 = vsel %vm925, %v1647, 0
        %v1665 = vsel %vm925, %v1648, 0
        %v1668 = vsel %vm925, %v1649, 0
        %v1671 = vsel %vm925, %v1650, 0
        %v1674 = vsel %vm925, %v1651, 0
        %v1677 = vsel %vm950, %v669, 0
        %v1680 = vsel %vm950, %v670, 0
        %1682 = vmatprep.subr.bf16.mxu0 0
        %1683 = vmatpush1.bf16.msra.mxu0 0
        %1684 = vmatprep.subr.bf16.mxu0 0
        %1685 = vmatpush1.bf16.msra.mxu0 0
        %1686 = vmatprep.subr.bf16.mxu0 0
        %1687 = vmatpush1.bf16.msra.mxu0 0
        %1688 = vmatprep.subr.bf16.mxu0 0
        %1689 = vmatpush1.bf16.msra.mxu0 0
        %1690 = vmatprep.subr.bf16.mxu0 0
        %1691 = vmatpush1.bf16.msra.mxu0 0
        %1692 = vmatprep.subr.bf16.mxu0 %v1680
        %1693 = vmatpush1.bf16.msra.mxu0 %v1677
        %1694 = vmatprep.subr.bf16.mxu0 %v668
        %1695 = vmatpush1.bf16.msra.mxu0 %v667
        %1696 = vmatprep.subr.bf16.mxu0 %v666
        %1697 = vmatpush1.bf16.msra.mxu0 %v665
        %1698 = vmatprep.subr.bf16.mxu0 0
        %1699 = vmatpush2.bf16.msra.mxu0 0
        %1700 = vmatprep.subr.bf16.mxu0 0
        %1701 = vmatpush2.bf16.msra.mxu0 0
        %1702 = vmatprep.subr.bf16.mxu0 0
        %1703 = vmatpush2.bf16.msra.mxu0 0
        %1704 = vmatprep.subr.bf16.mxu0 0
        %1705 = vmatpush2.bf16.msra.mxu0 0
        %1706 = vmatprep.subr.bf16.mxu0 0
        %1707 = vmatpush2.bf16.msra.mxu0 0
        %1708 = vmatprep.subr.bf16.mxu0 0
        %1709 = vmatpush2.bf16.msra.mxu0 0
        %1710 = vmatprep.subr.bf16.mxu0 0
        %1711 = vmatpush2.bf16.msra.mxu0 0
        %1712 = vmatprep.subr.bf16.mxu0 0
        %1713 = vmatpush2.bf16.msra.mxu0 0
        %1714 = vmatprep.mubr.bf16.mxu0 0
        %1715 = vmatmul.mubr.bf16.gmra.mxu0 %v1653
        %v1716 = vpop.f32.mrf.mxu0
        %v1717 = vadd.f32 0.0, %v1716
        %v1718 = vpop.f32.mrf.mxu0
        %v1719 = vadd.f32 0.0, %v1718
        %v1720 = vpop.f32.mrf.mxu0
        %v1721 = vadd.f32 0.0, %v1720
        %v1722 = vpop.f32.mrf.mxu0
        %v1723 = vadd.f32 0.0, %v1722
        %1724 = vmatprep.mubr.bf16.mxu0 0
        %1725 = vmatmul.mubr.bf16.gmra.mxu0 %v1656
        %v1726 = vpop.f32.mrf.mxu0
        %v1727 = vadd.f32 0.0, %v1726
        %v1728 = vpop.f32.mrf.mxu0
        %v1729 = vadd.f32 0.0, %v1728
        %v1730 = vpop.f32.mrf.mxu0
        %v1731 = vadd.f32 0.0, %v1730
        %v1732 = vpop.f32.mrf.mxu0
        %v1733 = vadd.f32 0.0, %v1732
        %1734 = vmatprep.mubr.bf16.mxu0 0
        %1735 = vmatmul.mubr.bf16.gmra.mxu0 %v1659
        %v1736 = vpop.f32.mrf.mxu0
        %v1737 = vadd.f32 0.0, %v1736
        %v1738 = vpop.f32.mrf.mxu0
        %v1739 = vadd.f32 0.0, %v1738
        %v1740 = vpop.f32.mrf.mxu0
        %v1741 = vadd.f32 0.0, %v1740
        %v1742 = vpop.f32.mrf.mxu0
        %v1743 = vadd.f32 0.0, %v1742
        %1744 = vmatprep.mubr.bf16.mxu0 0
        %1745 = vmatmul.mubr.bf16.gmra.mxu0 %v1662
        %v1746 = vpop.f32.mrf.mxu0
        %v1747 = vadd.f32 0.0, %v1746
        %v1748 = vpop.f32.mrf.mxu0
        %v1749 = vadd.f32 0.0, %v1748
        %v1750 = vpop.f32.mrf.mxu0
        %v1751 = vadd.f32 0.0, %v1750
        %v1752 = vpop.f32.mrf.mxu0
        %v1753 = vadd.f32 0.0, %v1752
        %1754 = vmatprep.mubr.bf16.mxu0 0
        %1755 = vmatmul.mubr.bf16.gmra.mxu0 %v1665
        %v1756 = vpop.f32.mrf.mxu0
        %v1757 = vadd.f32 0.0, %v1756
        %v1758 = vpop.f32.mrf.mxu0
        %v1759 = vadd.f32 0.0, %v1758
        %v1760 = vpop.f32.mrf.mxu0
        %v1761 = vadd.f32 0.0, %v1760
        %v1762 = vpop.f32.mrf.mxu0
        %v1763 = vadd.f32 0.0, %v1762
        %1764 = vmatprep.mubr.bf16.mxu0 0
        %1765 = vmatmul.mubr.bf16.gmra.mxu0 %v1668
        %v1766 = vpop.f32.mrf.mxu0
        %v1767 = vadd.f32 0.0, %v1766
        %v1768 = vpop.f32.mrf.mxu0
        %v1769 = vadd.f32 0.0, %v1768
        %v1770 = vpop.f32.mrf.mxu0
        %v1771 = vadd.f32 0.0, %v1770
        %v1772 = vpop.f32.mrf.mxu0
        %v1773 = vadd.f32 0.0, %v1772
        %1774 = vmatprep.mubr.bf16.mxu0 0
        %1775 = vmatmul.mubr.bf16.gmra.mxu0 %v1671
        %v1776 = vpop.f32.mrf.mxu0
        %v1777 = vadd.f32 0.0, %v1776
        %v1778 = vpop.f32.mrf.mxu0
        %v1779 = vadd.f32 0.0, %v1778
        %v1780 = vpop.f32.mrf.mxu0
        %v1781 = vadd.f32 0.0, %v1780
        %v1782 = vpop.f32.mrf.mxu0
        %v1783 = vadd.f32 0.0, %v1782
        %1784 = vmatprep.mubr.bf16.mxu0 0
        %1785 = vmatmul.mubr.bf16.gmra.mxu0 %v1674
        %v1786 = vpop.f32.mrf.mxu0
        %v1787 = vadd.f32 0.0, %v1786
        %v1788 = vpop.f32.mrf.mxu0
        %v1789 = vadd.f32 0.0, %v1788
        %v1790 = vpop.f32.mrf.mxu0
        %v1791 = vadd.f32 0.0, %v1790
        %v1792 = vpop.f32.mrf.mxu0
        %v1793 = vadd.f32 0.0, %v1792
        %1794 = vdwg.mxu0
        %v1795 = vadd.f32 %v1580, %v1717
        %v1796 = vadd.f32 %v1581, %v1719
        %v1797 = vadd.f32 %v1582, %v1721
        %v1798 = vadd.f32 %v1583, %v1723
        %v1799 = vadd.f32 %v1584, %v1727
        %v1800 = vadd.f32 %v1585, %v1729
        %v1801 = vadd.f32 %v1586, %v1731
        %v1802 = vadd.f32 %v1587, %v1733
        %v1803 = vadd.f32 %v1588, %v1737
        %v1804 = vadd.f32 %v1589, %v1739
        %v1805 = vadd.f32 %v1590, %v1741
        %v1806 = vadd.f32 %v1591, %v1743
        %v1807 = vadd.f32 %v1592, %v1747
        %v1808 = vadd.f32 %v1593, %v1749
        %v1809 = vadd.f32 %v1594, %v1751
        %v1810 = vadd.f32 %v1595, %v1753
        %v1811 = vadd.f32 %v1596, %v1757
        %v1812 = vadd.f32 %v1597, %v1759
        %v1813 = vadd.f32 %v1598, %v1761
        %v1814 = vadd.f32 %v1599, %v1763
        %v1815 = vadd.f32 %v1600, %v1767
        %v1816 = vadd.f32 %v1601, %v1769
        %v1817 = vadd.f32 %v1602, %v1771
        %v1818 = vadd.f32 %v1603, %v1773
        %v1819 = vadd.f32 %v1604, %v1777
        %v1820 = vadd.f32 %v1605, %v1779
        %v1821 = vadd.f32 %v1606, %v1781
        %v1822 = vadd.f32 %v1607, %v1783
        %v1823 = vadd.f32 %v1608, %v1787
        %v1824 = vadd.f32 %v1609, %v1789
        %v1825 = vadd.f32 %v1610, %v1791
        %v1826 = vadd.f32 %v1611, %v1793
        %v1843 = vunpack.c.l.b16 %v351
        %v1844 = vunpack.c.l.b16 %v352
        %v1845 = vunpack.c.l.b16 %v353
        %v1846 = vunpack.c.l.b16 %v354
        %v1847 = vunpack.c.l.b16 %v355
        %v1848 = vunpack.c.l.b16 %v356
        %v1849 = vunpack.c.l.b16 %v357
        %v1850 = vunpack.c.l.b16 %v358
        %v1851 = vunpack.c.l.b16 %v359
        %v1852 = vunpack.c.l.b16 %v360
        %v1853 = vunpack.c.l.b16 %v361
        %v1854 = vunpack.c.l.b16 %v362
        %v1855 = vunpack.c.l.b16 %v363
        %v1856 = vunpack.c.l.b16 %v364
        %v1857 = vunpack.c.l.b16 %v365
        %v1858 = vunpack.c.l.b16 %v366
        %v1859 = vpack.c.b16 %v1844, %v1843
        %v1860 = vpack.c.b16 %v1846, %v1845
        %v1861 = vpack.c.b16 %v1848, %v1847
        %v1862 = vpack.c.b16 %v1850, %v1849
        %v1863 = vpack.c.b16 %v1852, %v1851
        %v1864 = vpack.c.b16 %v1854, %v1853
        %v1865 = vpack.c.b16 %v1856, %v1855
        %v1866 = vpack.c.b16 %v1858, %v1857
        %v1872 = vunpack.c.l.b16 %v685
        %v1873 = vunpack.c.h.b16 %v685
        %v1874 = vunpack.c.l.b16 %v686
        %v1875 = vunpack.c.h.b16 %v686
        %v1876 = vunpack.c.l.b16 %v687
        %v1877 = vunpack.c.h.b16 %v687
        %v1878 = vunpack.c.l.b16 %v688
        %v1879 = vunpack.c.h.b16 %v688
        %v1880 = vunpack.c.l.b16 %v689
        %v1881 = vunpack.c.h.b16 %v689
        %v1882 = vpack.c.b16 %v1874, %v1872
        %v1883 = vpack.c.b16 %v1875, %v1873
        %v1884 = vpack.c.b16 %v1878, %v1876
        %v1885 = vpack.c.b16 %v1879, %v1877
        %v1886 = vpack.c.b16 %v1880, %v1880
        %v1887 = vpack.c.b16 %v1881, %v1881
        %v1893 = vsel %vm925, %v1859, 0
        %v1896 = vsel %vm925, %v1860, 0
        %v1899 = vsel %vm925, %v1861, 0
        %v1902 = vsel %vm925, %v1862, 0
        %v1905 = vsel %vm925, %v1863, 0
        %v1908 = vsel %vm925, %v1864, 0
        %v1911 = vsel %vm925, %v1865, 0
        %v1914 = vsel %vm925, %v1866, 0
        %v1917 = vsel %vm950, %v1886, 0
        %v1920 = vsel %vm950, %v1887, 0
        %1922 = vmatprep.subr.bf16.mxu0 0
        %1923 = vmatpush1.bf16.msra.mxu0 0
        %1924 = vmatprep.subr.bf16.mxu0 0
        %1925 = vmatpush1.bf16.msra.mxu0 0
        %1926 = vmatprep.subr.bf16.mxu0 0
        %1927 = vmatpush1.bf16.msra.mxu0 0
        %1928 = vmatprep.subr.bf16.mxu0 0
        %1929 = vmatpush1.bf16.msra.mxu0 0
        %1930 = vmatprep.subr.bf16.mxu0 0
        %1931 = vmatpush1.bf16.msra.mxu0 0
        %1932 = vmatprep.subr.bf16.mxu0 %v1920
        %1933 = vmatpush1.bf16.msra.mxu0 %v1917
        %1934 = vmatprep.subr.bf16.mxu0 %v1885
        %1935 = vmatpush1.bf16.msra.mxu0 %v1884
        %1936 = vmatprep.subr.bf16.mxu0 %v1883
        %1937 = vmatpush1.bf16.msra.mxu0 %v1882
        %1938 = vmatprep.subr.bf16.mxu0 0
        %1939 = vmatpush2.bf16.msra.mxu0 0
        %1940 = vmatprep.subr.bf16.mxu0 0
        %1941 = vmatpush2.bf16.msra.mxu0 0
        %1942 = vmatprep.subr.bf16.mxu0 0
        %1943 = vmatpush2.bf16.msra.mxu0 0
        %1944 = vmatprep.subr.bf16.mxu0 0
        %1945 = vmatpush2.bf16.msra.mxu0 0
        %1946 = vmatprep.subr.bf16.mxu0 0
        %1947 = vmatpush2.bf16.msra.mxu0 0
        %1948 = vmatprep.subr.bf16.mxu0 0
        %1949 = vmatpush2.bf16.msra.mxu0 0
        %1950 = vmatprep.subr.bf16.mxu0 0
        %1951 = vmatpush2.bf16.msra.mxu0 0
        %1952 = vmatprep.subr.bf16.mxu0 0
        %1953 = vmatpush2.bf16.msra.mxu0 0
        %1954 = vmatprep.mubr.bf16.mxu0 0
        %1955 = vmatmul.mubr.bf16.gmra.mxu0 %v1893
        %v1956 = vpop.f32.mrf.mxu0
        %v1957 = vadd.f32 0.0, %v1956
        %v1958 = vpop.f32.mrf.mxu0
        %v1959 = vadd.f32 0.0, %v1958
        %v1960 = vpop.f32.mrf.mxu0
        %v1961 = vadd.f32 0.0, %v1960
        %v1962 = vpop.f32.mrf.mxu0
        %v1963 = vadd.f32 0.0, %v1962
        %1964 = vmatprep.mubr.bf16.mxu0 0
        %1965 = vmatmul.mubr.bf16.gmra.mxu0 %v1896
        %v1966 = vpop.f32.mrf.mxu0
        %v1967 = vadd.f32 0.0, %v1966
        %v1968 = vpop.f32.mrf.mxu0
        %v1969 = vadd.f32 0.0, %v1968
        %v1970 = vpop.f32.mrf.mxu0
        %v1971 = vadd.f32 0.0, %v1970
        %v1972 = vpop.f32.mrf.mxu0
        %v1973 = vadd.f32 0.0, %v1972
        %1974 = vmatprep.mubr.bf16.mxu0 0
        %1975 = vmatmul.mubr.bf16.gmra.mxu0 %v1899
        %v1976 = vpop.f32.mrf.mxu0
        %v1977 = vadd.f32 0.0, %v1976
        %v1978 = vpop.f32.mrf.mxu0
        %v1979 = vadd.f32 0.0, %v1978
        %v1980 = vpop.f32.mrf.mxu0
        %v1981 = vadd.f32 0.0, %v1980
        %v1982 = vpop.f32.mrf.mxu0
        %v1983 = vadd.f32 0.0, %v1982
        %1984 = vmatprep.mubr.bf16.mxu0 0
        %1985 = vmatmul.mubr.bf16.gmra.mxu0 %v1902
        %v1986 = vpop.f32.mrf.mxu0
        %v1987 = vadd.f32 0.0, %v1986
        %v1988 = vpop.f32.mrf.mxu0
        %v1989 = vadd.f32 0.0, %v1988
        %v1990 = vpop.f32.mrf.mxu0
        %v1991 = vadd.f32 0.0, %v1990
        %v1992 = vpop.f32.mrf.mxu0
        %v1993 = vadd.f32 0.0, %v1992
        %1994 = vmatprep.mubr.bf16.mxu0 0
        %1995 = vmatmul.mubr.bf16.gmra.mxu0 %v1905
        %v1996 = vpop.f32.mrf.mxu0
        %v1997 = vadd.f32 0.0, %v1996
        %v1998 = vpop.f32.mrf.mxu0
        %v1999 = vadd.f32 0.0, %v1998
        %v2000 = vpop.f32.mrf.mxu0
        %v2001 = vadd.f32 0.0, %v2000
        %v2002 = vpop.f32.mrf.mxu0
        %v2003 = vadd.f32 0.0, %v2002
        %2004 = vmatprep.mubr.bf16.mxu0 0
        %2005 = vmatmul.mubr.bf16.gmra.mxu0 %v1908
        %v2006 = vpop.f32.mrf.mxu0
        %v2007 = vadd.f32 0.0, %v2006
        %v2008 = vpop.f32.mrf.mxu0
        %v2009 = vadd.f32 0.0, %v2008
        %v2010 = vpop.f32.mrf.mxu0
        %v2011 = vadd.f32 0.0, %v2010
        %v2012 = vpop.f32.mrf.mxu0
        %v2013 = vadd.f32 0.0, %v2012
        %2014 = vmatprep.mubr.bf16.mxu0 0
        %2015 = vmatmul.mubr.bf16.gmra.mxu0 %v1911
        %v2016 = vpop.f32.mrf.mxu0
        %v2017 = vadd.f32 0.0, %v2016
        %v2018 = vpop.f32.mrf.mxu0
        %v2019 = vadd.f32 0.0, %v2018
        %v2020 = vpop.f32.mrf.mxu0
        %v2021 = vadd.f32 0.0, %v2020
        %v2022 = vpop.f32.mrf.mxu0
        %v2023 = vadd.f32 0.0, %v2022
        %2024 = vmatprep.mubr.bf16.mxu0 0
        %2025 = vmatmul.mubr.bf16.gmra.mxu0 %v1914
        %v2026 = vpop.f32.mrf.mxu0
        %v2027 = vadd.f32 0.0, %v2026
        %v2028 = vpop.f32.mrf.mxu0
        %v2029 = vadd.f32 0.0, %v2028
        %v2030 = vpop.f32.mrf.mxu0
        %v2031 = vadd.f32 0.0, %v2030
        %v2032 = vpop.f32.mrf.mxu0
        %v2033 = vadd.f32 0.0, %v2032
        %2034 = vdwg.mxu0
        %v2035 = vadd.f32 %v1795, %v1957
        %v2036 = vadd.f32 %v1796, %v1959
        %v2037 = vadd.f32 %v1797, %v1961
        %v2038 = vadd.f32 %v1798, %v1963
        %v2039 = vadd.f32 %v1799, %v1967
        %v2040 = vadd.f32 %v1800, %v1969
        %v2041 = vadd.f32 %v1801, %v1971
        %v2042 = vadd.f32 %v1802, %v1973
        %v2043 = vadd.f32 %v1803, %v1977
        %v2044 = vadd.f32 %v1804, %v1979
        %v2045 = vadd.f32 %v1805, %v1981
        %v2046 = vadd.f32 %v1806, %v1983
        %v2047 = vadd.f32 %v1807, %v1987
        %v2048 = vadd.f32 %v1808, %v1989
        %v2049 = vadd.f32 %v1809, %v1991
        %v2050 = vadd.f32 %v1810, %v1993
        %v2051 = vadd.f32 %v1811, %v1997
        %v2052 = vadd.f32 %v1812, %v1999
        %v2053 = vadd.f32 %v1813, %v2001
        %v2054 = vadd.f32 %v1814, %v2003
        %v2055 = vadd.f32 %v1815, %v2007
        %v2056 = vadd.f32 %v1816, %v2009
        %v2057 = vadd.f32 %v1817, %v2011
        %v2058 = vadd.f32 %v1818, %v2013
        %v2059 = vadd.f32 %v1819, %v2017
        %v2060 = vadd.f32 %v1820, %v2019
        %v2061 = vadd.f32 %v1821, %v2021
        %v2062 = vadd.f32 %v1822, %v2023
        %v2063 = vadd.f32 %v1823, %v2027
        %v2064 = vadd.f32 %v1824, %v2029
        %v2065 = vadd.f32 %v1825, %v2031
        %v2066 = vadd.f32 %v1826, %v2033
        %v2083 = vunpack.c.l.b16 %v367
        %v2084 = vunpack.c.l.b16 %v368
        %v2085 = vunpack.c.l.b16 %v369
        %v2086 = vunpack.c.l.b16 %v370
        %v2087 = vunpack.c.l.b16 %v371
        %v2088 = vunpack.c.l.b16 %v372
        %v2089 = vunpack.c.l.b16 %v373
        %v2090 = vunpack.c.l.b16 %v374
        %v2091 = vunpack.c.l.b16 %v375
        %v2092 = vunpack.c.l.b16 %v376
        %v2093 = vunpack.c.l.b16 %v377
        %v2094 = vunpack.c.l.b16 %v378
        %v2095 = vunpack.c.l.b16 %v379
        %v2096 = vunpack.c.l.b16 %v380
        %v2097 = vunpack.c.l.b16 %v381
        %v2098 = vunpack.c.l.b16 %v382
        %v2099 = vpack.c.b16 %v2084, %v2083
        %v2100 = vpack.c.b16 %v2086, %v2085
        %v2101 = vpack.c.b16 %v2088, %v2087
        %v2102 = vpack.c.b16 %v2090, %v2089
        %v2103 = vpack.c.b16 %v2092, %v2091
        %v2104 = vpack.c.b16 %v2094, %v2093
        %v2105 = vpack.c.b16 %v2096, %v2095
        %v2106 = vpack.c.b16 %v2098, %v2097
        %v2108 = vsel %vm925, %v2099, 0
        %v2111 = vsel %vm925, %v2100, 0
        %v2114 = vsel %vm925, %v2101, 0
        %v2117 = vsel %vm925, %v2102, 0
        %v2120 = vsel %vm925, %v2103, 0
        %v2123 = vsel %vm925, %v2104, 0
        %v2126 = vsel %vm925, %v2105, 0
        %v2129 = vsel %vm925, %v2106, 0
        %v2132 = vsel %vm950, %v734, 0
        %v2135 = vsel %vm950, %v735, 0
        %2137 = vmatprep.subr.bf16.mxu0 0
        %2138 = vmatpush1.bf16.msra.mxu0 0
        %2139 = vmatprep.subr.bf16.mxu0 0
        %2140 = vmatpush1.bf16.msra.mxu0 0
        %2141 = vmatprep.subr.bf16.mxu0 0
        %2142 = vmatpush1.bf16.msra.mxu0 0
        %2143 = vmatprep.subr.bf16.mxu0 0
        %2144 = vmatpush1.bf16.msra.mxu0 0
        %2145 = vmatprep.subr.bf16.mxu0 0
        %2146 = vmatpush1.bf16.msra.mxu0 0
        %2147 = vmatprep.subr.bf16.mxu0 %v2135
        %2148 = vmatpush1.bf16.msra.mxu0 %v2132
        %2149 = vmatprep.subr.bf16.mxu0 %v733
        %2150 = vmatpush1.bf16.msra.mxu0 %v732
        %2151 = vmatprep.subr.bf16.mxu0 %v731
        %2152 = vmatpush1.bf16.msra.mxu0 %v730
        %2153 = vmatprep.subr.bf16.mxu0 0
        %2154 = vmatpush2.bf16.msra.mxu0 0
        %2155 = vmatprep.subr.bf16.mxu0 0
        %2156 = vmatpush2.bf16.msra.mxu0 0
        %2157 = vmatprep.subr.bf16.mxu0 0
        %2158 = vmatpush2.bf16.msra.mxu0 0
        %2159 = vmatprep.subr.bf16.mxu0 0
        %2160 = vmatpush2.bf16.msra.mxu0 0
        %2161 = vmatprep.subr.bf16.mxu0 0
        %2162 = vmatpush2.bf16.msra.mxu0 0
        %2163 = vmatprep.subr.bf16.mxu0 0
        %2164 = vmatpush2.bf16.msra.mxu0 0
        %2165 = vmatprep.subr.bf16.mxu0 0
        %2166 = vmatpush2.bf16.msra.mxu0 0
        %2167 = vmatprep.subr.bf16.mxu0 0
        %2168 = vmatpush2.bf16.msra.mxu0 0
        %2169 = vmatprep.mubr.bf16.mxu0 0
        %2170 = vmatmul.mubr.bf16.gmra.mxu0 %v2108
        %v2171 = vpop.f32.mrf.mxu0
        %v2172 = vadd.f32 0.0, %v2171
        %v2173 = vpop.f32.mrf.mxu0
        %v2174 = vadd.f32 0.0, %v2173
        %v2175 = vpop.f32.mrf.mxu0
        %v2176 = vadd.f32 0.0, %v2175
        %v2177 = vpop.f32.mrf.mxu0
        %v2178 = vadd.f32 0.0, %v2177
        %2179 = vmatprep.mubr.bf16.mxu0 0
        %2180 = vmatmul.mubr.bf16.gmra.mxu0 %v2111
        %v2181 = vpop.f32.mrf.mxu0
        %v2182 = vadd.f32 0.0, %v2181
        %v2183 = vpop.f32.mrf.mxu0
        %v2184 = vadd.f32 0.0, %v2183
        %v2185 = vpop.f32.mrf.mxu0
        %v2186 = vadd.f32 0.0, %v2185
        %v2187 = vpop.f32.mrf.mxu0
        %v2188 = vadd.f32 0.0, %v2187
        %2189 = vmatprep.mubr.bf16.mxu0 0
        %2190 = vmatmul.mubr.bf16.gmra.mxu0 %v2114
        %v2191 = vpop.f32.mrf.mxu0
        %v2192 = vadd.f32 0.0, %v2191
        %v2193 = vpop.f32.mrf.mxu0
        %v2194 = vadd.f32 0.0, %v2193
        %v2195 = vpop.f32.mrf.mxu0
        %v2196 = vadd.f32 0.0, %v2195
        %v2197 = vpop.f32.mrf.mxu0
        %v2198 = vadd.f32 0.0, %v2197
        %2199 = vmatprep.mubr.bf16.mxu0 0
        %2200 = vmatmul.mubr.bf16.gmra.mxu0 %v2117
        %v2201 = vpop.f32.mrf.mxu0
        %v2202 = vadd.f32 0.0, %v2201
        %v2203 = vpop.f32.mrf.mxu0
        %v2204 = vadd.f32 0.0, %v2203
        %v2205 = vpop.f32.mrf.mxu0
        %v2206 = vadd.f32 0.0, %v2205
        %v2207 = vpop.f32.mrf.mxu0
        %v2208 = vadd.f32 0.0, %v2207
        %2209 = vmatprep.mubr.bf16.mxu0 0
        %2210 = vmatmul.mubr.bf16.gmra.mxu0 %v2120
        %v2211 = vpop.f32.mrf.mxu0
        %v2212 = vadd.f32 0.0, %v2211
        %v2213 = vpop.f32.mrf.mxu0
        %v2214 = vadd.f32 0.0, %v2213
        %v2215 = vpop.f32.mrf.mxu0
        %v2216 = vadd.f32 0.0, %v2215
        %v2217 = vpop.f32.mrf.mxu0
        %v2218 = vadd.f32 0.0, %v2217
        %2219 = vmatprep.mubr.bf16.mxu0 0
        %2220 = vmatmul.mubr.bf16.gmra.mxu0 %v2123
        %v2221 = vpop.f32.mrf.mxu0
        %v2222 = vadd.f32 0.0, %v2221
        %v2223 = vpop.f32.mrf.mxu0
        %v2224 = vadd.f32 0.0, %v2223
        %v2225 = vpop.f32.mrf.mxu0
        %v2226 = vadd.f32 0.0, %v2225
        %v2227 = vpop.f32.mrf.mxu0
        %v2228 = vadd.f32 0.0, %v2227
        %2229 = vmatprep.mubr.bf16.mxu0 0
        %2230 = vmatmul.mubr.bf16.gmra.mxu0 %v2126
        %v2231 = vpop.f32.mrf.mxu0
        %v2232 = vadd.f32 0.0, %v2231
        %v2233 = vpop.f32.mrf.mxu0
        %v2234 = vadd.f32 0.0, %v2233
        %v2235 = vpop.f32.mrf.mxu0
        %v2236 = vadd.f32 0.0, %v2235
        %v2237 = vpop.f32.mrf.mxu0
        %v2238 = vadd.f32 0.0, %v2237
        %2239 = vmatprep.mubr.bf16.mxu0 0
        %2240 = vmatmul.mubr.bf16.gmra.mxu0 %v2129
        %v2241 = vpop.f32.mrf.mxu0
        %v2242 = vadd.f32 0.0, %v2241
        %v2243 = vpop.f32.mrf.mxu0
        %v2244 = vadd.f32 0.0, %v2243
        %v2245 = vpop.f32.mrf.mxu0
        %v2246 = vadd.f32 0.0, %v2245
        %v2247 = vpop.f32.mrf.mxu0
        %v2248 = vadd.f32 0.0, %v2247
        %2249 = vdwg.mxu0
        %v2250 = vadd.f32 %v2035, %v2172
        %v2251 = vadd.f32 %v2036, %v2174
        %v2252 = vadd.f32 %v2037, %v2176
        %v2253 = vadd.f32 %v2038, %v2178
        %v2254 = vadd.f32 %v2039, %v2182
        %v2255 = vadd.f32 %v2040, %v2184
        %v2256 = vadd.f32 %v2041, %v2186
        %v2257 = vadd.f32 %v2042, %v2188
        %v2258 = vadd.f32 %v2043, %v2192
        %v2259 = vadd.f32 %v2044, %v2194
        %v2260 = vadd.f32 %v2045, %v2196
        %v2261 = vadd.f32 %v2046, %v2198
        %v2262 = vadd.f32 %v2047, %v2202
        %v2263 = vadd.f32 %v2048, %v2204
        %v2264 = vadd.f32 %v2049, %v2206
        %v2265 = vadd.f32 %v2050, %v2208
        %v2266 = vadd.f32 %v2051, %v2212
        %v2267 = vadd.f32 %v2052, %v2214
        %v2268 = vadd.f32 %v2053, %v2216
        %v2269 = vadd.f32 %v2054, %v2218
        %v2270 = vadd.f32 %v2055, %v2222
        %v2271 = vadd.f32 %v2056, %v2224
        %v2272 = vadd.f32 %v2057, %v2226
        %v2273 = vadd.f32 %v2058, %v2228
        %v2274 = vadd.f32 %v2059, %v2232
        %v2275 = vadd.f32 %v2060, %v2234
        %v2276 = vadd.f32 %v2061, %v2236
        %v2277 = vadd.f32 %v2062, %v2238
        %v2278 = vadd.f32 %v2063, %v2242
        %v2279 = vadd.f32 %v2064, %v2244
        %v2280 = vadd.f32 %v2065, %v2246
        %v2281 = vadd.f32 %v2066, %v2248
        %v2298 = vunpack.c.l.b16 %v383
        %v2299 = vunpack.c.l.b16 %v384
        %v2300 = vunpack.c.l.b16 %v385
        %v2301 = vunpack.c.l.b16 %v386
        %v2302 = vunpack.c.l.b16 %v387
        %v2303 = vunpack.c.l.b16 %v388
        %v2304 = vunpack.c.l.b16 %v389
        %v2305 = vunpack.c.l.b16 %v390
        %v2306 = vunpack.c.l.b16 %v391
        %v2307 = vunpack.c.l.b16 %v392
        %v2308 = vunpack.c.l.b16 %v393
        %v2309 = vunpack.c.l.b16 %v394
        %v2310 = vunpack.c.l.b16 %v395
        %v2311 = vunpack.c.l.b16 %v396
        %v2312 = vunpack.c.l.b16 %v397
        %v2313 = vunpack.c.l.b16 %v398
        %v2314 = vpack.c.b16 %v2299, %v2298
        %v2315 = vpack.c.b16 %v2301, %v2300
        %v2316 = vpack.c.b16 %v2303, %v2302
        %v2317 = vpack.c.b16 %v2305, %v2304
        %v2318 = vpack.c.b16 %v2307, %v2306
        %v2319 = vpack.c.b16 %v2309, %v2308
        %v2320 = vpack.c.b16 %v2311, %v2310
        %v2321 = vpack.c.b16 %v2313, %v2312
        %v2323 = vsel %vm925, %v2314, 0
        %v2326 = vsel %vm925, %v2315, 0
        %v2329 = vsel %vm925, %v2316, 0
        %v2332 = vsel %vm925, %v2317, 0
        %v2335 = vsel %vm925, %v2318, 0
        %v2338 = vsel %vm925, %v2319, 0
        %v2341 = vsel %vm925, %v2320, 0
        %v2344 = vsel %vm925, %v2321, 0
        %v2347 = vsel %vm950, %v780, 0
        %v2350 = vsel %vm950, %v781, 0
        %2352 = vmatprep.subr.bf16.mxu0 0
        %2353 = vmatpush1.bf16.msra.mxu0 0
        %2354 = vmatprep.subr.bf16.mxu0 0
        %2355 = vmatpush1.bf16.msra.mxu0 0
        %2356 = vmatprep.subr.bf16.mxu0 0
        %2357 = vmatpush1.bf16.msra.mxu0 0
        %2358 = vmatprep.subr.bf16.mxu0 0
        %2359 = vmatpush1.bf16.msra.mxu0 0
        %2360 = vmatprep.subr.bf16.mxu0 0
        %2361 = vmatpush1.bf16.msra.mxu0 0
        %2362 = vmatprep.subr.bf16.mxu0 %v2350
        %2363 = vmatpush1.bf16.msra.mxu0 %v2347
        %2364 = vmatprep.subr.bf16.mxu0 %v779
        %2365 = vmatpush1.bf16.msra.mxu0 %v778
        %2366 = vmatprep.subr.bf16.mxu0 %v777
        %2367 = vmatpush1.bf16.msra.mxu0 %v776
        %2368 = vmatprep.subr.bf16.mxu0 0
        %2369 = vmatpush2.bf16.msra.mxu0 0
        %2370 = vmatprep.subr.bf16.mxu0 0
        %2371 = vmatpush2.bf16.msra.mxu0 0
        %2372 = vmatprep.subr.bf16.mxu0 0
        %2373 = vmatpush2.bf16.msra.mxu0 0
        %2374 = vmatprep.subr.bf16.mxu0 0
        %2375 = vmatpush2.bf16.msra.mxu0 0
        %2376 = vmatprep.subr.bf16.mxu0 0
        %2377 = vmatpush2.bf16.msra.mxu0 0
        %2378 = vmatprep.subr.bf16.mxu0 0
        %2379 = vmatpush2.bf16.msra.mxu0 0
        %2380 = vmatprep.subr.bf16.mxu0 0
        %2381 = vmatpush2.bf16.msra.mxu0 0
        %2382 = vmatprep.subr.bf16.mxu0 0
        %2383 = vmatpush2.bf16.msra.mxu0 0
        %2384 = vmatprep.mubr.bf16.mxu0 0
        %2385 = vmatmul.mubr.bf16.gmra.mxu0 %v2323
        %v2386 = vpop.f32.mrf.mxu0
        %v2387 = vadd.f32 0.0, %v2386
        %v2388 = vpop.f32.mrf.mxu0
        %v2389 = vadd.f32 0.0, %v2388
        %v2390 = vpop.f32.mrf.mxu0
        %v2391 = vadd.f32 0.0, %v2390
        %v2392 = vpop.f32.mrf.mxu0
        %v2393 = vadd.f32 0.0, %v2392
        %2394 = vmatprep.mubr.bf16.mxu0 0
        %2395 = vmatmul.mubr.bf16.gmra.mxu0 %v2326
        %v2396 = vpop.f32.mrf.mxu0
        %v2397 = vadd.f32 0.0, %v2396
        %v2398 = vpop.f32.mrf.mxu0
        %v2399 = vadd.f32 0.0, %v2398
        %v2400 = vpop.f32.mrf.mxu0
        %v2401 = vadd.f32 0.0, %v2400
        %v2402 = vpop.f32.mrf.mxu0
        %v2403 = vadd.f32 0.0, %v2402
        %2404 = vmatprep.mubr.bf16.mxu0 0
        %2405 = vmatmul.mubr.bf16.gmra.mxu0 %v2329
        %v2406 = vpop.f32.mrf.mxu0
        %v2407 = vadd.f32 0.0, %v2406
        %v2408 = vpop.f32.mrf.mxu0
        %v2409 = vadd.f32 0.0, %v2408
        %v2410 = vpop.f32.mrf.mxu0
        %v2411 = vadd.f32 0.0, %v2410
        %v2412 = vpop.f32.mrf.mxu0
        %v2413 = vadd.f32 0.0, %v2412
        %2414 = vmatprep.mubr.bf16.mxu0 0
        %2415 = vmatmul.mubr.bf16.gmra.mxu0 %v2332
        %v2416 = vpop.f32.mrf.mxu0
        %v2417 = vadd.f32 0.0, %v2416
        %v2418 = vpop.f32.mrf.mxu0
        %v2419 = vadd.f32 0.0, %v2418
        %v2420 = vpop.f32.mrf.mxu0
        %v2421 = vadd.f32 0.0, %v2420
        %v2422 = vpop.f32.mrf.mxu0
        %v2423 = vadd.f32 0.0, %v2422
        %2424 = vmatprep.mubr.bf16.mxu0 0
        %2425 = vmatmul.mubr.bf16.gmra.mxu0 %v2335
        %v2426 = vpop.f32.mrf.mxu0
        %v2427 = vadd.f32 0.0, %v2426
        %v2428 = vpop.f32.mrf.mxu0
        %v2429 = vadd.f32 0.0, %v2428
        %v2430 = vpop.f32.mrf.mxu0
        %v2431 = vadd.f32 0.0, %v2430
        %v2432 = vpop.f32.mrf.mxu0
        %v2433 = vadd.f32 0.0, %v2432
        %2434 = vmatprep.mubr.bf16.mxu0 0
        %2435 = vmatmul.mubr.bf16.gmra.mxu0 %v2338
        %v2436 = vpop.f32.mrf.mxu0
        %v2437 = vadd.f32 0.0, %v2436
        %v2438 = vpop.f32.mrf.mxu0
        %v2439 = vadd.f32 0.0, %v2438
        %v2440 = vpop.f32.mrf.mxu0
        %v2441 = vadd.f32 0.0, %v2440
        %v2442 = vpop.f32.mrf.mxu0
        %v2443 = vadd.f32 0.0, %v2442
        %2444 = vmatprep.mubr.bf16.mxu0 0
        %2445 = vmatmul.mubr.bf16.gmra.mxu0 %v2341
        %v2446 = vpop.f32.mrf.mxu0
        %v2447 = vadd.f32 0.0, %v2446
        %v2448 = vpop.f32.mrf.mxu0
        %v2449 = vadd.f32 0.0, %v2448
        %v2450 = vpop.f32.mrf.mxu0
        %v2451 = vadd.f32 0.0, %v2450
        %v2452 = vpop.f32.mrf.mxu0
        %v2453 = vadd.f32 0.0, %v2452
        %2454 = vmatprep.mubr.bf16.mxu0 0
        %2455 = vmatmul.mubr.bf16.gmra.mxu0 %v2344
        %v2456 = vpop.f32.mrf.mxu0
        %v2457 = vadd.f32 0.0, %v2456
        %v2458 = vpop.f32.mrf.mxu0
        %v2459 = vadd.f32 0.0, %v2458
        %v2460 = vpop.f32.mrf.mxu0
        %v2461 = vadd.f32 0.0, %v2460
        %v2462 = vpop.f32.mrf.mxu0
        %v2463 = vadd.f32 0.0, %v2462
        %2464 = vdwg.mxu0
        %v2465 = vadd.f32 %v2250, %v2387
        %v2466 = vadd.f32 %v2251, %v2389
        %v2467 = vadd.f32 %v2252, %v2391
        %v2468 = vadd.f32 %v2253, %v2393
        %v2469 = vadd.f32 %v2254, %v2397
        %v2470 = vadd.f32 %v2255, %v2399
        %v2471 = vadd.f32 %v2256, %v2401
        %v2472 = vadd.f32 %v2257, %v2403
        %v2473 = vadd.f32 %v2258, %v2407
        %v2474 = vadd.f32 %v2259, %v2409
        %v2475 = vadd.f32 %v2260, %v2411
        %v2476 = vadd.f32 %v2261, %v2413
        %v2477 = vadd.f32 %v2262, %v2417
        %v2478 = vadd.f32 %v2263, %v2419
        %v2479 = vadd.f32 %v2264, %v2421
        %v2480 = vadd.f32 %v2265, %v2423
        %v2481 = vadd.f32 %v2266, %v2427
        %v2482 = vadd.f32 %v2267, %v2429
        %v2483 = vadd.f32 %v2268, %v2431
        %v2484 = vadd.f32 %v2269, %v2433
        %v2485 = vadd.f32 %v2270, %v2437
        %v2486 = vadd.f32 %v2271, %v2439
        %v2487 = vadd.f32 %v2272, %v2441
        %v2488 = vadd.f32 %v2273, %v2443
        %v2489 = vadd.f32 %v2274, %v2447
        %v2490 = vadd.f32 %v2275, %v2449
        %v2491 = vadd.f32 %v2276, %v2451
        %v2492 = vadd.f32 %v2277, %v2453
        %v2493 = vadd.f32 %v2278, %v2457
        %v2494 = vadd.f32 %v2279, %v2459
        %v2495 = vadd.f32 %v2280, %v2461
        %v2496 = vadd.f32 %v2281, %v2463
        %v2513 = vunpack.c.l.b16 %v399
        %v2514 = vunpack.c.l.b16 %v400
        %v2515 = vunpack.c.l.b16 %v401
        %v2516 = vunpack.c.l.b16 %v402
        %v2517 = vunpack.c.l.b16 %v403
        %v2518 = vunpack.c.l.b16 %v404
        %v2519 = vunpack.c.l.b16 %v405
        %v2520 = vunpack.c.l.b16 %v406
        %v2521 = vunpack.c.l.b16 %v407
        %v2522 = vunpack.c.l.b16 %v408
        %v2523 = vunpack.c.l.b16 %v409
        %v2524 = vunpack.c.l.b16 %v410
        %v2525 = vunpack.c.l.b16 %v411
        %v2526 = vunpack.c.l.b16 %v412
        %v2527 = vunpack.c.l.b16 %v413
        %v2528 = vunpack.c.l.b16 %v414
        %v2529 = vpack.c.b16 %v2514, %v2513
        %v2530 = vpack.c.b16 %v2516, %v2515
        %v2531 = vpack.c.b16 %v2518, %v2517
        %v2532 = vpack.c.b16 %v2520, %v2519
        %v2533 = vpack.c.b16 %v2522, %v2521
        %v2534 = vpack.c.b16 %v2524, %v2523
        %v2535 = vpack.c.b16 %v2526, %v2525
        %v2536 = vpack.c.b16 %v2528, %v2527
        %v2538 = vsel %vm925, %v2529, 0
        %v2541 = vsel %vm925, %v2530, 0
        %v2544 = vsel %vm925, %v2531, 0
        %v2547 = vsel %vm925, %v2532, 0
        %v2550 = vsel %vm925, %v2533, 0
        %v2553 = vsel %vm925, %v2534, 0
        %v2556 = vsel %vm925, %v2535, 0
        %v2559 = vsel %vm925, %v2536, 0
        %v2562 = vsel %vm950, %v826, 0
        %v2565 = vsel %vm950, %v827, 0
        %2567 = vmatprep.subr.bf16.mxu0 0
        %2568 = vmatpush1.bf16.msra.mxu0 0
        %2569 = vmatprep.subr.bf16.mxu0 0
        %2570 = vmatpush1.bf16.msra.mxu0 0
        %2571 = vmatprep.subr.bf16.mxu0 0
        %2572 = vmatpush1.bf16.msra.mxu0 0
        %2573 = vmatprep.subr.bf16.mxu0 0
        %2574 = vmatpush1.bf16.msra.mxu0 0
        %2575 = vmatprep.subr.bf16.mxu0 0
        %2576 = vmatpush1.bf16.msra.mxu0 0
        %2577 = vmatprep.subr.bf16.mxu0 %v2565
        %2578 = vmatpush1.bf16.msra.mxu0 %v2562
        %2579 = vmatprep.subr.bf16.mxu0 %v825
        %2580 = vmatpush1.bf16.msra.mxu0 %v824
        %2581 = vmatprep.subr.bf16.mxu0 %v823
        %2582 = vmatpush1.bf16.msra.mxu0 %v822
        %2583 = vmatprep.subr.bf16.mxu0 0
        %2584 = vmatpush2.bf16.msra.mxu0 0
        %2585 = vmatprep.subr.bf16.mxu0 0
        %2586 = vmatpush2.bf16.msra.mxu0 0
        %2587 = vmatprep.subr.bf16.mxu0 0
        %2588 = vmatpush2.bf16.msra.mxu0 0
        %2589 = vmatprep.subr.bf16.mxu0 0
        %2590 = vmatpush2.bf16.msra.mxu0 0
        %2591 = vmatprep.subr.bf16.mxu0 0
        %2592 = vmatpush2.bf16.msra.mxu0 0
        %2593 = vmatprep.subr.bf16.mxu0 0
        %2594 = vmatpush2.bf16.msra.mxu0 0
        %2595 = vmatprep.subr.bf16.mxu0 0
        %2596 = vmatpush2.bf16.msra.mxu0 0
        %2597 = vmatprep.subr.bf16.mxu0 0
        %2598 = vmatpush2.bf16.msra.mxu0 0
        %2599 = vmatprep.mubr.bf16.mxu0 0
        %2600 = vmatmul.mubr.bf16.gmra.mxu0 %v2538
        %v2601 = vpop.f32.mrf.mxu0
        %v2602 = vadd.f32 0.0, %v2601
        %v2603 = vpop.f32.mrf.mxu0
        %v2604 = vadd.f32 0.0, %v2603
        %v2605 = vpop.f32.mrf.mxu0
        %v2606 = vadd.f32 0.0, %v2605
        %v2607 = vpop.f32.mrf.mxu0
        %v2608 = vadd.f32 0.0, %v2607
        %2609 = vmatprep.mubr.bf16.mxu0 0
        %2610 = vmatmul.mubr.bf16.gmra.mxu0 %v2541
        %v2611 = vpop.f32.mrf.mxu0
        %v2612 = vadd.f32 0.0, %v2611
        %v2613 = vpop.f32.mrf.mxu0
        %v2614 = vadd.f32 0.0, %v2613
        %v2615 = vpop.f32.mrf.mxu0
        %v2616 = vadd.f32 0.0, %v2615
        %v2617 = vpop.f32.mrf.mxu0
        %v2618 = vadd.f32 0.0, %v2617
        %2619 = vmatprep.mubr.bf16.mxu0 0
        %2620 = vmatmul.mubr.bf16.gmra.mxu0 %v2544
        %v2621 = vpop.f32.mrf.mxu0
        %v2622 = vadd.f32 0.0, %v2621
        %v2623 = vpop.f32.mrf.mxu0
        %v2624 = vadd.f32 0.0, %v2623
        %v2625 = vpop.f32.mrf.mxu0
        %v2626 = vadd.f32 0.0, %v2625
        %v2627 = vpop.f32.mrf.mxu0
        %v2628 = vadd.f32 0.0, %v2627
        %2629 = vmatprep.mubr.bf16.mxu0 0
        %2630 = vmatmul.mubr.bf16.gmra.mxu0 %v2547
        %v2631 = vpop.f32.mrf.mxu0
        %v2632 = vadd.f32 0.0, %v2631
        %v2633 = vpop.f32.mrf.mxu0
        %v2634 = vadd.f32 0.0, %v2633
        %v2635 = vpop.f32.mrf.mxu0
        %v2636 = vadd.f32 0.0, %v2635
        %v2637 = vpop.f32.mrf.mxu0
        %v2638 = vadd.f32 0.0, %v2637
        %2639 = vmatprep.mubr.bf16.mxu0 0
        %2640 = vmatmul.mubr.bf16.gmra.mxu0 %v2550
        %v2641 = vpop.f32.mrf.mxu0
        %v2642 = vadd.f32 0.0, %v2641
        %v2643 = vpop.f32.mrf.mxu0
        %v2644 = vadd.f32 0.0, %v2643
        %v2645 = vpop.f32.mrf.mxu0
        %v2646 = vadd.f32 0.0, %v2645
        %v2647 = vpop.f32.mrf.mxu0
        %v2648 = vadd.f32 0.0, %v2647
        %2649 = vmatprep.mubr.bf16.mxu0 0
        %2650 = vmatmul.mubr.bf16.gmra.mxu0 %v2553
        %v2651 = vpop.f32.mrf.mxu0
        %v2652 = vadd.f32 0.0, %v2651
        %v2653 = vpop.f32.mrf.mxu0
        %v2654 = vadd.f32 0.0, %v2653
        %v2655 = vpop.f32.mrf.mxu0
        %v2656 = vadd.f32 0.0, %v2655
        %v2657 = vpop.f32.mrf.mxu0
        %v2658 = vadd.f32 0.0, %v2657
        %2659 = vmatprep.mubr.bf16.mxu0 0
        %2660 = vmatmul.mubr.bf16.gmra.mxu0 %v2556
        %v2661 = vpop.f32.mrf.mxu0
        %v2662 = vadd.f32 0.0, %v2661
        %v2663 = vpop.f32.mrf.mxu0
        %v2664 = vadd.f32 0.0, %v2663
        %v2665 = vpop.f32.mrf.mxu0
        %v2666 = vadd.f32 0.0, %v2665
        %v2667 = vpop.f32.mrf.mxu0
        %v2668 = vadd.f32 0.0, %v2667
        %2669 = vmatprep.mubr.bf16.mxu0 0
        %2670 = vmatmul.mubr.bf16.gmra.mxu0 %v2559
        %v2671 = vpop.f32.mrf.mxu0
        %v2672 = vadd.f32 0.0, %v2671
        %v2673 = vpop.f32.mrf.mxu0
        %v2674 = vadd.f32 0.0, %v2673
        %v2675 = vpop.f32.mrf.mxu0
        %v2676 = vadd.f32 0.0, %v2675
        %v2677 = vpop.f32.mrf.mxu0
        %v2678 = vadd.f32 0.0, %v2677
        %2679 = vdwg.mxu0
        %v2680 = vadd.f32 %v2465, %v2602
        %v2681 = vadd.f32 %v2466, %v2604
        %v2682 = vadd.f32 %v2467, %v2606
        %v2683 = vadd.f32 %v2468, %v2608
        %v2684 = vadd.f32 %v2469, %v2612
        %v2685 = vadd.f32 %v2470, %v2614
        %v2686 = vadd.f32 %v2471, %v2616
        %v2687 = vadd.f32 %v2472, %v2618
        %v2688 = vadd.f32 %v2473, %v2622
        %v2689 = vadd.f32 %v2474, %v2624
        %v2690 = vadd.f32 %v2475, %v2626
        %v2691 = vadd.f32 %v2476, %v2628
        %v2692 = vadd.f32 %v2477, %v2632
        %v2693 = vadd.f32 %v2478, %v2634
        %v2694 = vadd.f32 %v2479, %v2636
        %v2695 = vadd.f32 %v2480, %v2638
        %v2696 = vadd.f32 %v2481, %v2642
        %v2697 = vadd.f32 %v2482, %v2644
        %v2698 = vadd.f32 %v2483, %v2646
        %v2699 = vadd.f32 %v2484, %v2648
        %v2700 = vadd.f32 %v2485, %v2652
        %v2701 = vadd.f32 %v2486, %v2654
        %v2702 = vadd.f32 %v2487, %v2656
        %v2703 = vadd.f32 %v2488, %v2658
        %v2704 = vadd.f32 %v2489, %v2662
        %v2705 = vadd.f32 %v2490, %v2664
        %v2706 = vadd.f32 %v2491, %v2666
        %v2707 = vadd.f32 %v2492, %v2668
        %v2708 = vadd.f32 %v2493, %v2672
        %v2709 = vadd.f32 %v2494, %v2674
        %v2710 = vadd.f32 %v2495, %v2676
        %v2711 = vadd.f32 %v2496, %v2678
        %v2728 = vunpack.c.l.b16 %v415
        %v2729 = vunpack.c.l.b16 %v416
        %v2730 = vunpack.c.l.b16 %v417
        %v2731 = vunpack.c.l.b16 %v418
        %v2732 = vunpack.c.l.b16 %v419
        %v2733 = vunpack.c.l.b16 %v420
        %v2734 = vunpack.c.l.b16 %v421
        %v2735 = vunpack.c.l.b16 %v422
        %v2736 = vunpack.c.l.b16 %v423
        %v2737 = vunpack.c.l.b16 %v424
        %v2738 = vunpack.c.l.b16 %v425
        %v2739 = vunpack.c.l.b16 %v426
        %v2740 = vunpack.c.l.b16 %v427
        %v2741 = vunpack.c.l.b16 %v428
        %v2742 = vunpack.c.l.b16 %v429
        %v2743 = vunpack.c.l.b16 %v430
        %v2744 = vpack.c.b16 %v2729, %v2728
        %v2745 = vpack.c.b16 %v2731, %v2730
        %v2746 = vpack.c.b16 %v2733, %v2732
        %v2747 = vpack.c.b16 %v2735, %v2734
        %v2748 = vpack.c.b16 %v2737, %v2736
        %v2749 = vpack.c.b16 %v2739, %v2738
        %v2750 = vpack.c.b16 %v2741, %v2740
        %v2751 = vpack.c.b16 %v2743, %v2742
        %v2753 = vsel %vm925, %v2744, 0
        %v2756 = vsel %vm925, %v2745, 0
        %v2759 = vsel %vm925, %v2746, 0
        %v2762 = vsel %vm925, %v2747, 0
        %v2765 = vsel %vm925, %v2748, 0
        %v2768 = vsel %vm925, %v2749, 0
        %v2771 = vsel %vm925, %v2750, 0
        %v2774 = vsel %vm925, %v2751, 0
        %v2777 = vsel %vm950, %v883, 0
        %v2780 = vsel %vm950, %v884, 0
        %2782 = vmatprep.subr.bf16.mxu0 0
        %2783 = vmatpush1.bf16.msra.mxu0 0
        %2784 = vmatprep.subr.bf16.mxu0 0
        %2785 = vmatpush1.bf16.msra.mxu0 0
        %2786 = vmatprep.subr.bf16.mxu0 0
        %2787 = vmatpush1.bf16.msra.mxu0 0
        %2788 = vmatprep.subr.bf16.mxu0 0
        %2789 = vmatpush1.bf16.msra.mxu0 0
        %2790 = vmatprep.subr.bf16.mxu0 0
        %2791 = vmatpush1.bf16.msra.mxu0 0
        %2792 = vmatprep.subr.bf16.mxu0 %v2780
        %2793 = vmatpush1.bf16.msra.mxu0 %v2777
        %2794 = vmatprep.subr.bf16.mxu0 %v882
        %2795 = vmatpush1.bf16.msra.mxu0 %v881
        %2796 = vmatprep.subr.bf16.mxu0 %v880
        %2797 = vmatpush1.bf16.msra.mxu0 %v879
        %2798 = vmatprep.subr.bf16.mxu0 0
        %2799 = vmatpush2.bf16.msra.mxu0 0
        %2800 = vmatprep.subr.bf16.mxu0 0
        %2801 = vmatpush2.bf16.msra.mxu0 0
        %2802 = vmatprep.subr.bf16.mxu0 0
        %2803 = vmatpush2.bf16.msra.mxu0 0
        %2804 = vmatprep.subr.bf16.mxu0 0
        %2805 = vmatpush2.bf16.msra.mxu0 0
        %2806 = vmatprep.subr.bf16.mxu0 0
        %2807 = vmatpush2.bf16.msra.mxu0 0
        %2808 = vmatprep.subr.bf16.mxu0 0
        %2809 = vmatpush2.bf16.msra.mxu0 0
        %2810 = vmatprep.subr.bf16.mxu0 0
        %2811 = vmatpush2.bf16.msra.mxu0 0
        %2812 = vmatprep.subr.bf16.mxu0 0
        %2813 = vmatpush2.bf16.msra.mxu0 0
        %2814 = vmatprep.mubr.bf16.mxu0 0
        %2815 = vmatmul.mubr.bf16.gmra.mxu0 %v2753
        %v2816 = vpop.f32.mrf.mxu0
        %v2817 = vadd.f32 0.0, %v2816
        %v2818 = vpop.f32.mrf.mxu0
        %v2819 = vadd.f32 0.0, %v2818
        %v2820 = vpop.f32.mrf.mxu0
        %v2821 = vadd.f32 0.0, %v2820
        %v2822 = vpop.f32.mrf.mxu0
        %v2823 = vadd.f32 0.0, %v2822
        %2824 = vmatprep.mubr.bf16.mxu0 0
        %2825 = vmatmul.mubr.bf16.gmra.mxu0 %v2756
        %v2826 = vpop.f32.mrf.mxu0
        %v2827 = vadd.f32 0.0, %v2826
        %v2828 = vpop.f32.mrf.mxu0
        %v2829 = vadd.f32 0.0, %v2828
        %v2830 = vpop.f32.mrf.mxu0
        %v2831 = vadd.f32 0.0, %v2830
        %v2832 = vpop.f32.mrf.mxu0
        %v2833 = vadd.f32 0.0, %v2832
        %2834 = vmatprep.mubr.bf16.mxu0 0
        %2835 = vmatmul.mubr.bf16.gmra.mxu0 %v2759
        %v2836 = vpop.f32.mrf.mxu0
        %v2837 = vadd.f32 0.0, %v2836
        %v2838 = vpop.f32.mrf.mxu0
        %v2839 = vadd.f32 0.0, %v2838
        %v2840 = vpop.f32.mrf.mxu0
        %v2841 = vadd.f32 0.0, %v2840
        %v2842 = vpop.f32.mrf.mxu0
        %v2843 = vadd.f32 0.0, %v2842
        %2844 = vmatprep.mubr.bf16.mxu0 0
        %2845 = vmatmul.mubr.bf16.gmra.mxu0 %v2762
        %v2846 = vpop.f32.mrf.mxu0
        %v2847 = vadd.f32 0.0, %v2846
        %v2848 = vpop.f32.mrf.mxu0
        %v2849 = vadd.f32 0.0, %v2848
        %v2850 = vpop.f32.mrf.mxu0
        %v2851 = vadd.f32 0.0, %v2850
        %v2852 = vpop.f32.mrf.mxu0
        %v2853 = vadd.f32 0.0, %v2852
        %2854 = vmatprep.mubr.bf16.mxu0 0
        %2855 = vmatmul.mubr.bf16.gmra.mxu0 %v2765
        %v2856 = vpop.f32.mrf.mxu0
        %v2857 = vadd.f32 0.0, %v2856
        %v2858 = vpop.f32.mrf.mxu0
        %v2859 = vadd.f32 0.0, %v2858
        %v2860 = vpop.f32.mrf.mxu0
        %v2861 = vadd.f32 0.0, %v2860
        %v2862 = vpop.f32.mrf.mxu0
        %v2863 = vadd.f32 0.0, %v2862
        %2864 = vmatprep.mubr.bf16.mxu0 0
        %2865 = vmatmul.mubr.bf16.gmra.mxu0 %v2768
        %v2866 = vpop.f32.mrf.mxu0
        %v2867 = vadd.f32 0.0, %v2866
        %v2868 = vpop.f32.mrf.mxu0
        %v2869 = vadd.f32 0.0, %v2868
        %v2870 = vpop.f32.mrf.mxu0
        %v2871 = vadd.f32 0.0, %v2870
        %v2872 = vpop.f32.mrf.mxu0
        %v2873 = vadd.f32 0.0, %v2872
        %2874 = vmatprep.mubr.bf16.mxu0 0
        %2875 = vmatmul.mubr.bf16.gmra.mxu0 %v2771
        %v2876 = vpop.f32.mrf.mxu0
        %v2877 = vadd.f32 0.0, %v2876
        %v2878 = vpop.f32.mrf.mxu0
        %v2879 = vadd.f32 0.0, %v2878
        %v2880 = vpop.f32.mrf.mxu0
        %v2881 = vadd.f32 0.0, %v2880
        %v2882 = vpop.f32.mrf.mxu0
        %v2883 = vadd.f32 0.0, %v2882
        %2884 = vmatprep.mubr.bf16.mxu0 0
        %2885 = vmatmul.mubr.bf16.gmra.mxu0 %v2774
        %v2886 = vpop.f32.mrf.mxu0
        %v2887 = vadd.f32 0.0, %v2886
        %v2888 = vpop.f32.mrf.mxu0
        %v2889 = vadd.f32 0.0, %v2888
        %v2890 = vpop.f32.mrf.mxu0
        %v2891 = vadd.f32 0.0, %v2890
        %v2892 = vpop.f32.mrf.mxu0
        %v2893 = vadd.f32 0.0, %v2892
        %2894 = vdwg.mxu0
        %v2895 = vadd.f32 %v2680, %v2817
        %v2896 = vadd.f32 %v2681, %v2819
        %v2897 = vadd.f32 %v2682, %v2821
        %v2898 = vadd.f32 %v2683, %v2823
        %v2899 = vadd.f32 %v2684, %v2827
        %v2900 = vadd.f32 %v2685, %v2829
        %v2901 = vadd.f32 %v2686, %v2831
        %v2902 = vadd.f32 %v2687, %v2833
        %v2903 = vadd.f32 %v2688, %v2837
        %v2904 = vadd.f32 %v2689, %v2839
        %v2905 = vadd.f32 %v2690, %v2841
        %v2906 = vadd.f32 %v2691, %v2843
        %v2907 = vadd.f32 %v2692, %v2847
        %v2908 = vadd.f32 %v2693, %v2849
        %v2909 = vadd.f32 %v2694, %v2851
        %v2910 = vadd.f32 %v2695, %v2853
        %v2911 = vadd.f32 %v2696, %v2857
        %v2912 = vadd.f32 %v2697, %v2859
        %v2913 = vadd.f32 %v2698, %v2861
        %v2914 = vadd.f32 %v2699, %v2863
        %v2915 = vadd.f32 %v2700, %v2867
        %v2916 = vadd.f32 %v2701, %v2869
        %v2917 = vadd.f32 %v2702, %v2871
        %v2918 = vadd.f32 %v2703, %v2873
        %v2919 = vadd.f32 %v2704, %v2877
        %v2920 = vadd.f32 %v2705, %v2879
        %v2921 = vadd.f32 %v2706, %v2881
        %v2922 = vadd.f32 %v2707, %v2883
        %v2923 = vadd.f32 %v2708, %v2887
        %v2924 = vadd.f32 %v2709, %v2889
        %v2925 = vadd.f32 %v2710, %v2891
        %v2926 = vadd.f32 %v2711, %v2893
        %v2927 = vxor.u32 %v2895, 2147483648
        %v2928 = vxor.u32 %v2896, 2147483648
        %v2929 = vxor.u32 %v2897, 2147483648
        %v2930 = vxor.u32 %v2898, 2147483648
        %v2931 = vxor.u32 %v2899, 2147483648
        %v2932 = vxor.u32 %v2900, 2147483648
        %v2933 = vxor.u32 %v2901, 2147483648
        %v2934 = vxor.u32 %v2902, 2147483648
        %v2935 = vmul.f32 %v2927, 1.442695
        %v2936 = vpow.pop %v2935
        %v2937 = vmul.f32 %v2928, 1.442695
        %v2938 = vpow.pop %v2937
        %v2939 = vmul.f32 %v2929, 1.442695
        %v2940 = vpow.pop %v2939
        %v2941 = vmul.f32 %v2930, 1.442695
        %v2942 = vpow.pop %v2941
        %v2943 = vmul.f32 %v2931, 1.442695
        %v2944 = vpow.pop %v2943
        %v2945 = vmul.f32 %v2932, 1.442695
        %v2946 = vpow.pop %v2945
        %v2947 = vmul.f32 %v2933, 1.442695
        %v2948 = vpow.pop %v2947
        %v2949 = vmul.f32 %v2934, 1.442695
        %v2950 = vpow.pop %v2949
        %v2951 = vadd.f32 %v2936, 1.0
        %v2952 = vadd.f32 %v2938, 1.0
        %v2953 = vadd.f32 %v2940, 1.0
        %v2954 = vadd.f32 %v2942, 1.0
        %v2955 = vadd.f32 %v2944, 1.0
        %v2956 = vadd.f32 %v2946, 1.0
        %v2957 = vadd.f32 %v2948, 1.0
        %v2958 = vadd.f32 %v2950, 1.0
        %v2959 = vrcp.pop %v2951
        %v2960 = vmul.f32 1.0, %v2959
        %v2961 = vrcp.pop %v2952
        %v2962 = vmul.f32 1.0, %v2961
        %v2963 = vrcp.pop %v2953
        %v2964 = vmul.f32 1.0, %v2963
        %v2965 = vrcp.pop %v2954
        %v2966 = vmul.f32 1.0, %v2965
        %v2967 = vrcp.pop %v2955
        %v2968 = vmul.f32 1.0, %v2967
        %v2969 = vrcp.pop %v2956
        %v2970 = vmul.f32 1.0, %v2969
        %v2971 = vrcp.pop %v2957
        %v2972 = vmul.f32 1.0, %v2971
        %v2973 = vrcp.pop %v2958
        %v2974 = vmul.f32 1.0, %v2973
        %v2975 = vxor.u32 %v2903, 2147483648
        %v2976 = vxor.u32 %v2904, 2147483648
        %v2977 = vxor.u32 %v2905, 2147483648
        %v2978 = vxor.u32 %v2906, 2147483648
        %v2979 = vxor.u32 %v2907, 2147483648
        %v2980 = vxor.u32 %v2908, 2147483648
        %v2981 = vxor.u32 %v2909, 2147483648
        %v2982 = vxor.u32 %v2910, 2147483648
        %v2983 = vmul.f32 %v2975, 1.442695
        %v2984 = vpow.pop %v2983
        %v2985 = vmul.f32 %v2976, 1.442695
        %v2986 = vpow.pop %v2985
        %v2987 = vmul.f32 %v2977, 1.442695
        %v2988 = vpow.pop %v2987
        %v2989 = vmul.f32 %v2978, 1.442695
        %v2990 = vpow.pop %v2989
        %v2991 = vmul.f32 %v2979, 1.442695
        %v2992 = vpow.pop %v2991
        %v2993 = vmul.f32 %v2980, 1.442695
        %v2994 = vpow.pop %v2993
        %v2995 = vmul.f32 %v2981, 1.442695
        %v2996 = vpow.pop %v2995
        %v2997 = vmul.f32 %v2982, 1.442695
        %v2998 = vpow.pop %v2997
        %v2999 = vadd.f32 %v2984, 1.0
        %v3000 = vadd.f32 %v2986, 1.0
        %v3001 = vadd.f32 %v2988, 1.0
        %v3002 = vadd.f32 %v2990, 1.0
        %v3003 = vadd.f32 %v2992, 1.0
        %v3004 = vadd.f32 %v2994, 1.0
        %v3005 = vadd.f32 %v2996, 1.0
        %v3006 = vadd.f32 %v2998, 1.0
        %v3007 = vrcp.pop %v2999
        %v3008 = vmul.f32 1.0, %v3007
        %v3009 = vrcp.pop %v3000
        %v3010 = vmul.f32 1.0, %v3009
        %v3011 = vrcp.pop %v3001
        %v3012 = vmul.f32 1.0, %v3011
        %v3013 = vrcp.pop %v3002
        %v3014 = vmul.f32 1.0, %v3013
        %v3015 = vrcp.pop %v3003
        %v3016 = vmul.f32 1.0, %v3015
        %v3017 = vrcp.pop %v3004
        %v3018 = vmul.f32 1.0, %v3017
        %v3019 = vrcp.pop %v3005
        %v3020 = vmul.f32 1.0, %v3019
        %v3021 = vrcp.pop %v3006
        %v3022 = vmul.f32 1.0, %v3021
        %v3023 = vxor.u32 %v2911, 2147483648
        %v3024 = vxor.u32 %v2912, 2147483648
        %v3025 = vxor.u32 %v2913, 2147483648
        %v3026 = vxor.u32 %v2914, 2147483648
        %v3027 = vxor.u32 %v2915, 2147483648
        %v3028 = vxor.u32 %v2916, 2147483648
        %v3029 = vxor.u32 %v2917, 2147483648
        %v3030 = vxor.u32 %v2918, 2147483648
        %v3031 = vmul.f32 %v3023, 1.442695
        %v3032 = vpow.pop %v3031
        %v3033 = vmul.f32 %v3024, 1.442695
        %v3034 = vpow.pop %v3033
        %v3035 = vmul.f32 %v3025, 1.442695
        %v3036 = vpow.pop %v3035
        %v3037 = vmul.f32 %v3026, 1.442695
        %v3038 = vpow.pop %v3037
        %v3039 = vmul.f32 %v3027, 1.442695
        %v3040 = vpow.pop %v3039
        %v3041 = vmul.f32 %v3028, 1.442695
        %v3042 = vpow.pop %v3041
        %v3043 = vmul.f32 %v3029, 1.442695
        %v3044 = vpow.pop %v3043
        %v3045 = vmul.f32 %v3030, 1.442695
        %v3046 = vpow.pop %v3045
        %v3047 = vadd.f32 %v3032, 1.0
        %v3048 = vadd.f32 %v3034, 1.0
        %v3049 = vadd.f32 %v3036, 1.0
        %v3050 = vadd.f32 %v3038, 1.0
        %v3051 = vadd.f32 %v3040, 1.0
        %v3052 = vadd.f32 %v3042, 1.0
        %v3053 = vadd.f32 %v3044, 1.0
        %v3054 = vadd.f32 %v3046, 1.0
        %v3055 = vrcp.pop %v3047
        %v3056 = vmul.f32 1.0, %v3055
        %v3057 = vrcp.pop %v3048
        %v3058 = vmul.f32 1.0, %v3057
        %v3059 = vrcp.pop %v3049
        %v3060 = vmul.f32 1.0, %v3059
        %v3061 = vrcp.pop %v3050
        %v3062 = vmul.f32 1.0, %v3061
        %v3063 = vrcp.pop %v3051
        %v3064 = vmul.f32 1.0, %v3063
        %v3065 = vrcp.pop %v3052
        %v3066 = vmul.f32 1.0, %v3065
        %v3067 = vrcp.pop %v3053
        %v3068 = vmul.f32 1.0, %v3067
        %v3069 = vrcp.pop %v3054
        %v3070 = vmul.f32 1.0, %v3069
        %v3071 = vtanh.pop %v2919
        %v3072 = vtanh.pop %v2920
        %v3073 = vtanh.pop %v2921
        %v3074 = vtanh.pop %v2922
        %v3075 = vtanh.pop %v2923
        %v3076 = vtanh.pop %v2924
        %v3077 = vtanh.pop %v2925
        %v3078 = vtanh.pop %v2926
        %v3079 = vld [vmem:[%s280] sm:$0xff]
        %v3080 = vld [vmem:[%s280 + $0x8] sm:$0xff]
        %v3081 = vld [vmem:[%s280 + $0x10] sm:$0xff]
        %v3082 = vld [vmem:[%s280 + $0x18] sm:$0xff]
        %v3083 = vld [vmem:[%s280 + $0x20] sm:$0xff]
        %v3084 = vld [vmem:[%s280 + $0x28] sm:$0xff]
        %v3085 = vld [vmem:[%s280 + $0x30] sm:$0xff]
        %v3086 = vld [vmem:[%s280 + $0x38] sm:$0xff]
        %v3087 = vmul.f32 %v3008, %v3079
        %v3088 = vmul.f32 %v3010, %v3080
        %v3089 = vmul.f32 %v3012, %v3081
        %v3090 = vmul.f32 %v3014, %v3082
        %v3091 = vmul.f32 %v3016, %v3083
        %v3092 = vmul.f32 %v3018, %v3084
        %v3093 = vmul.f32 %v3020, %v3085
        %v3094 = vmul.f32 %v3022, %v3086
        %v3095 = vmul.f32 %v2960, %v3071
        %v3096 = vmul.f32 %v2962, %v3072
        %v3097 = vmul.f32 %v2964, %v3073
        %v3098 = vmul.f32 %v2966, %v3074
        %v3099 = vmul.f32 %v2968, %v3075
        %v3100 = vmul.f32 %v2970, %v3076
        %v3101 = vmul.f32 %v2972, %v3077
        %v3102 = vmul.f32 %v2974, %v3078
        %v3103 = vadd.f32 %v3087, %v3095
        %v3104 = vadd.f32 %v3088, %v3096
        %v3105 = vadd.f32 %v3089, %v3097
        %v3106 = vadd.f32 %v3090, %v3098
        %v3107 = vadd.f32 %v3091, %v3099
        %v3108 = vadd.f32 %v3092, %v3100
        %v3109 = vadd.f32 %v3093, %v3101
        %v3110 = vadd.f32 %v3094, %v3102
        %v3111 = vtanh.pop %v3103
        %v3112 = vtanh.pop %v3104
        %v3113 = vtanh.pop %v3105
        %v3114 = vtanh.pop %v3106
        %v3115 = vtanh.pop %v3107
        %v3116 = vtanh.pop %v3108
        %v3117 = vtanh.pop %v3109
        %v3118 = vtanh.pop %v3110
        %v3119 = vmul.f32 %v3056, %v3111
        %v3120 = vmul.f32 %v3058, %v3112
        %v3121 = vmul.f32 %v3060, %v3113
        %v3122 = vmul.f32 %v3062, %v3114
        %v3123 = vmul.f32 %v3064, %v3115
        %v3124 = vmul.f32 %v3066, %v3116
        %v3125 = vmul.f32 %v3068, %v3117
        %v3126 = vmul.f32 %v3070, %v3118
        %3127 = vst [vmem:[%s270] sm:$0xff] %v3103
        %3128 = vst [vmem:[%s270 + $0x8] sm:$0xff] %v3104
        %3129 = vst [vmem:[%s270 + $0x10] sm:$0xff] %v3105
        %3130 = vst [vmem:[%s270 + $0x18] sm:$0xff] %v3106
        %3131 = vst [vmem:[%s270 + $0x20] sm:$0xff] %v3107
        %3132 = vst [vmem:[%s270 + $0x28] sm:$0xff] %v3108
        %3133 = vst [vmem:[%s270 + $0x30] sm:$0xff] %v3109
        %3134 = vst [vmem:[%s270 + $0x38] sm:$0xff] %v3110
        %3135 = vst [vmem:[%s263] sm:$0xff] %v3119
        %3136 = vst [vmem:[%s263 + $0x8] sm:$0xff] %v3120
        %3137 = vst [vmem:[%s263 + $0x10] sm:$0xff] %v3121
        %3138 = vst [vmem:[%s263 + $0x18] sm:$0xff] %v3122
        %3139 = vst [vmem:[%s263 + $0x20] sm:$0xff] %v3123
        %3140 = vst [vmem:[%s263 + $0x28] sm:$0xff] %v3124
        %3141 = vst [vmem:[%s263 + $0x30] sm:$0xff] %v3125
        %3142 = vst [vmem:[%s263 + $0x38] sm:$0xff] %v3126
        %s3143 = sand.u32 %s147, 1
        %s3144 = scalar_lea.sflag [#allocation3], %s3143
        %s3145 = sand.u32 %s147, 1
        %s3146 = smul.addr %s3145, 64
        %s3147 = scalar_lea.vmem [#allocation2], %s3146
        %s3148 = sand.u32 %s173, 1
        %s3149 = scalar_lea.sflag [#allocation5], %s3148
        %s3150 = sand.u32 %s173, 1
        %s3151 = smul.addr %s3150, 64
        %s3152 = scalar_lea.vmem [#allocation4], %s3151
        // Predicated region
        $region41: #{tpu_custom_call.1} parent=39 // pred_check
          %p3153 = pneg %p157
        $region42: #{tpu_custom_call.1} parent=39 // pred_check_branch
          %3155 = sbr.rel (%p3153) target = $region44
        $region43: #{tpu_custom_call.1} parent=39 // pred_region
          %s3157 = ssub.s32 1024, 1024
          %3158 = vsyncadd %s3144, %s3157
          %s3159 = smul.addr %s24, 8
          %s3160 = smul.addr %s3159, 128
          %s3161 = scalar_lea.hbm %s5, %s3160
          %s3162 = sshll.u32 %s3147, 4
          %s3163 = int_to_ptr.vmem [resolvable:$true] %s3162
          %3168 = dma.vmem_to_hbm [thread:$0]  %s3163, 1024, %s3161, %s3144, 256, 256, 16
        $region44: #{tpu_custom_call.1} parent=39 // pred_fallthru
          _
        // Predicated region
        $region45: #{tpu_custom_call.1} parent=39 // pred_check
          %p3169 = pneg %p183
        $region46: #{tpu_custom_call.1} parent=39 // pred_check_branch
          %3171 = sbr.rel (%p3169) target = $region48
        $region47: #{tpu_custom_call.1} parent=39 // pred_region
          %s3173 = ssub.s32 1024, 1024
          %3174 = vsyncadd %s3149, %s3173
          %s3175 = smul.addr %s24, 8
          %s3176 = smul.addr %s3175, 128
          %s3177 = scalar_lea.hbm %s6, %s3176
          %s3178 = sshll.u32 %s3152, 4
          %s3179 = int_to_ptr.vmem [resolvable:$true] %s3178
          %3184 = dma.vmem_to_hbm [thread:$0]  %s3179, 1024, %s3177, %s3149, 256, 256, 16
        $region48: #{tpu_custom_call.1} parent=39 // pred_fallthru
          _
      $region40: #{tpu_custom_call.1} parent=5 // pred_fallthru
        _
      %p3185 = scmp.le.s32.totalorder 2, %s19
      // Predicated region
      $region49: #{tpu_custom_call.1} parent=5 // pred_check
        %p3186 = pneg %p3185
      $region50: #{tpu_custom_call.1} parent=5 // pred_check_branch
        %3188 = sbr.rel (%p3186) target = $region52
      $region51: #{tpu_custom_call.1} parent=5 // pred_region
        %s3189 = ssub.s32 %s19, 2
        // Predicated region
        $region53: #{tpu_custom_call.1} parent=51 // pred_check
          %p3190 = pneg %p163
        $region54: #{tpu_custom_call.1} parent=51 // pred_check_branch
          %3192 = sbr.rel (%p3190) target = $region56
        $region55: #{tpu_custom_call.1} parent=51 // pred_region
          %s3193 = sand.u32 %s148, 1
          %s3194 = scalar_lea.sflag [#allocation3], %s3193
          %s3195 = sand.u32 %s148, 1
          %s3196 = smul.addr %s3195, 64
          %s3197 = scalar_lea.vmem [#allocation2], %s3196
          %3198 = dma.done %s3194, 1024
        $region56: #{tpu_custom_call.1} parent=51 // pred_fallthru
          _
        // Predicated region
        $region57: #{tpu_custom_call.1} parent=51 // pred_check
          %p3199 = pneg %p189
        $region58: #{tpu_custom_call.1} parent=51 // pred_check_branch
          %3201 = sbr.rel (%p3199) target = $region60
        $region59: #{tpu_custom_call.1} parent=51 // pred_region
          %s3202 = sand.u32 %s174, 1
          %s3203 = scalar_lea.sflag [#allocation5], %s3202
          %s3204 = sand.u32 %s174, 1
          %s3205 = smul.addr %s3204, 64
          %s3206 = scalar_lea.vmem [#allocation4], %s3205
          %3207 = dma.done %s3203, 1024
        $region60: #{tpu_custom_call.1} parent=51 // pred_fallthru
          _
      $region52: #{tpu_custom_call.1} parent=5 // pred_fallthru
        _
    $region6: #{tpu_custom_call.1} parent=1 // loop_footer
      %s23 = sadd.s32 1, %s19
    $region7: #{tpu_custom_call.1} parent=1 // loop_footer_branch
      %18 = sbr.rel target = $region3
    $region8: #{tpu_custom_call.1} parent=1 // loop_exit
      _
    %3208 = vsyncpa [#allocation3], 1
    %s3209 = scalar_lea.sflag [#allocation3], 1
    %3210 = vsyncpa %s3209, 1
    %3211 = vsyncpa [#allocation5], 1
    %s3212 = scalar_lea.sflag [#allocation5], 1
    %3213 = vsyncpa %s3212, 1

</llo_original>
